<compile_context>
chip_gen: v6e
topology: v6e:2x2x1
jax: 0.10.0
libtpu: 0.0.40
codegen_flags: <defaults>
</compile_context>

<pallas_src>
import functools
import math

import jax
import jax.numpy as jnp
import numpy as np
from jax import lax
from jax.experimental import pallas as pl
from jax.experimental.pallas import tpu as pltpu

B_J0 = 0.01
R_M = 1.0
BETA = 1.8
DT = 1.0


# ----------------------------------------------------------------------------
# ALIF neuron update.  Decay factors are (1, dim); implicit broadcasting against
# the (bb, dim) state is a free sublane-broadcast read (no materialized bcast).
# ----------------------------------------------------------------------------
def _mem_update_adp(inp, mem, spk, adp, alpha, om_alpha, ro, om_ro):
    adp = ro * adp + om_ro * spk
    theta = B_J0 + BETA * adp
    mem = mem * alpha + om_alpha * (R_M * inp) - theta * spk * DT
    spk = (mem - theta > 0.0).astype(jnp.float32)
    return mem, spk, adp


# ----------------------------------------------------------------------------
# Pallas kernel: CHUNK timesteps of the 4-layer ALIF recurrence per grid step.
# Grid = (batch_blocks, time_chunks); all neuron state persists in VMEM scratch.
# ----------------------------------------------------------------------------
def _asrnn_kernel(
    xp_ref,                                             # (1, CHUNK*BB, r1)  precomputed i2h
    w_rec, w_h2d, w_dense1, w_d2o,                      # weights (in, out); w_rec is blockdiag
    a_r1, p_r1, a_r2, p_r2, a_d1, p_d1, a_o, p_o,       # alpha / ro, (1, dim)
    r1_init, r2_init, d1_init, o_init,                  # initial states, (BB, dim)
    out_ref,                                            # (BB, out_pad) accumulator
    # scratch (persist across grid steps)
    r1_mem, r1_spk, b_r1,
    r2_mem, r2_spk, b_r2,
    d1_mem, d1_spk, b_d1,
    o_mem, o_spk, b_o,
    *, chunk, bb, r1_dim, t_total, masked, unroll,
):
    c = pl.program_id(1)

    @pl.when(c == 0)
    def _init():
        # mem = spike = rand(...) (same tensor in torch), b starts at b_j0
        r1_mem[...] = r1_init[...]
        r1_spk[...] = r1_init[...]
        b_r1[...] = jnp.full(b_r1.shape, B_J0, dtype=jnp.float32)
        r2_mem[...] = r2_init[...]
        r2_spk[...] = r2_init[...]
        b_r2[...] = jnp.full(b_r2.shape, B_J0, dtype=jnp.float32)
        d1_mem[...] = d1_init[...]
        d1_spk[...] = d1_init[...]
        b_d1[...] = jnp.full(b_d1.shape, B_J0, dtype=jnp.float32)
        o_mem[...] = o_init[...]
        o_spk[...] = o_init[...]
        b_o[...] = jnp.full(b_o.shape, B_J0, dtype=jnp.float32)
        out_ref[...] = o_init[...]      # output_sumspike starts from the same rand

    # Time-invariant decay factors, kept (1, dim) (no broadcast_to -> low vreg
    # pressure).  Complements are one cheap vsub each per chunk.
    al1 = a_r1[...]; oal1 = 1.0 - al1
    ro1 = p_r1[...]; oro1 = 1.0 - ro1
    al2 = a_r2[...]; oal2 = 1.0 - al2
    ro2 = p_r2[...]; oro2 = 1.0 - ro2
    al3 = a_d1[...]; oal3 = 1.0 - al3
    ro3 = p_d1[...]; oro3 = 1.0 - ro3
    al4 = a_o[...];  oal4 = 1.0 - al4
    ro4 = p_o[...];  oro4 = 1.0 - ro4

    def step(i, carry):
        (m1, s1, ad1, m2, s2, ad2, m3, s3, ad3, m4, s4, ad4, acc) = carry

        start = i * bb
        if not isinstance(i, int):                       # fori_loop path
            start = pl.multiple_of(start, bb)
        xp = xp_ref[0, pl.ds(start, bb), :]              # (bb, r1)

        # Fused previous-spike recurrence: [s1|s2] @ blockdiag(w_h2h, w_d2d).
        # Exact zeros in the off-diagonal blocks keep this bit-identical to the
        # two separate dots while halving the number of serialized MXU pushes.
        s12 = jnp.concatenate([s1, s2], axis=1)
        rec = jnp.dot(s12, w_rec[...], preferred_element_type=jnp.float32)

        # --- layer r1 ---
        h_in = xp + rec[:, :r1_dim]
        m1, s1, ad1 = _mem_update_adp(h_in, m1, s1, ad1, al1, oal1, ro1, oro1)
        # --- layer r2 ---
        d_in = (jnp.dot(s1, w_h2d[...], preferred_element_type=jnp.float32)
                + rec[:, r1_dim:])
        m2, s2, ad2 = _mem_update_adp(d_in, m2, s2, ad2, al2, oal2, ro2, oro2)
        # --- dense1 ---
        e_in = jnp.dot(s2, w_dense1[...], preferred_element_type=jnp.float32)
        m3, s3, ad3 = _mem_update_adp(e_in, m3, s3, ad3, al3, oal3, ro3, oro3)
        # --- output layer (DC_f == 'adp-spike') ---
        o_in = jnp.dot(s3, w_d2o[...], preferred_element_type=jnp.float32)
        m4, s4, ad4 = _mem_update_adp(o_in, m4, s4, ad4, al4, oal4, ro4, oro4)

        if masked:
            # Rare fallback (only when no good divisor chunk exists).
            gate = (c * chunk + i < t_total).astype(jnp.float32)
            acc = acc + s4 * gate
        else:
            acc = acc + s4
        return (m1, s1, ad1, m2, s2, ad2, m3, s3, ad3, m4, s4, ad4, acc)

    carry = (r1_mem[...], r1_spk[...], b_r1[...],
             r2_mem[...], r2_spk[...], b_r2[...],
             d1_mem[...], d1_spk[...], b_d1[...],
             o_mem[...], o_spk[...], b_o[...],
             out_ref[...])

    if chunk <= unroll:
        # Fully unrolled static loop (small chunks).
        for i in range(chunk):
            carry = step(i, carry)
    else:
        # Partial unroll keeps code size and vreg live ranges bounded while
        # giving the LLO scheduler visibility across `unroll` steps.
        carry = lax.fori_loop(0, chunk, step, carry, unroll=unroll)

    (m1, s1, ad1, m2, s2, ad2, m3, s3, ad3, m4, s4, ad4, acc) = carry
    # Write state back once per chunk.
    r1_mem[...] = m1; r1_spk[...] = s1; b_r1[...] = ad1
    r2_mem[...] = m2; r2_spk[...] = s2; b_r2[...] = ad2
    d1_mem[...] = m3; d1_spk[...] = s3; b_d1[...] = ad3
    o_mem[...] = m4;  o_spk[...] = s4;  b_o[...] = ad4
    out_ref[...] = acc


# ----------------------------------------------------------------------------
# Wrapper helpers
# ----------------------------------------------------------------------------
def _pick_chunk(t_total, requested):
    """Prefer a chunk that divides T exactly so the hot loop is unmasked."""
    requested = max(1, min(int(requested), int(t_total)))
    best = 1
    for cand in range(requested, 0, -1):
        if t_total % cand == 0:
            best = cand
            break
    if 2 * best >= requested:
        return best, False
    return requested, True           # pad time + mask the tail (rare)


def _default_batch_blocks(b_pad):
    """One batch block per TensorCore; single-TC chips (v5e/v6e) get nb=1."""
    n = 1
    try:
        info = pltpu.get_tpu_info()
        for attr in ("num_tensorcores", "tensorcore_count", "num_cores",
                     "core_count"):
            v = getattr(info, attr, None)
            if isinstance(v, (int, np.integer)) and int(v) > 0:
                n = int(v)
                break
    except Exception:
        n = 1
    while n > 1 and b_pad % (8 * n) != 0:
        n -= 1
    return max(1, n)


def _vmem_limit_bytes(needed_bytes):
    """Size the scoped-VMEM limit from the real footprint, capped per chip."""
    budget = int(needed_bytes * 1.5) + (8 << 20)
    budget = max(budget, 32 << 20)               # fixes v5e's 16 MiB default
    cap = 128 << 20
    try:
        cap = int(pltpu.get_tpu_info().vmem_capacity_bytes)
    except Exception:
        pass
    return int(min(budget, max(32 << 20, (cap * 3) // 4)))


# ----------------------------------------------------------------------------
# Wrapper
# ----------------------------------------------------------------------------
def asrnn_forward(x, params, *, input_size, stride, chunk=16, unroll=8,
                  batch_block=None):
    """x: (B, S, 1) float32, mirrors PyTorch forward of RNN_custom_keras."""
    (w_i2h, w_h2h, w_h2d, w_d2d, w_dense1, w_d2o,
     ta_r1, ta_r2, ta_d1, ta_o,
     tm_r1, tm_r2, tm_d1, tm_o,
     r1_init, r2_init, d1_init, o_init) = params

    B, S, D = x.shape
    assert D == 1, "seq-MNIST style input (input_dim == 1)"
    T = S // stride
    r1 = w_i2h.shape[1]
    r2 = w_h2d.shape[1]
    d1 = w_dense1.shape[1]
    out = w_d2o.shape[1]

    x = x.astype(jnp.float32) / 255.0

    # Vectorized strided-window gather (no T-long Python slice loop), then the
    # i2h projection is done once here with XLA; the kernel streams xp (T,B,r1).
    starts = np.minimum(np.arange(T) * stride, S - input_size)
    idx = starts[:, None] + np.arange(input_size)[None, :]       # (T, IN)
    x_flat = x[:, :, 0]                                          # (B, S)
    x_steps = jnp.transpose(x_flat[:, idx], (1, 0, 2))           # (T, B, IN)
    xp = jnp.einsum("tbi,ir->tbr", x_steps, w_i2h.astype(jnp.float32))

    # --- chunking (prefer chunk | T so the hot loop is unmasked) ---
    chunk, masked = _pick_chunk(T, chunk)
    t_pad = -(-T // chunk) * chunk
    nc = t_pad // chunk

    # --- TPU-friendly padding (stripped after the call) ---
    b_pad = max(8, -(-B // 8) * 8)                                # sublane multiple
    out_pad = max(128, -(-out // 128) * 128)                      # lane multiple

    if batch_block is None:
        nb = _default_batch_blocks(b_pad)
    else:
        assert b_pad % batch_block == 0 and batch_block % 8 == 0
        nb = b_pad // batch_block
    bb = b_pad // nb

    xp_p = jnp.zeros((t_pad, b_pad, r1), jnp.float32).at[:T, :B, :].set(xp)
    # (nb, t_pad*bb, r1): time-major rows inside each batch block.
    xp_p = (xp_p.reshape(t_pad, nb, bb, r1)
                .transpose(1, 0, 2, 3)
                .reshape(nb, t_pad * bb, r1))

    def pad_state(s, dpad):
        return jnp.zeros((b_pad, dpad), jnp.float32).at[:B, :s.shape[1]].set(s)

    def pad_cols(a, dpad):
        return jnp.zeros((a.shape[0], dpad), a.dtype).at[:, :a.shape[1]].set(a)

    # Block-diagonal fused recurrent weight: [[w_h2h, 0], [0, w_d2d]].
    w_rec = jnp.zeros((r1 + r2, r1 + r2), jnp.float32)
    w_rec = w_rec.at[:r1, :r1].set(w_h2h).at[r1:, r1:].set(w_d2d)

    w_do_p = pad_cols(w_d2o, out_pad)

    r1_i = pad_state(r1_init, r1)
    r2_i = pad_state(r2_init, r2)
    d1_i = pad_state(d1_init, d1)
    o_i = pad_state(o_init, out_pad)

    # Precompute decay factors (no per-step exps inside the kernel).
    a_r1 = jnp.exp(-DT / tm_r1); p_r1 = jnp.exp(-DT / ta_r1)
    a_r2 = jnp.exp(-DT / tm_r2); p_r2 = jnp.exp(-DT / ta_r2)
    a_d1 = jnp.exp(-DT / tm_d1); p_d1 = jnp.exp(-DT / ta_d1)
    a_o = pad_cols(jnp.exp(-DT / tm_o), out_pad)
    p_o = pad_cols(jnp.exp(-DT / ta_o), out_pad)

    def const_spec(shape):
        zeros = (0,) * len(shape)
        return pl.BlockSpec(shape, lambda b, c, _z=zeros: _z)

    def state_spec(dim):
        return pl.BlockSpec((bb, dim), lambda b, c: (b, 0))

    # NOTE: pipeline_mode=pl.Buffered(1) on the constant blocks would halve
    # their VMEM residency on v7x at large hidden dims; left at the default
    # since these weights are tiny here.
    in_specs = [
        pl.BlockSpec((1, chunk * bb, r1), lambda b, c: (b, c, 0)),  # xp stream
        const_spec(w_rec.shape), const_spec(w_h2d.shape),
        const_spec(w_dense1.shape), const_spec(w_do_p.shape),
        const_spec(a_r1.shape), const_spec(p_r1.shape),
        const_spec(a_r2.shape), const_spec(p_r2.shape),
        const_spec(a_d1.shape), const_spec(p_d1.shape),
        const_spec(a_o.shape), const_spec(p_o.shape),
        state_spec(r1), state_spec(r2), state_spec(d1), state_spec(out_pad),
    ]
    out_spec = pl.BlockSpec((bb, out_pad), lambda b, c: (b, 0))

    scratch = [
        pltpu.VMEM((bb, r1), jnp.float32), pltpu.VMEM((bb, r1), jnp.float32),
        pltpu.VMEM((bb, r1), jnp.float32),
        pltpu.VMEM((bb, r2), jnp.float32), pltpu.VMEM((bb, r2), jnp.float32),
        pltpu.VMEM((bb, r2), jnp.float32),
        pltpu.VMEM((bb, d1), jnp.float32), pltpu.VMEM((bb, d1), jnp.float32),
        pltpu.VMEM((bb, d1), jnp.float32),
        pltpu.VMEM((bb, out_pad), jnp.float32), pltpu.VMEM((bb, out_pad), jnp.float32),
        pltpu.VMEM((bb, out_pad), jnp.float32),
    ]

    # VMEM budget from the actual footprint (double-buffered input blocks).
    per_block_in = (chunk * bb * r1
                    + (r1 + r2) ** 2 + r1 * r2 + r2 * d1 + d1 * out_pad
                    + 2 * (r1 + r2 + d1 + out_pad)
                    + bb * (r1 + r2 + d1 + out_pad)) * 4
    out_block = bb * out_pad * 4
    scratch_b = 3 * bb * (r1 + r2 + d1 + out_pad) * 4
    vmem_limit = _vmem_limit_bytes(2 * (per_block_in + out_block) + scratch_b)

    grid_spec = pltpu.PrefetchScalarGridSpec(
        num_scalar_prefetch=0,
        grid=(nb, nc),
        in_specs=in_specs,
        out_specs=out_spec,
        scratch_shapes=scratch,
    )

    kernel = functools.partial(_asrnn_kernel, chunk=chunk, bb=bb, r1_dim=r1,
                               t_total=T, masked=masked, unroll=unroll)

    out_full = pl.pallas_call(
        kernel,
        out_shape=jax.ShapeDtypeStruct((b_pad, out_pad), jnp.float32),
        grid_spec=grid_spec,
        compiler_params=pltpu.CompilerParams(
            dimension_semantics=("parallel", "arbitrary"),
            vmem_limit_bytes=vmem_limit,
        ),
    )(xp_p, w_rec, w_h2d, w_dense1, w_do_p,
      a_r1, p_r1, a_r2, p_r2, a_d1, p_d1, a_o, p_o,
      r1_i, r2_i, d1_i, o_i)

    return out_full[:B, :out]


# ----------------------------------------------------------------------------
# Deterministic parameter init (synthetic, shapes per module __init__)
# ----------------------------------------------------------------------------
def init_params(key, *, batch, input_size, r1, r2, d1, out):
    ks = jax.random.split(key, 20)

    def xavier(k, fan_in, fan_out):
        lim = math.sqrt(6.0 / (fan_in + fan_out))
        return jax.random.uniform(k, (fan_in, fan_out), jnp.float32, -lim, lim)

    def orthogonal(k, n):
        a = jax.random.normal(k, (n, n), jnp.float32)
        q, r = jnp.linalg.qr(a)
        q = q * jnp.sign(jnp.diag(r))
        return q

    w_i2h = xavier(ks[0], input_size, r1)
    w_h2h = orthogonal(ks[1], r1)
    w_h2d = xavier(ks[2], r1, r2)
    w_d2d = xavier(ks[3], r2, r2)
    w_dense1 = xavier(ks[4], r2, d1)
    w_d2o = xavier(ks[5], d1, out)

    def normal(k, dim, mu, sigma):
        return mu + sigma * jax.random.normal(k, (1, dim), jnp.float32)

    ta_r1 = normal(ks[6], r1, 700.0, 25.0)
    ta_r2 = normal(ks[7], r2, 700.0, 25.0)
    ta_d1 = normal(ks[8], d1, 700.0, 25.0)
    ta_o = normal(ks[9], out, 700.0, 25.0)
    tm_r1 = normal(ks[10], r1, 20.0, 5.0)
    tm_r2 = normal(ks[11], r2, 20.0, 5.0)
    tm_d1 = normal(ks[12], d1, 20.0, 5.0)
    tm_o = normal(ks[13], out, 20.0, 5.0)

    r1_init = jax.random.uniform(ks[14], (batch, r1), jnp.float32)
    r2_init = jax.random.uniform(ks[15], (batch, r2), jnp.float32)
    d1_init = jax.random.uniform(ks[16], (batch, d1), jnp.float32)
    o_init = jax.random.uniform(ks[17], (batch, out), jnp.float32)

    return (w_i2h, w_h2h, w_h2d, w_d2d, w_dense1, w_d2o,
            ta_r1, ta_r2, ta_d1, ta_o,
            tm_r1, tm_r2, tm_d1, tm_o,
            r1_init, r2_init, d1_init, o_init)


# ----------------------------------------------------------------------------
# Pure-JAX reference (mirror of the PyTorch forward) for validation
# ----------------------------------------------------------------------------
def reference_forward(x, params, *, input_size, stride):
    (w_i2h, w_h2h, w_h2d, w_d2d, w_dense1, w_d2o,
     ta_r1, ta_r2, ta_d1, ta_o,
     tm_r1, tm_r2, tm_d1, tm_o,
     r1_init, r2_init, d1_init, o_init) = params
    B, S, D = x.shape
    x = x.astype(jnp.float32) / 255.0
    T = S // stride

    def mem_update(inp, mem, spk, b, tau_adp, tau_m):
        alpha = jnp.exp(-DT / tau_m)
        ro = jnp.exp(-DT / tau_adp)
        b = ro * b + (1 - ro) * spk
        Bth = B_J0 + BETA * b
        mem = mem * alpha + (1 - alpha) * R_M * inp - Bth * spk * DT
        spk = (mem - Bth > 0).astype(jnp.float32)
        return mem, spk, b

    r1_mem = r1_spk = r1_init
    r2_mem = r2_spk = r2_init
    d1_mem = d1_spk = d1_init
    o_mem = o_spk = out_sum = o_init
    b_r1 = b_r2 = b_d1 = b_o = B_J0

    for i in range(T):
        start = i * stride
        if start < S - input_size:
            xw = x[:, start:start + input_size, :].reshape(B, input_size)
        else:
            xw = x[:, -input_size:, :].reshape(B, input_size)
        h_in = xw @ w_i2h + r1_spk @ w_h2h
        r1_mem, r1_spk, b_r1 = mem_update(h_in, r1_mem, r1_spk, b_r1, ta_r1, tm_r1)
        d_in = r1_spk @ w_h2d + r2_spk @ w_d2d
        r2_mem, r2_spk, b_r2 = mem_update(d_in, r2_mem, r2_spk, b_r2, ta_r2, tm_r2)
        d1_mem, d1_spk, b_d1 = mem_update(r2_spk @ w_dense1, d1_mem, d1_spk,
                                          b_d1, ta_d1, tm_d1)
        o_mem, o_spk, b_o = mem_update(d1_spk @ w_d2o, o_mem, o_spk,
                                       b_o, ta_o, tm_o)
        out_sum = out_sum + o_spk
    return out_sum


# ----------------------------------------------------------------------------
if __name__ == "__main__":
    batch = 2
    seq_num = 16
    input_size = 4       # window length fed per step
    stride = 2
    hidden_dims = (32, 32, 32)   # r1, r2, d1
    output_size = 10

    key = jax.random.PRNGKey(0)
    kx, kp = jax.random.split(key)
    # raw input like pixel values in [0, 255)
    x = jax.random.uniform(kx, (batch, seq_num, 1), jnp.float32, 0.0, 255.0)

    params = init_params(kp, batch=batch, input_size=input_size,
                         r1=hidden_dims[0], r2=hidden_dims[1],
                         d1=hidden_dims[2], out=output_size)

    out = asrnn_forward(x, params, input_size=input_size, stride=stride,
                        chunk=16, unroll=8)
    out = jax.block_until_ready(out)

    ref = reference_forward(x, params, input_size=input_size, stride=stride)
    np.testing.assert_allclose(np.asarray(out), np.asarray(ref),
                               rtol=1e-5, atol=1e-5)
    print("KERNEL_OK")
</pallas_src>

<mosaic_0001>
module attributes {stable_mosaic.version = 11 : i64} {
  func.func @_asrnn_kernel(%arg0: i32, %arg1: i32, %arg2: memref<1x64x32xf32, #tpu.memory_space<vmem>>, %arg3: memref<64x64xf32, #tpu.memory_space<vmem>>, %arg4: memref<32x32xf32, #tpu.memory_space<vmem>>, %arg5: memref<32x32xf32, #tpu.memory_space<vmem>>, %arg6: memref<32x128xf32, #tpu.memory_space<vmem>>, %arg7: memref<1x32xf32, #tpu.memory_space<vmem>>, %arg8: memref<1x32xf32, #tpu.memory_space<vmem>>, %arg9: memref<1x32xf32, #tpu.memory_space<vmem>>, %arg10: memref<1x32xf32, #tpu.memory_space<vmem>>, %arg11: memref<1x32xf32, #tpu.memory_space<vmem>>, %arg12: memref<1x32xf32, #tpu.memory_space<vmem>>, %arg13: memref<1x128xf32, #tpu.memory_space<vmem>>, %arg14: memref<1x128xf32, #tpu.memory_space<vmem>>, %arg15: memref<8x32xf32, #tpu.memory_space<vmem>>, %arg16: memref<8x32xf32, #tpu.memory_space<vmem>>, %arg17: memref<8x32xf32, #tpu.memory_space<vmem>>, %arg18: memref<8x128xf32, #tpu.memory_space<vmem>>, %arg19: memref<8x128xf32, #tpu.memory_space<vmem>>, %arg20: memref<8x32xf32, #tpu.memory_space<vmem>>, %arg21: memref<8x32xf32, #tpu.memory_space<vmem>>, %arg22: memref<8x32xf32, #tpu.memory_space<vmem>>, %arg23: memref<8x32xf32, #tpu.memory_space<vmem>>, %arg24: memref<8x32xf32, #tpu.memory_space<vmem>>, %arg25: memref<8x32xf32, #tpu.memory_space<vmem>>, %arg26: memref<8x32xf32, #tpu.memory_space<vmem>>, %arg27: memref<8x32xf32, #tpu.memory_space<vmem>>, %arg28: memref<8x32xf32, #tpu.memory_space<vmem>>, %arg29: memref<8x128xf32, #tpu.memory_space<vmem>>, %arg30: memref<8x128xf32, #tpu.memory_space<vmem>>, %arg31: memref<8x128xf32, #tpu.memory_space<vmem>>) attributes {dimension_semantics = [#tpu.dimension_semantics<parallel>, #tpu.dimension_semantics<arbitrary>], iteration_bounds = array<i64: 1, 1>, scalar_prefetch = 0 : i64, scratch_operands = 12 : i64, tpu.core_type = #tpu.core_type<tc>, window_params = [{transform_indices = @transform_0, window_bounds = array<i64: 1, 64, 32>}, {pipeline_mode = #tpu.pipeline_mode<synchronous>, transform_indices = @transform_1, window_bounds = array<i64: 64, 64>}, {pipeline_mode = #tpu.pipeline_mode<synchronous>, transform_indices = @transform_2, window_bounds = array<i64: 32, 32>}, {pipeline_mode = #tpu.pipeline_mode<synchronous>, transform_indices = @transform_3, window_bounds = array<i64: 32, 32>}, {pipeline_mode = #tpu.pipeline_mode<synchronous>, transform_indices = @transform_4, window_bounds = array<i64: 32, 128>}, {pipeline_mode = #tpu.pipeline_mode<synchronous>, transform_indices = @transform_5, window_bounds = array<i64: 1, 32>}, {pipeline_mode = #tpu.pipeline_mode<synchronous>, transform_indices = @transform_6, window_bounds = array<i64: 1, 32>}, {pipeline_mode = #tpu.pipeline_mode<synchronous>, transform_indices = @transform_7, window_bounds = array<i64: 1, 32>}, {pipeline_mode = #tpu.pipeline_mode<synchronous>, transform_indices = @transform_8, window_bounds = array<i64: 1, 32>}, {pipeline_mode = #tpu.pipeline_mode<synchronous>, transform_indices = @transform_9, window_bounds = array<i64: 1, 32>}, {pipeline_mode = #tpu.pipeline_mode<synchronous>, transform_indices = @transform_10, window_bounds = array<i64: 1, 32>}, {pipeline_mode = #tpu.pipeline_mode<synchronous>, transform_indices = @transform_11, window_bounds = array<i64: 1, 128>}, {pipeline_mode = #tpu.pipeline_mode<synchronous>, transform_indices = @transform_12, window_bounds = array<i64: 1, 128>}, {transform_indices = @transform_13, window_bounds = array<i64: 8, 32>}, {transform_indices = @transform_14, window_bounds = array<i64: 8, 32>}, {transform_indices = @transform_15, window_bounds = array<i64: 8, 32>}, {transform_indices = @transform_16, window_bounds = array<i64: 8, 128>}, {transform_indices = @transform_17, window_bounds = array<i64: 8, 128>}]} {
    %c0_i32 = arith.constant 0 : i32
    %0 = arith.cmpi eq, %arg1, %c0_i32 : i32
    %1 = arith.extui %0 : i1 to i32
    %c0_i32_0 = arith.constant 0 : i32
    %2 = arith.cmpi ne, %1, %c0_i32_0 : i32
    scf.if %2 {
      %c0_348 = arith.constant 0 : index
      %c0_349 = arith.constant 0 : index
      %981 = vector.load %arg15[%c0_348, %c0_349] : memref<8x32xf32, #tpu.memory_space<vmem>>, vector<8x32xf32>
      %c0_350 = arith.constant 0 : index
      %c0_351 = arith.constant 0 : index
      %982 = vector.load %arg20[%c0_350, %c0_351] : memref<8x32xf32, #tpu.memory_space<vmem>>, vector<8x32xf32>
      tpu.vector_store %arg20[%c0_350, %c0_351], %981 {strides = array<i32>} : memref<8x32xf32, #tpu.memory_space<vmem>>, vector<8x32xf32>,
      %c0_352 = arith.constant 0 : index
      %c0_353 = arith.constant 0 : index
      %983 = vector.load %arg15[%c0_352, %c0_353] : memref<8x32xf32, #tpu.memory_space<vmem>>, vector<8x32xf32>
      %c0_354 = arith.constant 0 : index
      %c0_355 = arith.constant 0 : index
      %984 = vector.load %arg21[%c0_354, %c0_355] : memref<8x32xf32, #tpu.memory_space<vmem>>, vector<8x32xf32>
      tpu.vector_store %arg21[%c0_354, %c0_355], %983 {strides = array<i32>} : memref<8x32xf32, #tpu.memory_space<vmem>>, vector<8x32xf32>,
      %cst_356 = arith.constant 0.00999999977 : f32
      %985 = vector.broadcast %cst_356 : f32 to vector<8x32xf32>
      %c0_357 = arith.constant 0 : index
      %c0_358 = arith.constant 0 : index
      %986 = vector.load %arg22[%c0_357, %c0_358] : memref<8x32xf32, #tpu.memory_space<vmem>>, vector<8x32xf32>
      tpu.vector_store %arg22[%c0_357, %c0_358], %985 {strides = array<i32>} : memref<8x32xf32, #tpu.memory_space<vmem>>, vector<8x32xf32>,
      %c0_359 = arith.constant 0 : index
      %c0_360 = arith.constant 0 : index
      %987 = vector.load %arg16[%c0_359, %c0_360] : memref<8x32xf32, #tpu.memory_space<vmem>>, vector<8x32xf32>
      %c0_361 = arith.constant 0 : index
      %c0_362 = arith.constant 0 : index
      %988 = vector.load %arg23[%c0_361, %c0_362] : memref<8x32xf32, #tpu.memory_space<vmem>>, vector<8x32xf32>
      tpu.vector_store %arg23[%c0_361, %c0_362], %987 {strides = array<i32>} : memref<8x32xf32, #tpu.memory_space<vmem>>, vector<8x32xf32>,
      %c0_363 = arith.constant 0 : index
      %c0_364 = arith.constant 0 : index
      %989 = vector.load %arg16[%c0_363, %c0_364] : memref<8x32xf32, #tpu.memory_space<vmem>>, vector<8x32xf32>
      %c0_365 = arith.constant 0 : index
      %c0_366 = arith.constant 0 : index
      %990 = vector.load %arg24[%c0_365, %c0_366] : memref<8x32xf32, #tpu.memory_space<vmem>>, vector<8x32xf32>
      tpu.vector_store %arg24[%c0_365, %c0_366], %989 {strides = array<i32>} : memref<8x32xf32, #tpu.memory_space<vmem>>, vector<8x32xf32>,
      %cst_367 = arith.constant 0.00999999977 : f32
      %991 = vector.broadcast %cst_367 : f32 to vector<8x32xf32>
      %c0_368 = arith.constant 0 : index
      %c0_369 = arith.constant 0 : index
      %992 = vector.load %arg25[%c0_368, %c0_369] : memref<8x32xf32, #tpu.memory_space<vmem>>, vector<8x32xf32>
      tpu.vector_store %arg25[%c0_368, %c0_369], %991 {strides = array<i32>} : memref<8x32xf32, #tpu.memory_space<vmem>>, vector<8x32xf32>,
      %c0_370 = arith.constant 0 : index
      %c0_371 = arith.constant 0 : index
      %993 = vector.load %arg17[%c0_370, %c0_371] : memref<8x32xf32, #tpu.memory_space<vmem>>, vector<8x32xf32>
      %c0_372 = arith.constant 0 : index
      %c0_373 = arith.constant 0 : index
      %994 = vector.load %arg26[%c0_372, %c0_373] : memref<8x32xf32, #tpu.memory_space<vmem>>, vector<8x32xf32>
      tpu.vector_store %arg26[%c0_372, %c0_373], %993 {strides = array<i32>} : memref<8x32xf32, #tpu.memory_space<vmem>>, vector<8x32xf32>,
      %c0_374 = arith.constant 0 : index
      %c0_375 = arith.constant 0 : index
      %995 = vector.load %arg17[%c0_374, %c0_375] : memref<8x32xf32, #tpu.memory_space<vmem>>, vector<8x32xf32>
      %c0_376 = arith.constant 0 : index
      %c0_377 = arith.constant 0 : index
      %996 = vector.load %arg27[%c0_376, %c0_377] : memref<8x32xf32, #tpu.memory_space<vmem>>, vector<8x32xf32>
      tpu.vector_store %arg27[%c0_376, %c0_377], %995 {strides = array<i32>} : memref<8x32xf32, #tpu.memory_space<vmem>>, vector<8x32xf32>,
      %cst_378 = arith.constant 0.00999999977 : f32
      %997 = vector.broadcast %cst_378 : f32 to vector<8x32xf32>
      %c0_379 = arith.constant 0 : index
      %c0_380 = arith.constant 0 : index
      %998 = vector.load %arg28[%c0_379, %c0_380] : memref<8x32xf32, #tpu.memory_space<vmem>>, vector<8x32xf32>
      tpu.vector_store %arg28[%c0_379, %c0_380], %997 {strides = array<i32>} : memref<8x32xf32, #tpu.memory_space<vmem>>, vector<8x32xf32>,
      %c0_381 = arith.constant 0 : index
      %c0_382 = arith.constant 0 : index
      %999 = vector.load %arg18[%c0_381, %c0_382] : memref<8x128xf32, #tpu.memory_space<vmem>>, vector<8x128xf32>
      %c0_383 = arith.constant 0 : index
      %c0_384 = arith.constant 0 : index
      %1000 = vector.load %arg29[%c0_383, %c0_384] : memref<8x128xf32, #tpu.memory_space<vmem>>, vector<8x128xf32>
      tpu.vector_store %arg29[%c0_383, %c0_384], %999 {strides = array<i32>} : memref<8x128xf32, #tpu.memory_space<vmem>>, vector<8x128xf32>,
      %c0_385 = arith.constant 0 : index
      %c0_386 = arith.constant 0 : index
      %1001 = vector.load %arg18[%c0_385, %c0_386] : memref<8x128xf32, #tpu.memory_space<vmem>>, vector<8x128xf32>
      %c0_387 = arith.constant 0 : index
      %c0_388 = arith.constant 0 : index
      %1002 = vector.load %arg30[%c0_387, %c0_388] : memref<8x128xf32, #tpu.memory_space<vmem>>, vector<8x128xf32>
      tpu.vector_store %arg30[%c0_387, %c0_388], %1001 {strides = array<i32>} : memref<8x128xf32, #tpu.memory_space<vmem>>, vector<8x128xf32>,
      %cst_389 = arith.constant 0.00999999977 : f32
      %1003 = vector.broadcast %cst_389 : f32 to vector<8x128xf32>
      %c0_390 = arith.constant 0 : index
      %c0_391 = arith.constant 0 : index
      %1004 = vector.load %arg31[%c0_390, %c0_391] : memref<8x128xf32, #tpu.memory_space<vmem>>, vector<8x128xf32>
      tpu.vector_store %arg31[%c0_390, %c0_391], %1003 {strides = array<i32>} : memref<8x128xf32, #tpu.memory_space<vmem>>, vector<8x128xf32>,
      %c0_392 = arith.constant 0 : index
      %c0_393 = arith.constant 0 : index
      %1005 = vector.load %arg18[%c0_392, %c0_393] : memref<8x128xf32, #tpu.memory_space<vmem>>, vector<8x128xf32>
      %c0_394 = arith.constant 0 : index
      %c0_395 = arith.constant 0 : index
      %1006 = vector.load %arg19[%c0_394, %c0_395] : memref<8x128xf32, #tpu.memory_space<vmem>>, vector<8x128xf32>
      tpu.vector_store %arg19[%c0_394, %c0_395], %1005 {strides = array<i32>} : memref<8x128xf32, #tpu.memory_space<vmem>>, vector<8x128xf32>,
    } else {
    }
    %c0 = arith.constant 0 : index
    %c0_1 = arith.constant 0 : index
    %3 = vector.load %arg7[%c0, %c0_1] : memref<1x32xf32, #tpu.memory_space<vmem>>, vector<1x32xf32>
    %cst = arith.constant 1.000000e+00 : f32
    %4 = vector.broadcast %cst : f32 to vector<1x32xf32>
    %5 = arith.subf %4, %3 : vector<1x32xf32>
    %c0_2 = arith.constant 0 : index
    %c0_3 = arith.constant 0 : index
    %6 = vector.load %arg8[%c0_2, %c0_3] : memref<1x32xf32, #tpu.memory_space<vmem>>, vector<1x32xf32>
    %cst_4 = arith.constant 1.000000e+00 : f32
    %7 = vector.broadcast %cst_4 : f32 to vector<1x32xf32>
    %8 = arith.subf %7, %6 : vector<1x32xf32>
    %c0_5 = arith.constant 0 : index
    %c0_6 = arith.constant 0 : index
    %9 = vector.load %arg9[%c0_5, %c0_6] : memref<1x32xf32, #tpu.memory_space<vmem>>, vector<1x32xf32>
    %cst_7 = arith.constant 1.000000e+00 : f32
    %10 = vector.broadcast %cst_7 : f32 to vector<1x32xf32>
    %11 = arith.subf %10, %9 : vector<1x32xf32>
    %c0_8 = arith.constant 0 : index
    %c0_9 = arith.constant 0 : index
    %12 = vector.load %arg10[%c0_8, %c0_9] : memref<1x32xf32, #tpu.memory_space<vmem>>, vector<1x32xf32>
    %cst_10 = arith.constant 1.000000e+00 : f32
    %13 = vector.broadcast %cst_10 : f32 to vector<1x32xf32>
    %14 = arith.subf %13, %12 : vector<1x32xf32>
    %c0_11 = arith.constant 0 : index
    %c0_12 = arith.constant 0 : index
    %15 = vector.load %arg11[%c0_11, %c0_12] : memref<1x32xf32, #tpu.memory_space<vmem>>, vector<1x32xf32>
    %cst_13 = arith.constant 1.000000e+00 : f32
    %16 = vector.broadcast %cst_13 : f32 to vector<1x32xf32>
    %17 = arith.subf %16, %15 : vector<1x32xf32>
    %c0_14 = arith.constant 0 : index
    %c0_15 = arith.constant 0 : index
    %18 = vector.load %arg12[%c0_14, %c0_15] : memref<1x32xf32, #tpu.memory_space<vmem>>, vector<1x32xf32>
    %cst_16 = arith.constant 1.000000e+00 : f32
    %19 = vector.broadcast %cst_16 : f32 to vector<1x32xf32>
    %20 = arith.subf %19, %18 : vector<1x32xf32>
    %c0_17 = arith.constant 0 : index
    %c0_18 = arith.constant 0 : index
    %21 = vector.load %arg13[%c0_17, %c0_18] : memref<1x128xf32, #tpu.memory_space<vmem>>, vector<1x128xf32>
    %cst_19 = arith.constant 1.000000e+00 : f32
    %22 = vector.broadcast %cst_19 : f32 to vector<1x128xf32>
    %23 = arith.subf %22, %21 : vector<1x128xf32>
    %c0_20 = arith.constant 0 : index
    %c0_21 = arith.constant 0 : index
    %24 = vector.load %arg14[%c0_20, %c0_21] : memref<1x128xf32, #tpu.memory_space<vmem>>, vector<1x128xf32>
    %cst_22 = arith.constant 1.000000e+00 : f32
    %25 = vector.broadcast %cst_22 : f32 to vector<1x128xf32>
    %26 = arith.subf %25, %24 : vector<1x128xf32>
    %c0_23 = arith.constant 0 : index
    %c0_24 = arith.constant 0 : index
    %27 = vector.load %arg20[%c0_23, %c0_24] : memref<8x32xf32, #tpu.memory_space<vmem>>, vector<8x32xf32>
    %c0_25 = arith.constant 0 : index
    %c0_26 = arith.constant 0 : index
    %28 = vector.load %arg21[%c0_25, %c0_26] : memref<8x32xf32, #tpu.memory_space<vmem>>, vector<8x32xf32>
    %c0_27 = arith.constant 0 : index
    %c0_28 = arith.constant 0 : index
    %29 = vector.load %arg22[%c0_27, %c0_28] : memref<8x32xf32, #tpu.memory_space<vmem>>, vector<8x32xf32>
    %c0_29 = arith.constant 0 : index
    %c0_30 = arith.constant 0 : index
    %30 = vector.load %arg23[%c0_29, %c0_30] : memref<8x32xf32, #tpu.memory_space<vmem>>, vector<8x32xf32>
    %c0_31 = arith.constant 0 : index
    %c0_32 = arith.constant 0 : index
    %31 = vector.load %arg24[%c0_31, %c0_32] : memref<8x32xf32, #tpu.memory_space<vmem>>, vector<8x32xf32>
    %c0_33 = arith.constant 0 : index
    %c0_34 = arith.constant 0 : index
    %32 = vector.load %arg25[%c0_33, %c0_34] : memref<8x32xf32, #tpu.memory_space<vmem>>, vector<8x32xf32>
    %c0_35 = arith.constant 0 : index
    %c0_36 = arith.constant 0 : index
    %33 = vector.load %arg26[%c0_35, %c0_36] : memref<8x32xf32, #tpu.memory_space<vmem>>, vector<8x32xf32>
    %c0_37 = arith.constant 0 : index
    %c0_38 = arith.constant 0 : index
    %34 = vector.load %arg27[%c0_37, %c0_38] : memref<8x32xf32, #tpu.memory_space<vmem>>, vector<8x32xf32>
    %c0_39 = arith.constant 0 : index
    %c0_40 = arith.constant 0 : index
    %35 = vector.load %arg28[%c0_39, %c0_40] : memref<8x32xf32, #tpu.memory_space<vmem>>, vector<8x32xf32>
    %c0_41 = arith.constant 0 : index
    %c0_42 = arith.constant 0 : index
    %36 = vector.load %arg29[%c0_41, %c0_42] : memref<8x128xf32, #tpu.memory_space<vmem>>, vector<8x128xf32>
    %c0_43 = arith.constant 0 : index
    %c0_44 = arith.constant 0 : index
    %37 = vector.load %arg30[%c0_43, %c0_44] : memref<8x128xf32, #tpu.memory_space<vmem>>, vector<8x128xf32>
    %c0_45 = arith.constant 0 : index
    %c0_46 = arith.constant 0 : index
    %38 = vector.load %arg31[%c0_45, %c0_46] : memref<8x128xf32, #tpu.memory_space<vmem>>, vector<8x128xf32>
    %c0_47 = arith.constant 0 : index
    %c0_48 = arith.constant 0 : index
    %39 = vector.load %arg19[%c0_47, %c0_48] : memref<8x128xf32, #tpu.memory_space<vmem>>, vector<8x128xf32>
    %c0_49 = arith.constant 0 : index
    %c0_50 = arith.constant 0 : index
    %c0_51 = arith.constant 0 : index
    %40 = vector.load %arg2[%c0_49, %c0_50, %c0_51] : memref<1x64x32xf32, #tpu.memory_space<vmem>>, vector<1x8x32xf32>
    %41 = vector.shape_cast %40 : vector<1x8x32xf32> to vector<8x32xf32>
    %42 = tpu.concatenate %28, %31 in 1 : vector<8x32xf32>, vector<8x32xf32> -> vector<8x64xf32>
    %c0_52 = arith.constant 0 : index
    %c0_53 = arith.constant 0 : index
    %43 = vector.load %arg3[%c0_52, %c0_53] : memref<64x64xf32, #tpu.memory_space<vmem>>, vector<64x64xf32>
    %cst_54 = arith.constant dense<0.000000e+00> : vector<8x64xf32>
    %44 = tpu.matmul %42, %43, %cst_54 {dimension_numbers = #tpu.dot_dimension_numbers<[1], [0], [0], [1], [0, 0, 1, 1], [], []>} : vector<8x64xf32>, vector<64x64xf32>, vector<8x64xf32> -> vector<8x64xf32>
    %45 = vector.extract_strided_slice %44 {offsets = [0, 0], sizes = [8, 32], strides = [1, 1]} : vector<8x64xf32> to vector<8x32xf32>
    %46 = arith.addf %41, %45 : vector<8x32xf32>
    %47 = vector.broadcast %6 : vector<1x32xf32> to vector<8x32xf32>
    %48 = arith.mulf %47, %29 : vector<8x32xf32>
    %49 = vector.broadcast %8 : vector<1x32xf32> to vector<8x32xf32>
    %50 = arith.mulf %49, %28 : vector<8x32xf32>
    %51 = arith.addf %48, %50 : vector<8x32xf32>
    %cst_55 = arith.constant 1.800000e+00 : f32
    %52 = vector.broadcast %cst_55 : f32 to vector<8x32xf32>
    %53 = arith.mulf %52, %51 : vector<8x32xf32>
    %cst_56 = arith.constant 0.00999999977 : f32
    %54 = vector.broadcast %cst_56 : f32 to vector<8x32xf32>
    %55 = arith.addf %54, %53 : vector<8x32xf32>
    %56 = vector.broadcast %3 : vector<1x32xf32> to vector<8x32xf32>
    %57 = arith.mulf %27, %56 : vector<8x32xf32>
    %cst_57 = arith.constant 1.000000e+00 : f32
    %58 = vector.broadcast %cst_57 : f32 to vector<8x32xf32>
    %59 = arith.mulf %58, %46 : vector<8x32xf32>
    %60 = vector.broadcast %5 : vector<1x32xf32> to vector<8x32xf32>
    %61 = arith.mulf %60, %59 : vector<8x32xf32>
    %62 = arith.addf %57, %61 : vector<8x32xf32>
    %63 = arith.mulf %55, %28 : vector<8x32xf32>
    %cst_58 = arith.constant 1.000000e+00 : f32
    %64 = vector.broadcast %cst_58 : f32 to vector<8x32xf32>
    %65 = arith.mulf %63, %64 : vector<8x32xf32>
    %66 = arith.subf %62, %65 : vector<8x32xf32>
    %67 = arith.subf %66, %55 : vector<8x32xf32>
    %cst_59 = arith.constant 0.000000e+00 : f32
    %68 = vector.broadcast %cst_59 : f32 to vector<8x32xf32>
    %69 = arith.cmpf ogt, %67, %68 : vector<8x32xf32>
    %70 = arith.extui %69 : vector<8x32xi1> to vector<8x32xi32>
    %71 = arith.sitofp %70 : vector<8x32xi32> to vector<8x32xf32>
    %c0_60 = arith.constant 0 : index
    %c0_61 = arith.constant 0 : index
    %72 = vector.load %arg4[%c0_60, %c0_61] : memref<32x32xf32, #tpu.memory_space<vmem>>, vector<32x32xf32>
    %cst_62 = arith.constant dense<0.000000e+00> : vector<8x32xf32>
    %73 = tpu.matmul %71, %72, %cst_62 {dimension_numbers = #tpu.dot_dimension_numbers<[1], [0], [0], [1], [0, 0, 1, 1], [], []>} : vector<8x32xf32>, vector<32x32xf32>, vector<8x32xf32> -> vector<8x32xf32>
    %74 = vector.extract_strided_slice %44 {offsets = [0, 32], sizes = [8, 32], strides = [1, 1]} : vector<8x64xf32> to vector<8x32xf32>
    %75 = arith.addf %73, %74 : vector<8x32xf32>
    %76 = vector.broadcast %12 : vector<1x32xf32> to vector<8x32xf32>
    %77 = arith.mulf %76, %32 : vector<8x32xf32>
    %78 = vector.broadcast %14 : vector<1x32xf32> to vector<8x32xf32>
    %79 = arith.mulf %78, %31 : vector<8x32xf32>
    %80 = arith.addf %77, %79 : vector<8x32xf32>
    %cst_63 = arith.constant 1.800000e+00 : f32
    %81 = vector.broadcast %cst_63 : f32 to vector<8x32xf32>
    %82 = arith.mulf %81, %80 : vector<8x32xf32>
    %cst_64 = arith.constant 0.00999999977 : f32
    %83 = vector.broadcast %cst_64 : f32 to vector<8x32xf32>
    %84 = arith.addf %83, %82 : vector<8x32xf32>
    %85 = vector.broadcast %9 : vector<1x32xf32> to vector<8x32xf32>
    %86 = arith.mulf %30, %85 : vector<8x32xf32>
    %cst_65 = arith.constant 1.000000e+00 : f32
    %87 = vector.broadcast %cst_65 : f32 to vector<8x32xf32>
    %88 = arith.mulf %87, %75 : vector<8x32xf32>
    %89 = vector.broadcast %11 : vector<1x32xf32> to vector<8x32xf32>
    %90 = arith.mulf %89, %88 : vector<8x32xf32>
    %91 = arith.addf %86, %90 : vector<8x32xf32>
    %92 = arith.mulf %84, %31 : vector<8x32xf32>
    %cst_66 = arith.constant 1.000000e+00 : f32
    %93 = vector.broadcast %cst_66 : f32 to vector<8x32xf32>
    %94 = arith.mulf %92, %93 : vector<8x32xf32>
    %95 = arith.subf %91, %94 : vector<8x32xf32>
    %96 = arith.subf %95, %84 : vector<8x32xf32>
    %cst_67 = arith.constant 0.000000e+00 : f32
    %97 = vector.broadcast %cst_67 : f32 to vector<8x32xf32>
    %98 = arith.cmpf ogt, %96, %97 : vector<8x32xf32>
    %99 = arith.extui %98 : vector<8x32xi1> to vector<8x32xi32>
    %100 = arith.sitofp %99 : vector<8x32xi32> to vector<8x32xf32>
    %c0_68 = arith.constant 0 : index
    %c0_69 = arith.constant 0 : index
    %101 = vector.load %arg5[%c0_68, %c0_69] : memref<32x32xf32, #tpu.memory_space<vmem>>, vector<32x32xf32>
    %cst_70 = arith.constant dense<0.000000e+00> : vector<8x32xf32>
    %102 = tpu.matmul %100, %101, %cst_70 {dimension_numbers = #tpu.dot_dimension_numbers<[1], [0], [0], [1], [0, 0, 1, 1], [], []>} : vector<8x32xf32>, vector<32x32xf32>, vector<8x32xf32> -> vector<8x32xf32>
    %103 = vector.broadcast %18 : vector<1x32xf32> to vector<8x32xf32>
    %104 = arith.mulf %103, %35 : vector<8x32xf32>
    %105 = vector.broadcast %20 : vector<1x32xf32> to vector<8x32xf32>
    %106 = arith.mulf %105, %34 : vector<8x32xf32>
    %107 = arith.addf %104, %106 : vector<8x32xf32>
    %cst_71 = arith.constant 1.800000e+00 : f32
    %108 = vector.broadcast %cst_71 : f32 to vector<8x32xf32>
    %109 = arith.mulf %108, %107 : vector<8x32xf32>
    %cst_72 = arith.constant 0.00999999977 : f32
    %110 = vector.broadcast %cst_72 : f32 to vector<8x32xf32>
    %111 = arith.addf %110, %109 : vector<8x32xf32>
    %112 = vector.broadcast %15 : vector<1x32xf32> to vector<8x32xf32>
    %113 = arith.mulf %33, %112 : vector<8x32xf32>
    %cst_73 = arith.constant 1.000000e+00 : f32
    %114 = vector.broadcast %cst_73 : f32 to vector<8x32xf32>
    %115 = arith.mulf %114, %102 : vector<8x32xf32>
    %116 = vector.broadcast %17 : vector<1x32xf32> to vector<8x32xf32>
    %117 = arith.mulf %116, %115 : vector<8x32xf32>
    %118 = arith.addf %113, %117 : vector<8x32xf32>
    %119 = arith.mulf %111, %34 : vector<8x32xf32>
    %cst_74 = arith.constant 1.000000e+00 : f32
    %120 = vector.broadcast %cst_74 : f32 to vector<8x32xf32>
    %121 = arith.mulf %119, %120 : vector<8x32xf32>
    %122 = arith.subf %118, %121 : vector<8x32xf32>
    %123 = arith.subf %122, %111 : vector<8x32xf32>
    %cst_75 = arith.constant 0.000000e+00 : f32
    %124 = vector.broadcast %cst_75 : f32 to vector<8x32xf32>
    %125 = arith.cmpf ogt, %123, %124 : vector<8x32xf32>
    %126 = arith.extui %125 : vector<8x32xi1> to vector<8x32xi32>
    %127 = arith.sitofp %126 : vector<8x32xi32> to vector<8x32xf32>
    %c0_76 = arith.constant 0 : index
    %c0_77 = arith.constant 0 : index
    %128 = vector.load %arg6[%c0_76, %c0_77] : memref<32x128xf32, #tpu.memory_space<vmem>>, vector<32x128xf32>
    %cst_78 = arith.constant dense<0.000000e+00> : vector<8x128xf32>
    %129 = tpu.matmul %127, %128, %cst_78 {dimension_numbers = #tpu.dot_dimension_numbers<[1], [0], [0], [1], [0, 0, 1, 1], [], []>} : vector<8x32xf32>, vector<32x128xf32>, vector<8x128xf32> -> vector<8x128xf32>
    %130 = vector.broadcast %24 : vector<1x128xf32> to vector<8x128xf32>
    %131 = arith.mulf %130, %38 : vector<8x128xf32>
    %132 = vector.broadcast %26 : vector<1x128xf32> to vector<8x128xf32>
    %133 = arith.mulf %132, %37 : vector<8x128xf32>
    %134 = arith.addf %131, %133 : vector<8x128xf32>
    %cst_79 = arith.constant 1.800000e+00 : f32
    %135 = vector.broadcast %cst_79 : f32 to vector<8x128xf32>
    %136 = arith.mulf %135, %134 : vector<8x128xf32>
    %cst_80 = arith.constant 0.00999999977 : f32
    %137 = vector.broadcast %cst_80 : f32 to vector<8x128xf32>
    %138 = arith.addf %137, %136 : vector<8x128xf32>
    %139 = vector.broadcast %21 : vector<1x128xf32> to vector<8x128xf32>
    %140 = arith.mulf %36, %139 : vector<8x128xf32>
    %cst_81 = arith.constant 1.000000e+00 : f32
    %141 = vector.broadcast %cst_81 : f32 to vector<8x128xf32>
    %142 = arith.mulf %141, %129 : vector<8x128xf32>
    %143 = vector.broadcast %23 : vector<1x128xf32> to vector<8x128xf32>
    %144 = arith.mulf %143, %142 : vector<8x128xf32>
    %145 = arith.addf %140, %144 : vector<8x128xf32>
    %146 = arith.mulf %138, %37 : vector<8x128xf32>
    %cst_82 = arith.constant 1.000000e+00 : f32
    %147 = vector.broadcast %cst_82 : f32 to vector<8x128xf32>
    %148 = arith.mulf %146, %147 : vector<8x128xf32>
    %149 = arith.subf %145, %148 : vector<8x128xf32>
    %150 = arith.subf %149, %138 : vector<8x128xf32>
    %cst_83 = arith.constant 0.000000e+00 : f32
    %151 = vector.broadcast %cst_83 : f32 to vector<8x128xf32>
    %152 = arith.cmpf ogt, %150, %151 : vector<8x128xf32>
    %153 = arith.extui %152 : vector<8x128xi1> to vector<8x128xi32>
    %154 = arith.sitofp %153 : vector<8x128xi32> to vector<8x128xf32>
    %155 = arith.addf %39, %154 : vector<8x128xf32>
    %c0_84 = arith.constant 0 : index
    %c8 = arith.constant 8 : index
    %c0_85 = arith.constant 0 : index
    %156 = vector.load %arg2[%c0_84, %c8, %c0_85] : memref<1x64x32xf32, #tpu.memory_space<vmem>>, vector<1x8x32xf32>
    %157 = vector.shape_cast %156 : vector<1x8x32xf32> to vector<8x32xf32>
    %158 = tpu.concatenate %71, %100 in 1 : vector<8x32xf32>, vector<8x32xf32> -> vector<8x64xf32>
    %c0_86 = arith.constant 0 : index
    %c0_87 = arith.constant 0 : index
    %159 = vector.load %arg3[%c0_86, %c0_87] : memref<64x64xf32, #tpu.memory_space<vmem>>, vector<64x64xf32>
    %cst_88 = arith.constant dense<0.000000e+00> : vector<8x64xf32>
    %160 = tpu.matmul %158, %159, %cst_88 {dimension_numbers = #tpu.dot_dimension_numbers<[1], [0], [0], [1], [0, 0, 1, 1], [], []>} : vector<8x64xf32>, vector<64x64xf32>, vector<8x64xf32> -> vector<8x64xf32>
    %161 = vector.extract_strided_slice %160 {offsets = [0, 0], sizes = [8, 32], strides = [1, 1]} : vector<8x64xf32> to vector<8x32xf32>
    %162 = arith.addf %157, %161 : vector<8x32xf32>
    %163 = vector.broadcast %6 : vector<1x32xf32> to vector<8x32xf32>
    %164 = arith.mulf %163, %51 : vector<8x32xf32>
    %165 = vector.broadcast %8 : vector<1x32xf32> to vector<8x32xf32>
    %166 = arith.mulf %165, %71 : vector<8x32xf32>
    %167 = arith.addf %164, %166 : vector<8x32xf32>
    %cst_89 = arith.constant 1.800000e+00 : f32
    %168 = vector.broadcast %cst_89 : f32 to vector<8x32xf32>
    %169 = arith.mulf %168, %167 : vector<8x32xf32>
    %cst_90 = arith.constant 0.00999999977 : f32
    %170 = vector.broadcast %cst_90 : f32 to vector<8x32xf32>
    %171 = arith.addf %170, %169 : vector<8x32xf32>
    %172 = vector.broadcast %3 : vector<1x32xf32> to vector<8x32xf32>
    %173 = arith.mulf %66, %172 : vector<8x32xf32>
    %cst_91 = arith.constant 1.000000e+00 : f32
    %174 = vector.broadcast %cst_91 : f32 to vector<8x32xf32>
    %175 = arith.mulf %174, %162 : vector<8x32xf32>
    %176 = vector.broadcast %5 : vector<1x32xf32> to vector<8x32xf32>
    %177 = arith.mulf %176, %175 : vector<8x32xf32>
    %178 = arith.addf %173, %177 : vector<8x32xf32>
    %179 = arith.mulf %171, %71 : vector<8x32xf32>
    %cst_92 = arith.constant 1.000000e+00 : f32
    %180 = vector.broadcast %cst_92 : f32 to vector<8x32xf32>
    %181 = arith.mulf %179, %180 : vector<8x32xf32>
    %182 = arith.subf %178, %181 : vector<8x32xf32>
    %183 = arith.subf %182, %171 : vector<8x32xf32>
    %cst_93 = arith.constant 0.000000e+00 : f32
    %184 = vector.broadcast %cst_93 : f32 to vector<8x32xf32>
    %185 = arith.cmpf ogt, %183, %184 : vector<8x32xf32>
    %186 = arith.extui %185 : vector<8x32xi1> to vector<8x32xi32>
    %187 = arith.sitofp %186 : vector<8x32xi32> to vector<8x32xf32>
    %c0_94 = arith.constant 0 : index
    %c0_95 = arith.constant 0 : index
    %188 = vector.load %arg4[%c0_94, %c0_95] : memref<32x32xf32, #tpu.memory_space<vmem>>, vector<32x32xf32>
    %cst_96 = arith.constant dense<0.000000e+00> : vector<8x32xf32>
    %189 = tpu.matmul %187, %188, %cst_96 {dimension_numbers = #tpu.dot_dimension_numbers<[1], [0], [0], [1], [0, 0, 1, 1], [], []>} : vector<8x32xf32>, vector<32x32xf32>, vector<8x32xf32> -> vector<8x32xf32>
    %190 = vector.extract_strided_slice %160 {offsets = [0, 32], sizes = [8, 32], strides = [1, 1]} : vector<8x64xf32> to vector<8x32xf32>
    %191 = arith.addf %189, %190 : vector<8x32xf32>
    %192 = vector.broadcast %12 : vector<1x32xf32> to vector<8x32xf32>
    %193 = arith.mulf %192, %80 : vector<8x32xf32>
    %194 = vector.broadcast %14 : vector<1x32xf32> to vector<8x32xf32>
    %195 = arith.mulf %194, %100 : vector<8x32xf32>
    %196 = arith.addf %193, %195 : vector<8x32xf32>
    %cst_97 = arith.constant 1.800000e+00 : f32
    %197 = vector.broadcast %cst_97 : f32 to vector<8x32xf32>
    %198 = arith.mulf %197, %196 : vector<8x32xf32>
    %cst_98 = arith.constant 0.00999999977 : f32
    %199 = vector.broadcast %cst_98 : f32 to vector<8x32xf32>
    %200 = arith.addf %199, %198 : vector<8x32xf32>
    %201 = vector.broadcast %9 : vector<1x32xf32> to vector<8x32xf32>
    %202 = arith.mulf %95, %201 : vector<8x32xf32>
    %cst_99 = arith.constant 1.000000e+00 : f32
    %203 = vector.broadcast %cst_99 : f32 to vector<8x32xf32>
    %204 = arith.mulf %203, %191 : vector<8x32xf32>
    %205 = vector.broadcast %11 : vector<1x32xf32> to vector<8x32xf32>
    %206 = arith.mulf %205, %204 : vector<8x32xf32>
    %207 = arith.addf %202, %206 : vector<8x32xf32>
    %208 = arith.mulf %200, %100 : vector<8x32xf32>
    %cst_100 = arith.constant 1.000000e+00 : f32
    %209 = vector.broadcast %cst_100 : f32 to vector<8x32xf32>
    %210 = arith.mulf %208, %209 : vector<8x32xf32>
    %211 = arith.subf %207, %210 : vector<8x32xf32>
    %212 = arith.subf %211, %200 : vector<8x32xf32>
    %cst_101 = arith.constant 0.000000e+00 : f32
    %213 = vector.broadcast %cst_101 : f32 to vector<8x32xf32>
    %214 = arith.cmpf ogt, %212, %213 : vector<8x32xf32>
    %215 = arith.extui %214 : vector<8x32xi1> to vector<8x32xi32>
    %216 = arith.sitofp %215 : vector<8x32xi32> to vector<8x32xf32>
    %c0_102 = arith.constant 0 : index
    %c0_103 = arith.constant 0 : index
    %217 = vector.load %arg5[%c0_102, %c0_103] : memref<32x32xf32, #tpu.memory_space<vmem>>, vector<32x32xf32>
    %cst_104 = arith.constant dense<0.000000e+00> : vector<8x32xf32>
    %218 = tpu.matmul %216, %217, %cst_104 {dimension_numbers = #tpu.dot_dimension_numbers<[1], [0], [0], [1], [0, 0, 1, 1], [], []>} : vector<8x32xf32>, vector<32x32xf32>, vector<8x32xf32> -> vector<8x32xf32>
    %219 = vector.broadcast %18 : vector<1x32xf32> to vector<8x32xf32>
    %220 = arith.mulf %219, %107 : vector<8x32xf32>
    %221 = vector.broadcast %20 : vector<1x32xf32> to vector<8x32xf32>
    %222 = arith.mulf %221, %127 : vector<8x32xf32>
    %223 = arith.addf %220, %222 : vector<8x32xf32>
    %cst_105 = arith.constant 1.800000e+00 : f32
    %224 = vector.broadcast %cst_105 : f32 to vector<8x32xf32>
    %225 = arith.mulf %224, %223 : vector<8x32xf32>
    %cst_106 = arith.constant 0.00999999977 : f32
    %226 = vector.broadcast %cst_106 : f32 to vector<8x32xf32>
    %227 = arith.addf %226, %225 : vector<8x32xf32>
    %228 = vector.broadcast %15 : vector<1x32xf32> to vector<8x32xf32>
    %229 = arith.mulf %122, %228 : vector<8x32xf32>
    %cst_107 = arith.constant 1.000000e+00 : f32
    %230 = vector.broadcast %cst_107 : f32 to vector<8x32xf32>
    %231 = arith.mulf %230, %218 : vector<8x32xf32>
    %232 = vector.broadcast %17 : vector<1x32xf32> to vector<8x32xf32>
    %233 = arith.mulf %232, %231 : vector<8x32xf32>
    %234 = arith.addf %229, %233 : vector<8x32xf32>
    %235 = arith.mulf %227, %127 : vector<8x32xf32>
    %cst_108 = arith.constant 1.000000e+00 : f32
    %236 = vector.broadcast %cst_108 : f32 to vector<8x32xf32>
    %237 = arith.mulf %235, %236 : vector<8x32xf32>
    %238 = arith.subf %234, %237 : vector<8x32xf32>
    %239 = arith.subf %238, %227 : vector<8x32xf32>
    %cst_109 = arith.constant 0.000000e+00 : f32
    %240 = vector.broadcast %cst_109 : f32 to vector<8x32xf32>
    %241 = arith.cmpf ogt, %239, %240 : vector<8x32xf32>
    %242 = arith.extui %241 : vector<8x32xi1> to vector<8x32xi32>
    %243 = arith.sitofp %242 : vector<8x32xi32> to vector<8x32xf32>
    %c0_110 = arith.constant 0 : index
    %c0_111 = arith.constant 0 : index
    %244 = vector.load %arg6[%c0_110, %c0_111] : memref<32x128xf32, #tpu.memory_space<vmem>>, vector<32x128xf32>
    %cst_112 = arith.constant dense<0.000000e+00> : vector<8x128xf32>
    %245 = tpu.matmul %243, %244, %cst_112 {dimension_numbers = #tpu.dot_dimension_numbers<[1], [0], [0], [1], [0, 0, 1, 1], [], []>} : vector<8x32xf32>, vector<32x128xf32>, vector<8x128xf32> -> vector<8x128xf32>
    %246 = vector.broadcast %24 : vector<1x128xf32> to vector<8x128xf32>
    %247 = arith.mulf %246, %134 : vector<8x128xf32>
    %248 = vector.broadcast %26 : vector<1x128xf32> to vector<8x128xf32>
    %249 = arith.mulf %248, %154 : vector<8x128xf32>
    %250 = arith.addf %247, %249 : vector<8x128xf32>
    %cst_113 = arith.constant 1.800000e+00 : f32
    %251 = vector.broadcast %cst_113 : f32 to vector<8x128xf32>
    %252 = arith.mulf %251, %250 : vector<8x128xf32>
    %cst_114 = arith.constant 0.00999999977 : f32
    %253 = vector.broadcast %cst_114 : f32 to vector<8x128xf32>
    %254 = arith.addf %253, %252 : vector<8x128xf32>
    %255 = vector.broadcast %21 : vector<1x128xf32> to vector<8x128xf32>
    %256 = arith.mulf %149, %255 : vector<8x128xf32>
    %cst_115 = arith.constant 1.000000e+00 : f32
    %257 = vector.broadcast %cst_115 : f32 to vector<8x128xf32>
    %258 = arith.mulf %257, %245 : vector<8x128xf32>
    %259 = vector.broadcast %23 : vector<1x128xf32> to vector<8x128xf32>
    %260 = arith.mulf %259, %258 : vector<8x128xf32>
    %261 = arith.addf %256, %260 : vector<8x128xf32>
    %262 = arith.mulf %254, %154 : vector<8x128xf32>
    %cst_116 = arith.constant 1.000000e+00 : f32
    %263 = vector.broadcast %cst_116 : f32 to vector<8x128xf32>
    %264 = arith.mulf %262, %263 : vector<8x128xf32>
    %265 = arith.subf %261, %264 : vector<8x128xf32>
    %266 = arith.subf %265, %254 : vector<8x128xf32>
    %cst_117 = arith.constant 0.000000e+00 : f32
    %267 = vector.broadcast %cst_117 : f32 to vector<8x128xf32>
    %268 = arith.cmpf ogt, %266, %267 : vector<8x128xf32>
    %269 = arith.extui %268 : vector<8x128xi1> to vector<8x128xi32>
    %270 = arith.sitofp %269 : vector<8x128xi32> to vector<8x128xf32>
    %271 = arith.addf %155, %270 : vector<8x128xf32>
    %c0_118 = arith.constant 0 : index
    %c16 = arith.constant 16 : index
    %c0_119 = arith.constant 0 : index
    %272 = vector.load %arg2[%c0_118, %c16, %c0_119] : memref<1x64x32xf32, #tpu.memory_space<vmem>>, vector<1x8x32xf32>
    %273 = vector.shape_cast %272 : vector<1x8x32xf32> to vector<8x32xf32>
    %274 = tpu.concatenate %187, %216 in 1 : vector<8x32xf32>, vector<8x32xf32> -> vector<8x64xf32>
    %c0_120 = arith.constant 0 : index
    %c0_121 = arith.constant 0 : index
    %275 = vector.load %arg3[%c0_120, %c0_121] : memref<64x64xf32, #tpu.memory_space<vmem>>, vector<64x64xf32>
    %cst_122 = arith.constant dense<0.000000e+00> : vector<8x64xf32>
    %276 = tpu.matmul %274, %275, %cst_122 {dimension_numbers = #tpu.dot_dimension_numbers<[1], [0], [0], [1], [0, 0, 1, 1], [], []>} : vector<8x64xf32>, vector<64x64xf32>, vector<8x64xf32> -> vector<8x64xf32>
    %277 = vector.extract_strided_slice %276 {offsets = [0, 0], sizes = [8, 32], strides = [1, 1]} : vector<8x64xf32> to vector<8x32xf32>
    %278 = arith.addf %273, %277 : vector<8x32xf32>
    %279 = vector.broadcast %6 : vector<1x32xf32> to vector<8x32xf32>
    %280 = arith.mulf %279, %167 : vector<8x32xf32>
    %281 = vector.broadcast %8 : vector<1x32xf32> to vector<8x32xf32>
    %282 = arith.mulf %281, %187 : vector<8x32xf32>
    %283 = arith.addf %280, %282 : vector<8x32xf32>
    %cst_123 = arith.constant 1.800000e+00 : f32
    %284 = vector.broadcast %cst_123 : f32 to vector<8x32xf32>
    %285 = arith.mulf %284, %283 : vector<8x32xf32>
    %cst_124 = arith.constant 0.00999999977 : f32
    %286 = vector.broadcast %cst_124 : f32 to vector<8x32xf32>
    %287 = arith.addf %286, %285 : vector<8x32xf32>
    %288 = vector.broadcast %3 : vector<1x32xf32> to vector<8x32xf32>
    %289 = arith.mulf %182, %288 : vector<8x32xf32>
    %cst_125 = arith.constant 1.000000e+00 : f32
    %290 = vector.broadcast %cst_125 : f32 to vector<8x32xf32>
    %291 = arith.mulf %290, %278 : vector<8x32xf32>
    %292 = vector.broadcast %5 : vector<1x32xf32> to vector<8x32xf32>
    %293 = arith.mulf %292, %291 : vector<8x32xf32>
    %294 = arith.addf %289, %293 : vector<8x32xf32>
    %295 = arith.mulf %287, %187 : vector<8x32xf32>
    %cst_126 = arith.constant 1.000000e+00 : f32
    %296 = vector.broadcast %cst_126 : f32 to vector<8x32xf32>
    %297 = arith.mulf %295, %296 : vector<8x32xf32>
    %298 = arith.subf %294, %297 : vector<8x32xf32>
    %299 = arith.subf %298, %287 : vector<8x32xf32>
    %cst_127 = arith.constant 0.000000e+00 : f32
    %300 = vector.broadcast %cst_127 : f32 to vector<8x32xf32>
    %301 = arith.cmpf ogt, %299, %300 : vector<8x32xf32>
    %302 = arith.extui %301 : vector<8x32xi1> to vector<8x32xi32>
    %303 = arith.sitofp %302 : vector<8x32xi32> to vector<8x32xf32>
    %c0_128 = arith.constant 0 : index
    %c0_129 = arith.constant 0 : index
    %304 = vector.load %arg4[%c0_128, %c0_129] : memref<32x32xf32, #tpu.memory_space<vmem>>, vector<32x32xf32>
    %cst_130 = arith.constant dense<0.000000e+00> : vector<8x32xf32>
    %305 = tpu.matmul %303, %304, %cst_130 {dimension_numbers = #tpu.dot_dimension_numbers<[1], [0], [0], [1], [0, 0, 1, 1], [], []>} : vector<8x32xf32>, vector<32x32xf32>, vector<8x32xf32> -> vector<8x32xf32>
    %306 = vector.extract_strided_slice %276 {offsets = [0, 32], sizes = [8, 32], strides = [1, 1]} : vector<8x64xf32> to vector<8x32xf32>
    %307 = arith.addf %305, %306 : vector<8x32xf32>
    %308 = vector.broadcast %12 : vector<1x32xf32> to vector<8x32xf32>
    %309 = arith.mulf %308, %196 : vector<8x32xf32>
    %310 = vector.broadcast %14 : vector<1x32xf32> to vector<8x32xf32>
    %311 = arith.mulf %310, %216 : vector<8x32xf32>
    %312 = arith.addf %309, %311 : vector<8x32xf32>
    %cst_131 = arith.constant 1.800000e+00 : f32
    %313 = vector.broadcast %cst_131 : f32 to vector<8x32xf32>
    %314 = arith.mulf %313, %312 : vector<8x32xf32>
    %cst_132 = arith.constant 0.00999999977 : f32
    %315 = vector.broadcast %cst_132 : f32 to vector<8x32xf32>
    %316 = arith.addf %315, %314 : vector<8x32xf32>
    %317 = vector.broadcast %9 : vector<1x32xf32> to vector<8x32xf32>
    %318 = arith.mulf %211, %317 : vector<8x32xf32>
    %cst_133 = arith.constant 1.000000e+00 : f32
    %319 = vector.broadcast %cst_133 : f32 to vector<8x32xf32>
    %320 = arith.mulf %319, %307 : vector<8x32xf32>
    %321 = vector.broadcast %11 : vector<1x32xf32> to vector<8x32xf32>
    %322 = arith.mulf %321, %320 : vector<8x32xf32>
    %323 = arith.addf %318, %322 : vector<8x32xf32>
    %324 = arith.mulf %316, %216 : vector<8x32xf32>
    %cst_134 = arith.constant 1.000000e+00 : f32
    %325 = vector.broadcast %cst_134 : f32 to vector<8x32xf32>
    %326 = arith.mulf %324, %325 : vector<8x32xf32>
    %327 = arith.subf %323, %326 : vector<8x32xf32>
    %328 = arith.subf %327, %316 : vector<8x32xf32>
    %cst_135 = arith.constant 0.000000e+00 : f32
    %329 = vector.broadcast %cst_135 : f32 to vector<8x32xf32>
    %330 = arith.cmpf ogt, %328, %329 : vector<8x32xf32>
    %331 = arith.extui %330 : vector<8x32xi1> to vector<8x32xi32>
    %332 = arith.sitofp %331 : vector<8x32xi32> to vector<8x32xf32>
    %c0_136 = arith.constant 0 : index
    %c0_137 = arith.constant 0 : index
    %333 = vector.load %arg5[%c0_136, %c0_137] : memref<32x32xf32, #tpu.memory_space<vmem>>, vector<32x32xf32>
    %cst_138 = arith.constant dense<0.000000e+00> : vector<8x32xf32>
    %334 = tpu.matmul %332, %333, %cst_138 {dimension_numbers = #tpu.dot_dimension_numbers<[1], [0], [0], [1], [0, 0, 1, 1], [], []>} : vector<8x32xf32>, vector<32x32xf32>, vector<8x32xf32> -> vector<8x32xf32>
    %335 = vector.broadcast %18 : vector<1x32xf32> to vector<8x32xf32>
    %336 = arith.mulf %335, %223 : vector<8x32xf32>
    %337 = vector.broadcast %20 : vector<1x32xf32> to vector<8x32xf32>
    %338 = arith.mulf %337, %243 : vector<8x32xf32>
    %339 = arith.addf %336, %338 : vector<8x32xf32>
    %cst_139 = arith.constant 1.800000e+00 : f32
    %340 = vector.broadcast %cst_139 : f32 to vector<8x32xf32>
    %341 = arith.mulf %340, %339 : vector<8x32xf32>
    %cst_140 = arith.constant 0.00999999977 : f32
    %342 = vector.broadcast %cst_140 : f32 to vector<8x32xf32>
    %343 = arith.addf %342, %341 : vector<8x32xf32>
    %344 = vector.broadcast %15 : vector<1x32xf32> to vector<8x32xf32>
    %345 = arith.mulf %238, %344 : vector<8x32xf32>
    %cst_141 = arith.constant 1.000000e+00 : f32
    %346 = vector.broadcast %cst_141 : f32 to vector<8x32xf32>
    %347 = arith.mulf %346, %334 : vector<8x32xf32>
    %348 = vector.broadcast %17 : vector<1x32xf32> to vector<8x32xf32>
    %349 = arith.mulf %348, %347 : vector<8x32xf32>
    %350 = arith.addf %345, %349 : vector<8x32xf32>
    %351 = arith.mulf %343, %243 : vector<8x32xf32>
    %cst_142 = arith.constant 1.000000e+00 : f32
    %352 = vector.broadcast %cst_142 : f32 to vector<8x32xf32>
    %353 = arith.mulf %351, %352 : vector<8x32xf32>
    %354 = arith.subf %350, %353 : vector<8x32xf32>
    %355 = arith.subf %354, %343 : vector<8x32xf32>
    %cst_143 = arith.constant 0.000000e+00 : f32
    %356 = vector.broadcast %cst_143 : f32 to vector<8x32xf32>
    %357 = arith.cmpf ogt, %355, %356 : vector<8x32xf32>
    %358 = arith.extui %357 : vector<8x32xi1> to vector<8x32xi32>
    %359 = arith.sitofp %358 : vector<8x32xi32> to vector<8x32xf32>
    %c0_144 = arith.constant 0 : index
    %c0_145 = arith.constant 0 : index
    %360 = vector.load %arg6[%c0_144, %c0_145] : memref<32x128xf32, #tpu.memory_space<vmem>>, vector<32x128xf32>
    %cst_146 = arith.constant dense<0.000000e+00> : vector<8x128xf32>
    %361 = tpu.matmul %359, %360, %cst_146 {dimension_numbers = #tpu.dot_dimension_numbers<[1], [0], [0], [1], [0, 0, 1, 1], [], []>} : vector<8x32xf32>, vector<32x128xf32>, vector<8x128xf32> -> vector<8x128xf32>
    %362 = vector.broadcast %24 : vector<1x128xf32> to vector<8x128xf32>
    %363 = arith.mulf %362, %250 : vector<8x128xf32>
    %364 = vector.broadcast %26 : vector<1x128xf32> to vector<8x128xf32>
    %365 = arith.mulf %364, %270 : vector<8x128xf32>
    %366 = arith.addf %363, %365 : vector<8x128xf32>
    %cst_147 = arith.constant 1.800000e+00 : f32
    %367 = vector.broadcast %cst_147 : f32 to vector<8x128xf32>
    %368 = arith.mulf %367, %366 : vector<8x128xf32>
    %cst_148 = arith.constant 0.00999999977 : f32
    %369 = vector.broadcast %cst_148 : f32 to vector<8x128xf32>
    %370 = arith.addf %369, %368 : vector<8x128xf32>
    %371 = vector.broadcast %21 : vector<1x128xf32> to vector<8x128xf32>
    %372 = arith.mulf %265, %371 : vector<8x128xf32>
    %cst_149 = arith.constant 1.000000e+00 : f32
    %373 = vector.broadcast %cst_149 : f32 to vector<8x128xf32>
    %374 = arith.mulf %373, %361 : vector<8x128xf32>
    %375 = vector.broadcast %23 : vector<1x128xf32> to vector<8x128xf32>
    %376 = arith.mulf %375, %374 : vector<8x128xf32>
    %377 = arith.addf %372, %376 : vector<8x128xf32>
    %378 = arith.mulf %370, %270 : vector<8x128xf32>
    %cst_150 = arith.constant 1.000000e+00 : f32
    %379 = vector.broadcast %cst_150 : f32 to vector<8x128xf32>
    %380 = arith.mulf %378, %379 : vector<8x128xf32>
    %381 = arith.subf %377, %380 : vector<8x128xf32>
    %382 = arith.subf %381, %370 : vector<8x128xf32>
    %cst_151 = arith.constant 0.000000e+00 : f32
    %383 = vector.broadcast %cst_151 : f32 to vector<8x128xf32>
    %384 = arith.cmpf ogt, %382, %383 : vector<8x128xf32>
    %385 = arith.extui %384 : vector<8x128xi1> to vector<8x128xi32>
    %386 = arith.sitofp %385 : vector<8x128xi32> to vector<8x128xf32>
    %387 = arith.addf %271, %386 : vector<8x128xf32>
    %c0_152 = arith.constant 0 : index
    %c24 = arith.constant 24 : index
    %c0_153 = arith.constant 0 : index
    %388 = vector.load %arg2[%c0_152, %c24, %c0_153] : memref<1x64x32xf32, #tpu.memory_space<vmem>>, vector<1x8x32xf32>
    %389 = vector.shape_cast %388 : vector<1x8x32xf32> to vector<8x32xf32>
    %390 = tpu.concatenate %303, %332 in 1 : vector<8x32xf32>, vector<8x32xf32> -> vector<8x64xf32>
    %c0_154 = arith.constant 0 : index
    %c0_155 = arith.constant 0 : index
    %391 = vector.load %arg3[%c0_154, %c0_155] : memref<64x64xf32, #tpu.memory_space<vmem>>, vector<64x64xf32>
    %cst_156 = arith.constant dense<0.000000e+00> : vector<8x64xf32>
    %392 = tpu.matmul %390, %391, %cst_156 {dimension_numbers = #tpu.dot_dimension_numbers<[1], [0], [0], [1], [0, 0, 1, 1], [], []>} : vector<8x64xf32>, vector<64x64xf32>, vector<8x64xf32> -> vector<8x64xf32>
    %393 = vector.extract_strided_slice %392 {offsets = [0, 0], sizes = [8, 32], strides = [1, 1]} : vector<8x64xf32> to vector<8x32xf32>
    %394 = arith.addf %389, %393 : vector<8x32xf32>
    %395 = vector.broadcast %6 : vector<1x32xf32> to vector<8x32xf32>
    %396 = arith.mulf %395, %283 : vector<8x32xf32>
    %397 = vector.broadcast %8 : vector<1x32xf32> to vector<8x32xf32>
    %398 = arith.mulf %397, %303 : vector<8x32xf32>
    %399 = arith.addf %396, %398 : vector<8x32xf32>
    %cst_157 = arith.constant 1.800000e+00 : f32
    %400 = vector.broadcast %cst_157 : f32 to vector<8x32xf32>
    %401 = arith.mulf %400, %399 : vector<8x32xf32>
    %cst_158 = arith.constant 0.00999999977 : f32
    %402 = vector.broadcast %cst_158 : f32 to vector<8x32xf32>
    %403 = arith.addf %402, %401 : vector<8x32xf32>
    %404 = vector.broadcast %3 : vector<1x32xf32> to vector<8x32xf32>
    %405 = arith.mulf %298, %404 : vector<8x32xf32>
    %cst_159 = arith.constant 1.000000e+00 : f32
    %406 = vector.broadcast %cst_159 : f32 to vector<8x32xf32>
    %407 = arith.mulf %406, %394 : vector<8x32xf32>
    %408 = vector.broadcast %5 : vector<1x32xf32> to vector<8x32xf32>
    %409 = arith.mulf %408, %407 : vector<8x32xf32>
    %410 = arith.addf %405, %409 : vector<8x32xf32>
    %411 = arith.mulf %403, %303 : vector<8x32xf32>
    %cst_160 = arith.constant 1.000000e+00 : f32
    %412 = vector.broadcast %cst_160 : f32 to vector<8x32xf32>
    %413 = arith.mulf %411, %412 : vector<8x32xf32>
    %414 = arith.subf %410, %413 : vector<8x32xf32>
    %415 = arith.subf %414, %403 : vector<8x32xf32>
    %cst_161 = arith.constant 0.000000e+00 : f32
    %416 = vector.broadcast %cst_161 : f32 to vector<8x32xf32>
    %417 = arith.cmpf ogt, %415, %416 : vector<8x32xf32>
    %418 = arith.extui %417 : vector<8x32xi1> to vector<8x32xi32>
    %419 = arith.sitofp %418 : vector<8x32xi32> to vector<8x32xf32>
    %c0_162 = arith.constant 0 : index
    %c0_163 = arith.constant 0 : index
    %420 = vector.load %arg4[%c0_162, %c0_163] : memref<32x32xf32, #tpu.memory_space<vmem>>, vector<32x32xf32>
    %cst_164 = arith.constant dense<0.000000e+00> : vector<8x32xf32>
    %421 = tpu.matmul %419, %420, %cst_164 {dimension_numbers = #tpu.dot_dimension_numbers<[1], [0], [0], [1], [0, 0, 1, 1], [], []>} : vector<8x32xf32>, vector<32x32xf32>, vector<8x32xf32> -> vector<8x32xf32>
    %422 = vector.extract_strided_slice %392 {offsets = [0, 32], sizes = [8, 32], strides = [1, 1]} : vector<8x64xf32> to vector<8x32xf32>
    %423 = arith.addf %421, %422 : vector<8x32xf32>
    %424 = vector.broadcast %12 : vector<1x32xf32> to vector<8x32xf32>
    %425 = arith.mulf %424, %312 : vector<8x32xf32>
    %426 = vector.broadcast %14 : vector<1x32xf32> to vector<8x32xf32>
    %427 = arith.mulf %426, %332 : vector<8x32xf32>
    %428 = arith.addf %425, %427 : vector<8x32xf32>
    %cst_165 = arith.constant 1.800000e+00 : f32
    %429 = vector.broadcast %cst_165 : f32 to vector<8x32xf32>
    %430 = arith.mulf %429, %428 : vector<8x32xf32>
    %cst_166 = arith.constant 0.00999999977 : f32
    %431 = vector.broadcast %cst_166 : f32 to vector<8x32xf32>
    %432 = arith.addf %431, %430 : vector<8x32xf32>
    %433 = vector.broadcast %9 : vector<1x32xf32> to vector<8x32xf32>
    %434 = arith.mulf %327, %433 : vector<8x32xf32>
    %cst_167 = arith.constant 1.000000e+00 : f32
    %435 = vector.broadcast %cst_167 : f32 to vector<8x32xf32>
    %436 = arith.mulf %435, %423 : vector<8x32xf32>
    %437 = vector.broadcast %11 : vector<1x32xf32> to vector<8x32xf32>
    %438 = arith.mulf %437, %436 : vector<8x32xf32>
    %439 = arith.addf %434, %438 : vector<8x32xf32>
    %440 = arith.mulf %432, %332 : vector<8x32xf32>
    %cst_168 = arith.constant 1.000000e+00 : f32
    %441 = vector.broadcast %cst_168 : f32 to vector<8x32xf32>
    %442 = arith.mulf %440, %441 : vector<8x32xf32>
    %443 = arith.subf %439, %442 : vector<8x32xf32>
    %444 = arith.subf %443, %432 : vector<8x32xf32>
    %cst_169 = arith.constant 0.000000e+00 : f32
    %445 = vector.broadcast %cst_169 : f32 to vector<8x32xf32>
    %446 = arith.cmpf ogt, %444, %445 : vector<8x32xf32>
    %447 = arith.extui %446 : vector<8x32xi1> to vector<8x32xi32>
    %448 = arith.sitofp %447 : vector<8x32xi32> to vector<8x32xf32>
    %c0_170 = arith.constant 0 : index
    %c0_171 = arith.constant 0 : index
    %449 = vector.load %arg5[%c0_170, %c0_171] : memref<32x32xf32, #tpu.memory_space<vmem>>, vector<32x32xf32>
    %cst_172 = arith.constant dense<0.000000e+00> : vector<8x32xf32>
    %450 = tpu.matmul %448, %449, %cst_172 {dimension_numbers = #tpu.dot_dimension_numbers<[1], [0], [0], [1], [0, 0, 1, 1], [], []>} : vector<8x32xf32>, vector<32x32xf32>, vector<8x32xf32> -> vector<8x32xf32>
    %451 = vector.broadcast %18 : vector<1x32xf32> to vector<8x32xf32>
    %452 = arith.mulf %451, %339 : vector<8x32xf32>
    %453 = vector.broadcast %20 : vector<1x32xf32> to vector<8x32xf32>
    %454 = arith.mulf %453, %359 : vector<8x32xf32>
    %455 = arith.addf %452, %454 : vector<8x32xf32>
    %cst_173 = arith.constant 1.800000e+00 : f32
    %456 = vector.broadcast %cst_173 : f32 to vector<8x32xf32>
    %457 = arith.mulf %456, %455 : vector<8x32xf32>
    %cst_174 = arith.constant 0.00999999977 : f32
    %458 = vector.broadcast %cst_174 : f32 to vector<8x32xf32>
    %459 = arith.addf %458, %457 : vector<8x32xf32>
    %460 = vector.broadcast %15 : vector<1x32xf32> to vector<8x32xf32>
    %461 = arith.mulf %354, %460 : vector<8x32xf32>
    %cst_175 = arith.constant 1.000000e+00 : f32
    %462 = vector.broadcast %cst_175 : f32 to vector<8x32xf32>
    %463 = arith.mulf %462, %450 : vector<8x32xf32>
    %464 = vector.broadcast %17 : vector<1x32xf32> to vector<8x32xf32>
    %465 = arith.mulf %464, %463 : vector<8x32xf32>
    %466 = arith.addf %461, %465 : vector<8x32xf32>
    %467 = arith.mulf %459, %359 : vector<8x32xf32>
    %cst_176 = arith.constant 1.000000e+00 : f32
    %468 = vector.broadcast %cst_176 : f32 to vector<8x32xf32>
    %469 = arith.mulf %467, %468 : vector<8x32xf32>
    %470 = arith.subf %466, %469 : vector<8x32xf32>
    %471 = arith.subf %470, %459 : vector<8x32xf32>
    %cst_177 = arith.constant 0.000000e+00 : f32
    %472 = vector.broadcast %cst_177 : f32 to vector<8x32xf32>
    %473 = arith.cmpf ogt, %471, %472 : vector<8x32xf32>
    %474 = arith.extui %473 : vector<8x32xi1> to vector<8x32xi32>
    %475 = arith.sitofp %474 : vector<8x32xi32> to vector<8x32xf32>
    %c0_178 = arith.constant 0 : index
    %c0_179 = arith.constant 0 : index
    %476 = vector.load %arg6[%c0_178, %c0_179] : memref<32x128xf32, #tpu.memory_space<vmem>>, vector<32x128xf32>
    %cst_180 = arith.constant dense<0.000000e+00> : vector<8x128xf32>
    %477 = tpu.matmul %475, %476, %cst_180 {dimension_numbers = #tpu.dot_dimension_numbers<[1], [0], [0], [1], [0, 0, 1, 1], [], []>} : vector<8x32xf32>, vector<32x128xf32>, vector<8x128xf32> -> vector<8x128xf32>
    %478 = vector.broadcast %24 : vector<1x128xf32> to vector<8x128xf32>
    %479 = arith.mulf %478, %366 : vector<8x128xf32>
    %480 = vector.broadcast %26 : vector<1x128xf32> to vector<8x128xf32>
    %481 = arith.mulf %480, %386 : vector<8x128xf32>
    %482 = arith.addf %479, %481 : vector<8x128xf32>
    %cst_181 = arith.constant 1.800000e+00 : f32
    %483 = vector.broadcast %cst_181 : f32 to vector<8x128xf32>
    %484 = arith.mulf %483, %482 : vector<8x128xf32>
    %cst_182 = arith.constant 0.00999999977 : f32
    %485 = vector.broadcast %cst_182 : f32 to vector<8x128xf32>
    %486 = arith.addf %485, %484 : vector<8x128xf32>
    %487 = vector.broadcast %21 : vector<1x128xf32> to vector<8x128xf32>
    %488 = arith.mulf %381, %487 : vector<8x128xf32>
    %cst_183 = arith.constant 1.000000e+00 : f32
    %489 = vector.broadcast %cst_183 : f32 to vector<8x128xf32>
    %490 = arith.mulf %489, %477 : vector<8x128xf32>
    %491 = vector.broadcast %23 : vector<1x128xf32> to vector<8x128xf32>
    %492 = arith.mulf %491, %490 : vector<8x128xf32>
    %493 = arith.addf %488, %492 : vector<8x128xf32>
    %494 = arith.mulf %486, %386 : vector<8x128xf32>
    %cst_184 = arith.constant 1.000000e+00 : f32
    %495 = vector.broadcast %cst_184 : f32 to vector<8x128xf32>
    %496 = arith.mulf %494, %495 : vector<8x128xf32>
    %497 = arith.subf %493, %496 : vector<8x128xf32>
    %498 = arith.subf %497, %486 : vector<8x128xf32>
    %cst_185 = arith.constant 0.000000e+00 : f32
    %499 = vector.broadcast %cst_185 : f32 to vector<8x128xf32>
    %500 = arith.cmpf ogt, %498, %499 : vector<8x128xf32>
    %501 = arith.extui %500 : vector<8x128xi1> to vector<8x128xi32>
    %502 = arith.sitofp %501 : vector<8x128xi32> to vector<8x128xf32>
    %503 = arith.addf %387, %502 : vector<8x128xf32>
    %c0_186 = arith.constant 0 : index
    %c32 = arith.constant 32 : index
    %c0_187 = arith.constant 0 : index
    %504 = vector.load %arg2[%c0_186, %c32, %c0_187] : memref<1x64x32xf32, #tpu.memory_space<vmem>>, vector<1x8x32xf32>
    %505 = vector.shape_cast %504 : vector<1x8x32xf32> to vector<8x32xf32>
    %506 = tpu.concatenate %419, %448 in 1 : vector<8x32xf32>, vector<8x32xf32> -> vector<8x64xf32>
    %c0_188 = arith.constant 0 : index
    %c0_189 = arith.constant 0 : index
    %507 = vector.load %arg3[%c0_188, %c0_189] : memref<64x64xf32, #tpu.memory_space<vmem>>, vector<64x64xf32>
    %cst_190 = arith.constant dense<0.000000e+00> : vector<8x64xf32>
    %508 = tpu.matmul %506, %507, %cst_190 {dimension_numbers = #tpu.dot_dimension_numbers<[1], [0], [0], [1], [0, 0, 1, 1], [], []>} : vector<8x64xf32>, vector<64x64xf32>, vector<8x64xf32> -> vector<8x64xf32>
    %509 = vector.extract_strided_slice %508 {offsets = [0, 0], sizes = [8, 32], strides = [1, 1]} : vector<8x64xf32> to vector<8x32xf32>
    %510 = arith.addf %505, %509 : vector<8x32xf32>
    %511 = vector.broadcast %6 : vector<1x32xf32> to vector<8x32xf32>
    %512 = arith.mulf %511, %399 : vector<8x32xf32>
    %513 = vector.broadcast %8 : vector<1x32xf32> to vector<8x32xf32>
    %514 = arith.mulf %513, %419 : vector<8x32xf32>
    %515 = arith.addf %512, %514 : vector<8x32xf32>
    %cst_191 = arith.constant 1.800000e+00 : f32
    %516 = vector.broadcast %cst_191 : f32 to vector<8x32xf32>
    %517 = arith.mulf %516, %515 : vector<8x32xf32>
    %cst_192 = arith.constant 0.00999999977 : f32
    %518 = vector.broadcast %cst_192 : f32 to vector<8x32xf32>
    %519 = arith.addf %518, %517 : vector<8x32xf32>
    %520 = vector.broadcast %3 : vector<1x32xf32> to vector<8x32xf32>
    %521 = arith.mulf %414, %520 : vector<8x32xf32>
    %cst_193 = arith.constant 1.000000e+00 : f32
    %522 = vector.broadcast %cst_193 : f32 to vector<8x32xf32>
    %523 = arith.mulf %522, %510 : vector<8x32xf32>
    %524 = vector.broadcast %5 : vector<1x32xf32> to vector<8x32xf32>
    %525 = arith.mulf %524, %523 : vector<8x32xf32>
    %526 = arith.addf %521, %525 : vector<8x32xf32>
    %527 = arith.mulf %519, %419 : vector<8x32xf32>
    %cst_194 = arith.constant 1.000000e+00 : f32
    %528 = vector.broadcast %cst_194 : f32 to vector<8x32xf32>
    %529 = arith.mulf %527, %528 : vector<8x32xf32>
    %530 = arith.subf %526, %529 : vector<8x32xf32>
    %531 = arith.subf %530, %519 : vector<8x32xf32>
    %cst_195 = arith.constant 0.000000e+00 : f32
    %532 = vector.broadcast %cst_195 : f32 to vector<8x32xf32>
    %533 = arith.cmpf ogt, %531, %532 : vector<8x32xf32>
    %534 = arith.extui %533 : vector<8x32xi1> to vector<8x32xi32>
    %535 = arith.sitofp %534 : vector<8x32xi32> to vector<8x32xf32>
    %c0_196 = arith.constant 0 : index
    %c0_197 = arith.constant 0 : index
    %536 = vector.load %arg4[%c0_196, %c0_197] : memref<32x32xf32, #tpu.memory_space<vmem>>, vector<32x32xf32>
    %cst_198 = arith.constant dense<0.000000e+00> : vector<8x32xf32>
    %537 = tpu.matmul %535, %536, %cst_198 {dimension_numbers = #tpu.dot_dimension_numbers<[1], [0], [0], [1], [0, 0, 1, 1], [], []>} : vector<8x32xf32>, vector<32x32xf32>, vector<8x32xf32> -> vector<8x32xf32>
    %538 = vector.extract_strided_slice %508 {offsets = [0, 32], sizes = [8, 32], strides = [1, 1]} : vector<8x64xf32> to vector<8x32xf32>
    %539 = arith.addf %537, %538 : vector<8x32xf32>
    %540 = vector.broadcast %12 : vector<1x32xf32> to vector<8x32xf32>
    %541 = arith.mulf %540, %428 : vector<8x32xf32>
    %542 = vector.broadcast %14 : vector<1x32xf32> to vector<8x32xf32>
    %543 = arith.mulf %542, %448 : vector<8x32xf32>
    %544 = arith.addf %541, %543 : vector<8x32xf32>
    %cst_199 = arith.constant 1.800000e+00 : f32
    %545 = vector.broadcast %cst_199 : f32 to vector<8x32xf32>
    %546 = arith.mulf %545, %544 : vector<8x32xf32>
    %cst_200 = arith.constant 0.00999999977 : f32
    %547 = vector.broadcast %cst_200 : f32 to vector<8x32xf32>
    %548 = arith.addf %547, %546 : vector<8x32xf32>
    %549 = vector.broadcast %9 : vector<1x32xf32> to vector<8x32xf32>
    %550 = arith.mulf %443, %549 : vector<8x32xf32>
    %cst_201 = arith.constant 1.000000e+00 : f32
    %551 = vector.broadcast %cst_201 : f32 to vector<8x32xf32>
    %552 = arith.mulf %551, %539 : vector<8x32xf32>
    %553 = vector.broadcast %11 : vector<1x32xf32> to vector<8x32xf32>
    %554 = arith.mulf %553, %552 : vector<8x32xf32>
    %555 = arith.addf %550, %554 : vector<8x32xf32>
    %556 = arith.mulf %548, %448 : vector<8x32xf32>
    %cst_202 = arith.constant 1.000000e+00 : f32
    %557 = vector.broadcast %cst_202 : f32 to vector<8x32xf32>
    %558 = arith.mulf %556, %557 : vector<8x32xf32>
    %559 = arith.subf %555, %558 : vector<8x32xf32>
    %560 = arith.subf %559, %548 : vector<8x32xf32>
    %cst_203 = arith.constant 0.000000e+00 : f32
    %561 = vector.broadcast %cst_203 : f32 to vector<8x32xf32>
    %562 = arith.cmpf ogt, %560, %561 : vector<8x32xf32>
    %563 = arith.extui %562 : vector<8x32xi1> to vector<8x32xi32>
    %564 = arith.sitofp %563 : vector<8x32xi32> to vector<8x32xf32>
    %c0_204 = arith.constant 0 : index
    %c0_205 = arith.constant 0 : index
    %565 = vector.load %arg5[%c0_204, %c0_205] : memref<32x32xf32, #tpu.memory_space<vmem>>, vector<32x32xf32>
    %cst_206 = arith.constant dense<0.000000e+00> : vector<8x32xf32>
    %566 = tpu.matmul %564, %565, %cst_206 {dimension_numbers = #tpu.dot_dimension_numbers<[1], [0], [0], [1], [0, 0, 1, 1], [], []>} : vector<8x32xf32>, vector<32x32xf32>, vector<8x32xf32> -> vector<8x32xf32>
    %567 = vector.broadcast %18 : vector<1x32xf32> to vector<8x32xf32>
    %568 = arith.mulf %567, %455 : vector<8x32xf32>
    %569 = vector.broadcast %20 : vector<1x32xf32> to vector<8x32xf32>
    %570 = arith.mulf %569, %475 : vector<8x32xf32>
    %571 = arith.addf %568, %570 : vector<8x32xf32>
    %cst_207 = arith.constant 1.800000e+00 : f32
    %572 = vector.broadcast %cst_207 : f32 to vector<8x32xf32>
    %573 = arith.mulf %572, %571 : vector<8x32xf32>
    %cst_208 = arith.constant 0.00999999977 : f32
    %574 = vector.broadcast %cst_208 : f32 to vector<8x32xf32>
    %575 = arith.addf %574, %573 : vector<8x32xf32>
    %576 = vector.broadcast %15 : vector<1x32xf32> to vector<8x32xf32>
    %577 = arith.mulf %470, %576 : vector<8x32xf32>
    %cst_209 = arith.constant 1.000000e+00 : f32
    %578 = vector.broadcast %cst_209 : f32 to vector<8x32xf32>
    %579 = arith.mulf %578, %566 : vector<8x32xf32>
    %580 = vector.broadcast %17 : vector<1x32xf32> to vector<8x32xf32>
    %581 = arith.mulf %580, %579 : vector<8x32xf32>
    %582 = arith.addf %577, %581 : vector<8x32xf32>
    %583 = arith.mulf %575, %475 : vector<8x32xf32>
    %cst_210 = arith.constant 1.000000e+00 : f32
    %584 = vector.broadcast %cst_210 : f32 to vector<8x32xf32>
    %585 = arith.mulf %583, %584 : vector<8x32xf32>
    %586 = arith.subf %582, %585 : vector<8x32xf32>
    %587 = arith.subf %586, %575 : vector<8x32xf32>
    %cst_211 = arith.constant 0.000000e+00 : f32
    %588 = vector.broadcast %cst_211 : f32 to vector<8x32xf32>
    %589 = arith.cmpf ogt, %587, %588 : vector<8x32xf32>
    %590 = arith.extui %589 : vector<8x32xi1> to vector<8x32xi32>
    %591 = arith.sitofp %590 : vector<8x32xi32> to vector<8x32xf32>
    %c0_212 = arith.constant 0 : index
    %c0_213 = arith.constant 0 : index
    %592 = vector.load %arg6[%c0_212, %c0_213] : memref<32x128xf32, #tpu.memory_space<vmem>>, vector<32x128xf32>
    %cst_214 = arith.constant dense<0.000000e+00> : vector<8x128xf32>
    %593 = tpu.matmul %591, %592, %cst_214 {dimension_numbers = #tpu.dot_dimension_numbers<[1], [0], [0], [1], [0, 0, 1, 1], [], []>} : vector<8x32xf32>, vector<32x128xf32>, vector<8x128xf32> -> vector<8x128xf32>
    %594 = vector.broadcast %24 : vector<1x128xf32> to vector<8x128xf32>
    %595 = arith.mulf %594, %482 : vector<8x128xf32>
    %596 = vector.broadcast %26 : vector<1x128xf32> to vector<8x128xf32>
    %597 = arith.mulf %596, %502 : vector<8x128xf32>
    %598 = arith.addf %595, %597 : vector<8x128xf32>
    %cst_215 = arith.constant 1.800000e+00 : f32
    %599 = vector.broadcast %cst_215 : f32 to vector<8x128xf32>
    %600 = arith.mulf %599, %598 : vector<8x128xf32>
    %cst_216 = arith.constant 0.00999999977 : f32
    %601 = vector.broadcast %cst_216 : f32 to vector<8x128xf32>
    %602 = arith.addf %601, %600 : vector<8x128xf32>
    %603 = vector.broadcast %21 : vector<1x128xf32> to vector<8x128xf32>
    %604 = arith.mulf %497, %603 : vector<8x128xf32>
    %cst_217 = arith.constant 1.000000e+00 : f32
    %605 = vector.broadcast %cst_217 : f32 to vector<8x128xf32>
    %606 = arith.mulf %605, %593 : vector<8x128xf32>
    %607 = vector.broadcast %23 : vector<1x128xf32> to vector<8x128xf32>
    %608 = arith.mulf %607, %606 : vector<8x128xf32>
    %609 = arith.addf %604, %608 : vector<8x128xf32>
    %610 = arith.mulf %602, %502 : vector<8x128xf32>
    %cst_218 = arith.constant 1.000000e+00 : f32
    %611 = vector.broadcast %cst_218 : f32 to vector<8x128xf32>
    %612 = arith.mulf %610, %611 : vector<8x128xf32>
    %613 = arith.subf %609, %612 : vector<8x128xf32>
    %614 = arith.subf %613, %602 : vector<8x128xf32>
    %cst_219 = arith.constant 0.000000e+00 : f32
    %615 = vector.broadcast %cst_219 : f32 to vector<8x128xf32>
    %616 = arith.cmpf ogt, %614, %615 : vector<8x128xf32>
    %617 = arith.extui %616 : vector<8x128xi1> to vector<8x128xi32>
    %618 = arith.sitofp %617 : vector<8x128xi32> to vector<8x128xf32>
    %619 = arith.addf %503, %618 : vector<8x128xf32>
    %c0_220 = arith.constant 0 : index
    %c40 = arith.constant 40 : index
    %c0_221 = arith.constant 0 : index
    %620 = vector.load %arg2[%c0_220, %c40, %c0_221] : memref<1x64x32xf32, #tpu.memory_space<vmem>>, vector<1x8x32xf32>
    %621 = vector.shape_cast %620 : vector<1x8x32xf32> to vector<8x32xf32>
    %622 = tpu.concatenate %535, %564 in 1 : vector<8x32xf32>, vector<8x32xf32> -> vector<8x64xf32>
    %c0_222 = arith.constant 0 : index
    %c0_223 = arith.constant 0 : index
    %623 = vector.load %arg3[%c0_222, %c0_223] : memref<64x64xf32, #tpu.memory_space<vmem>>, vector<64x64xf32>
    %cst_224 = arith.constant dense<0.000000e+00> : vector<8x64xf32>
    %624 = tpu.matmul %622, %623, %cst_224 {dimension_numbers = #tpu.dot_dimension_numbers<[1], [0], [0], [1], [0, 0, 1, 1], [], []>} : vector<8x64xf32>, vector<64x64xf32>, vector<8x64xf32> -> vector<8x64xf32>
    %625 = vector.extract_strided_slice %624 {offsets = [0, 0], sizes = [8, 32], strides = [1, 1]} : vector<8x64xf32> to vector<8x32xf32>
    %626 = arith.addf %621, %625 : vector<8x32xf32>
    %627 = vector.broadcast %6 : vector<1x32xf32> to vector<8x32xf32>
    %628 = arith.mulf %627, %515 : vector<8x32xf32>
    %629 = vector.broadcast %8 : vector<1x32xf32> to vector<8x32xf32>
    %630 = arith.mulf %629, %535 : vector<8x32xf32>
    %631 = arith.addf %628, %630 : vector<8x32xf32>
    %cst_225 = arith.constant 1.800000e+00 : f32
    %632 = vector.broadcast %cst_225 : f32 to vector<8x32xf32>
    %633 = arith.mulf %632, %631 : vector<8x32xf32>
    %cst_226 = arith.constant 0.00999999977 : f32
    %634 = vector.broadcast %cst_226 : f32 to vector<8x32xf32>
    %635 = arith.addf %634, %633 : vector<8x32xf32>
    %636 = vector.broadcast %3 : vector<1x32xf32> to vector<8x32xf32>
    %637 = arith.mulf %530, %636 : vector<8x32xf32>
    %cst_227 = arith.constant 1.000000e+00 : f32
    %638 = vector.broadcast %cst_227 : f32 to vector<8x32xf32>
    %639 = arith.mulf %638, %626 : vector<8x32xf32>
    %640 = vector.broadcast %5 : vector<1x32xf32> to vector<8x32xf32>
    %641 = arith.mulf %640, %639 : vector<8x32xf32>
    %642 = arith.addf %637, %641 : vector<8x32xf32>
    %643 = arith.mulf %635, %535 : vector<8x32xf32>
    %cst_228 = arith.constant 1.000000e+00 : f32
    %644 = vector.broadcast %cst_228 : f32 to vector<8x32xf32>
    %645 = arith.mulf %643, %644 : vector<8x32xf32>
    %646 = arith.subf %642, %645 : vector<8x32xf32>
    %647 = arith.subf %646, %635 : vector<8x32xf32>
    %cst_229 = arith.constant 0.000000e+00 : f32
    %648 = vector.broadcast %cst_229 : f32 to vector<8x32xf32>
    %649 = arith.cmpf ogt, %647, %648 : vector<8x32xf32>
    %650 = arith.extui %649 : vector<8x32xi1> to vector<8x32xi32>
    %651 = arith.sitofp %650 : vector<8x32xi32> to vector<8x32xf32>
    %c0_230 = arith.constant 0 : index
    %c0_231 = arith.constant 0 : index
    %652 = vector.load %arg4[%c0_230, %c0_231] : memref<32x32xf32, #tpu.memory_space<vmem>>, vector<32x32xf32>
    %cst_232 = arith.constant dense<0.000000e+00> : vector<8x32xf32>
    %653 = tpu.matmul %651, %652, %cst_232 {dimension_numbers = #tpu.dot_dimension_numbers<[1], [0], [0], [1], [0, 0, 1, 1], [], []>} : vector<8x32xf32>, vector<32x32xf32>, vector<8x32xf32> -> vector<8x32xf32>
    %654 = vector.extract_strided_slice %624 {offsets = [0, 32], sizes = [8, 32], strides = [1, 1]} : vector<8x64xf32> to vector<8x32xf32>
    %655 = arith.addf %653, %654 : vector<8x32xf32>
    %656 = vector.broadcast %12 : vector<1x32xf32> to vector<8x32xf32>
    %657 = arith.mulf %656, %544 : vector<8x32xf32>
    %658 = vector.broadcast %14 : vector<1x32xf32> to vector<8x32xf32>
    %659 = arith.mulf %658, %564 : vector<8x32xf32>
    %660 = arith.addf %657, %659 : vector<8x32xf32>
    %cst_233 = arith.constant 1.800000e+00 : f32
    %661 = vector.broadcast %cst_233 : f32 to vector<8x32xf32>
    %662 = arith.mulf %661, %660 : vector<8x32xf32>
    %cst_234 = arith.constant 0.00999999977 : f32
    %663 = vector.broadcast %cst_234 : f32 to vector<8x32xf32>
    %664 = arith.addf %663, %662 : vector<8x32xf32>
    %665 = vector.broadcast %9 : vector<1x32xf32> to vector<8x32xf32>
    %666 = arith.mulf %559, %665 : vector<8x32xf32>
    %cst_235 = arith.constant 1.000000e+00 : f32
    %667 = vector.broadcast %cst_235 : f32 to vector<8x32xf32>
    %668 = arith.mulf %667, %655 : vector<8x32xf32>
    %669 = vector.broadcast %11 : vector<1x32xf32> to vector<8x32xf32>
    %670 = arith.mulf %669, %668 : vector<8x32xf32>
    %671 = arith.addf %666, %670 : vector<8x32xf32>
    %672 = arith.mulf %664, %564 : vector<8x32xf32>
    %cst_236 = arith.constant 1.000000e+00 : f32
    %673 = vector.broadcast %cst_236 : f32 to vector<8x32xf32>
    %674 = arith.mulf %672, %673 : vector<8x32xf32>
    %675 = arith.subf %671, %674 : vector<8x32xf32>
    %676 = arith.subf %675, %664 : vector<8x32xf32>
    %cst_237 = arith.constant 0.000000e+00 : f32
    %677 = vector.broadcast %cst_237 : f32 to vector<8x32xf32>
    %678 = arith.cmpf ogt, %676, %677 : vector<8x32xf32>
    %679 = arith.extui %678 : vector<8x32xi1> to vector<8x32xi32>
    %680 = arith.sitofp %679 : vector<8x32xi32> to vector<8x32xf32>
    %c0_238 = arith.constant 0 : index
    %c0_239 = arith.constant 0 : index
    %681 = vector.load %arg5[%c0_238, %c0_239] : memref<32x32xf32, #tpu.memory_space<vmem>>, vector<32x32xf32>
    %cst_240 = arith.constant dense<0.000000e+00> : vector<8x32xf32>
    %682 = tpu.matmul %680, %681, %cst_240 {dimension_numbers = #tpu.dot_dimension_numbers<[1], [0], [0], [1], [0, 0, 1, 1], [], []>} : vector<8x32xf32>, vector<32x32xf32>, vector<8x32xf32> -> vector<8x32xf32>
    %683 = vector.broadcast %18 : vector<1x32xf32> to vector<8x32xf32>
    %684 = arith.mulf %683, %571 : vector<8x32xf32>
    %685 = vector.broadcast %20 : vector<1x32xf32> to vector<8x32xf32>
    %686 = arith.mulf %685, %591 : vector<8x32xf32>
    %687 = arith.addf %684, %686 : vector<8x32xf32>
    %cst_241 = arith.constant 1.800000e+00 : f32
    %688 = vector.broadcast %cst_241 : f32 to vector<8x32xf32>
    %689 = arith.mulf %688, %687 : vector<8x32xf32>
    %cst_242 = arith.constant 0.00999999977 : f32
    %690 = vector.broadcast %cst_242 : f32 to vector<8x32xf32>
    %691 = arith.addf %690, %689 : vector<8x32xf32>
    %692 = vector.broadcast %15 : vector<1x32xf32> to vector<8x32xf32>
    %693 = arith.mulf %586, %692 : vector<8x32xf32>
    %cst_243 = arith.constant 1.000000e+00 : f32
    %694 = vector.broadcast %cst_243 : f32 to vector<8x32xf32>
    %695 = arith.mulf %694, %682 : vector<8x32xf32>
    %696 = vector.broadcast %17 : vector<1x32xf32> to vector<8x32xf32>
    %697 = arith.mulf %696, %695 : vector<8x32xf32>
    %698 = arith.addf %693, %697 : vector<8x32xf32>
    %699 = arith.mulf %691, %591 : vector<8x32xf32>
    %cst_244 = arith.constant 1.000000e+00 : f32
    %700 = vector.broadcast %cst_244 : f32 to vector<8x32xf32>
    %701 = arith.mulf %699, %700 : vector<8x32xf32>
    %702 = arith.subf %698, %701 : vector<8x32xf32>
    %703 = arith.subf %702, %691 : vector<8x32xf32>
    %cst_245 = arith.constant 0.000000e+00 : f32
    %704 = vector.broadcast %cst_245 : f32 to vector<8x32xf32>
    %705 = arith.cmpf ogt, %703, %704 : vector<8x32xf32>
    %706 = arith.extui %705 : vector<8x32xi1> to vector<8x32xi32>
    %707 = arith.sitofp %706 : vector<8x32xi32> to vector<8x32xf32>
    %c0_246 = arith.constant 0 : index
    %c0_247 = arith.constant 0 : index
    %708 = vector.load %arg6[%c0_246, %c0_247] : memref<32x128xf32, #tpu.memory_space<vmem>>, vector<32x128xf32>
    %cst_248 = arith.constant dense<0.000000e+00> : vector<8x128xf32>
    %709 = tpu.matmul %707, %708, %cst_248 {dimension_numbers = #tpu.dot_dimension_numbers<[1], [0], [0], [1], [0, 0, 1, 1], [], []>} : vector<8x32xf32>, vector<32x128xf32>, vector<8x128xf32> -> vector<8x128xf32>
    %710 = vector.broadcast %24 : vector<1x128xf32> to vector<8x128xf32>
    %711 = arith.mulf %710, %598 : vector<8x128xf32>
    %712 = vector.broadcast %26 : vector<1x128xf32> to vector<8x128xf32>
    %713 = arith.mulf %712, %618 : vector<8x128xf32>
    %714 = arith.addf %711, %713 : vector<8x128xf32>
    %cst_249 = arith.constant 1.800000e+00 : f32
    %715 = vector.broadcast %cst_249 : f32 to vector<8x128xf32>
    %716 = arith.mulf %715, %714 : vector<8x128xf32>
    %cst_250 = arith.constant 0.00999999977 : f32
    %717 = vector.broadcast %cst_250 : f32 to vector<8x128xf32>
    %718 = arith.addf %717, %716 : vector<8x128xf32>
    %719 = vector.broadcast %21 : vector<1x128xf32> to vector<8x128xf32>
    %720 = arith.mulf %613, %719 : vector<8x128xf32>
    %cst_251 = arith.constant 1.000000e+00 : f32
    %721 = vector.broadcast %cst_251 : f32 to vector<8x128xf32>
    %722 = arith.mulf %721, %709 : vector<8x128xf32>
    %723 = vector.broadcast %23 : vector<1x128xf32> to vector<8x128xf32>
    %724 = arith.mulf %723, %722 : vector<8x128xf32>
    %725 = arith.addf %720, %724 : vector<8x128xf32>
    %726 = arith.mulf %718, %618 : vector<8x128xf32>
    %cst_252 = arith.constant 1.000000e+00 : f32
    %727 = vector.broadcast %cst_252 : f32 to vector<8x128xf32>
    %728 = arith.mulf %726, %727 : vector<8x128xf32>
    %729 = arith.subf %725, %728 : vector<8x128xf32>
    %730 = arith.subf %729, %718 : vector<8x128xf32>
    %cst_253 = arith.constant 0.000000e+00 : f32
    %731 = vector.broadcast %cst_253 : f32 to vector<8x128xf32>
    %732 = arith.cmpf ogt, %730, %731 : vector<8x128xf32>
    %733 = arith.extui %732 : vector<8x128xi1> to vector<8x128xi32>
    %734 = arith.sitofp %733 : vector<8x128xi32> to vector<8x128xf32>
    %735 = arith.addf %619, %734 : vector<8x128xf32>
    %c0_254 = arith.constant 0 : index
    %c48 = arith.constant 48 : index
    %c0_255 = arith.constant 0 : index
    %736 = vector.load %arg2[%c0_254, %c48, %c0_255] : memref<1x64x32xf32, #tpu.memory_space<vmem>>, vector<1x8x32xf32>
    %737 = vector.shape_cast %736 : vector<1x8x32xf32> to vector<8x32xf32>
    %738 = tpu.concatenate %651, %680 in 1 : vector<8x32xf32>, vector<8x32xf32> -> vector<8x64xf32>
    %c0_256 = arith.constant 0 : index
    %c0_257 = arith.constant 0 : index
    %739 = vector.load %arg3[%c0_256, %c0_257] : memref<64x64xf32, #tpu.memory_space<vmem>>, vector<64x64xf32>
    %cst_258 = arith.constant dense<0.000000e+00> : vector<8x64xf32>
    %740 = tpu.matmul %738, %739, %cst_258 {dimension_numbers = #tpu.dot_dimension_numbers<[1], [0], [0], [1], [0, 0, 1, 1], [], []>} : vector<8x64xf32>, vector<64x64xf32>, vector<8x64xf32> -> vector<8x64xf32>
    %741 = vector.extract_strided_slice %740 {offsets = [0, 0], sizes = [8, 32], strides = [1, 1]} : vector<8x64xf32> to vector<8x32xf32>
    %742 = arith.addf %737, %741 : vector<8x32xf32>
    %743 = vector.broadcast %6 : vector<1x32xf32> to vector<8x32xf32>
    %744 = arith.mulf %743, %631 : vector<8x32xf32>
    %745 = vector.broadcast %8 : vector<1x32xf32> to vector<8x32xf32>
    %746 = arith.mulf %745, %651 : vector<8x32xf32>
    %747 = arith.addf %744, %746 : vector<8x32xf32>
    %cst_259 = arith.constant 1.800000e+00 : f32
    %748 = vector.broadcast %cst_259 : f32 to vector<8x32xf32>
    %749 = arith.mulf %748, %747 : vector<8x32xf32>
    %cst_260 = arith.constant 0.00999999977 : f32
    %750 = vector.broadcast %cst_260 : f32 to vector<8x32xf32>
    %751 = arith.addf %750, %749 : vector<8x32xf32>
    %752 = vector.broadcast %3 : vector<1x32xf32> to vector<8x32xf32>
    %753 = arith.mulf %646, %752 : vector<8x32xf32>
    %cst_261 = arith.constant 1.000000e+00 : f32
    %754 = vector.broadcast %cst_261 : f32 to vector<8x32xf32>
    %755 = arith.mulf %754, %742 : vector<8x32xf32>
    %756 = vector.broadcast %5 : vector<1x32xf32> to vector<8x32xf32>
    %757 = arith.mulf %756, %755 : vector<8x32xf32>
    %758 = arith.addf %753, %757 : vector<8x32xf32>
    %759 = arith.mulf %751, %651 : vector<8x32xf32>
    %cst_262 = arith.constant 1.000000e+00 : f32
    %760 = vector.broadcast %cst_262 : f32 to vector<8x32xf32>
    %761 = arith.mulf %759, %760 : vector<8x32xf32>
    %762 = arith.subf %758, %761 : vector<8x32xf32>
    %763 = arith.subf %762, %751 : vector<8x32xf32>
    %cst_263 = arith.constant 0.000000e+00 : f32
    %764 = vector.broadcast %cst_263 : f32 to vector<8x32xf32>
    %765 = arith.cmpf ogt, %763, %764 : vector<8x32xf32>
    %766 = arith.extui %765 : vector<8x32xi1> to vector<8x32xi32>
    %767 = arith.sitofp %766 : vector<8x32xi32> to vector<8x32xf32>
    %c0_264 = arith.constant 0 : index
    %c0_265 = arith.constant 0 : index
    %768 = vector.load %arg4[%c0_264, %c0_265] : memref<32x32xf32, #tpu.memory_space<vmem>>, vector<32x32xf32>
    %cst_266 = arith.constant dense<0.000000e+00> : vector<8x32xf32>
    %769 = tpu.matmul %767, %768, %cst_266 {dimension_numbers = #tpu.dot_dimension_numbers<[1], [0], [0], [1], [0, 0, 1, 1], [], []>} : vector<8x32xf32>, vector<32x32xf32>, vector<8x32xf32> -> vector<8x32xf32>
    %770 = vector.extract_strided_slice %740 {offsets = [0, 32], sizes = [8, 32], strides = [1, 1]} : vector<8x64xf32> to vector<8x32xf32>
    %771 = arith.addf %769, %770 : vector<8x32xf32>
    %772 = vector.broadcast %12 : vector<1x32xf32> to vector<8x32xf32>
    %773 = arith.mulf %772, %660 : vector<8x32xf32>
    %774 = vector.broadcast %14 : vector<1x32xf32> to vector<8x32xf32>
    %775 = arith.mulf %774, %680 : vector<8x32xf32>
    %776 = arith.addf %773, %775 : vector<8x32xf32>
    %cst_267 = arith.constant 1.800000e+00 : f32
    %777 = vector.broadcast %cst_267 : f32 to vector<8x32xf32>
    %778 = arith.mulf %777, %776 : vector<8x32xf32>
    %cst_268 = arith.constant 0.00999999977 : f32
    %779 = vector.broadcast %cst_268 : f32 to vector<8x32xf32>
    %780 = arith.addf %779, %778 : vector<8x32xf32>
    %781 = vector.broadcast %9 : vector<1x32xf32> to vector<8x32xf32>
    %782 = arith.mulf %675, %781 : vector<8x32xf32>
    %cst_269 = arith.constant 1.000000e+00 : f32
    %783 = vector.broadcast %cst_269 : f32 to vector<8x32xf32>
    %784 = arith.mulf %783, %771 : vector<8x32xf32>
    %785 = vector.broadcast %11 : vector<1x32xf32> to vector<8x32xf32>
    %786 = arith.mulf %785, %784 : vector<8x32xf32>
    %787 = arith.addf %782, %786 : vector<8x32xf32>
    %788 = arith.mulf %780, %680 : vector<8x32xf32>
    %cst_270 = arith.constant 1.000000e+00 : f32
    %789 = vector.broadcast %cst_270 : f32 to vector<8x32xf32>
    %790 = arith.mulf %788, %789 : vector<8x32xf32>
    %791 = arith.subf %787, %790 : vector<8x32xf32>
    %792 = arith.subf %791, %780 : vector<8x32xf32>
    %cst_271 = arith.constant 0.000000e+00 : f32
    %793 = vector.broadcast %cst_271 : f32 to vector<8x32xf32>
    %794 = arith.cmpf ogt, %792, %793 : vector<8x32xf32>
    %795 = arith.extui %794 : vector<8x32xi1> to vector<8x32xi32>
    %796 = arith.sitofp %795 : vector<8x32xi32> to vector<8x32xf32>
    %c0_272 = arith.constant 0 : index
    %c0_273 = arith.constant 0 : index
    %797 = vector.load %arg5[%c0_272, %c0_273] : memref<32x32xf32, #tpu.memory_space<vmem>>, vector<32x32xf32>
    %cst_274 = arith.constant dense<0.000000e+00> : vector<8x32xf32>
    %798 = tpu.matmul %796, %797, %cst_274 {dimension_numbers = #tpu.dot_dimension_numbers<[1], [0], [0], [1], [0, 0, 1, 1], [], []>} : vector<8x32xf32>, vector<32x32xf32>, vector<8x32xf32> -> vector<8x32xf32>
    %799 = vector.broadcast %18 : vector<1x32xf32> to vector<8x32xf32>
    %800 = arith.mulf %799, %687 : vector<8x32xf32>
    %801 = vector.broadcast %20 : vector<1x32xf32> to vector<8x32xf32>
    %802 = arith.mulf %801, %707 : vector<8x32xf32>
    %803 = arith.addf %800, %802 : vector<8x32xf32>
    %cst_275 = arith.constant 1.800000e+00 : f32
    %804 = vector.broadcast %cst_275 : f32 to vector<8x32xf32>
    %805 = arith.mulf %804, %803 : vector<8x32xf32>
    %cst_276 = arith.constant 0.00999999977 : f32
    %806 = vector.broadcast %cst_276 : f32 to vector<8x32xf32>
    %807 = arith.addf %806, %805 : vector<8x32xf32>
    %808 = vector.broadcast %15 : vector<1x32xf32> to vector<8x32xf32>
    %809 = arith.mulf %702, %808 : vector<8x32xf32>
    %cst_277 = arith.constant 1.000000e+00 : f32
    %810 = vector.broadcast %cst_277 : f32 to vector<8x32xf32>
    %811 = arith.mulf %810, %798 : vector<8x32xf32>
    %812 = vector.broadcast %17 : vector<1x32xf32> to vector<8x32xf32>
    %813 = arith.mulf %812, %811 : vector<8x32xf32>
    %814 = arith.addf %809, %813 : vector<8x32xf32>
    %815 = arith.mulf %807, %707 : vector<8x32xf32>
    %cst_278 = arith.constant 1.000000e+00 : f32
    %816 = vector.broadcast %cst_278 : f32 to vector<8x32xf32>
    %817 = arith.mulf %815, %816 : vector<8x32xf32>
    %818 = arith.subf %814, %817 : vector<8x32xf32>
    %819 = arith.subf %818, %807 : vector<8x32xf32>
    %cst_279 = arith.constant 0.000000e+00 : f32
    %820 = vector.broadcast %cst_279 : f32 to vector<8x32xf32>
    %821 = arith.cmpf ogt, %819, %820 : vector<8x32xf32>
    %822 = arith.extui %821 : vector<8x32xi1> to vector<8x32xi32>
    %823 = arith.sitofp %822 : vector<8x32xi32> to vector<8x32xf32>
    %c0_280 = arith.constant 0 : index
    %c0_281 = arith.constant 0 : index
    %824 = vector.load %arg6[%c0_280, %c0_281] : memref<32x128xf32, #tpu.memory_space<vmem>>, vector<32x128xf32>
    %cst_282 = arith.constant dense<0.000000e+00> : vector<8x128xf32>
    %825 = tpu.matmul %823, %824, %cst_282 {dimension_numbers = #tpu.dot_dimension_numbers<[1], [0], [0], [1], [0, 0, 1, 1], [], []>} : vector<8x32xf32>, vector<32x128xf32>, vector<8x128xf32> -> vector<8x128xf32>
    %826 = vector.broadcast %24 : vector<1x128xf32> to vector<8x128xf32>
    %827 = arith.mulf %826, %714 : vector<8x128xf32>
    %828 = vector.broadcast %26 : vector<1x128xf32> to vector<8x128xf32>
    %829 = arith.mulf %828, %734 : vector<8x128xf32>
    %830 = arith.addf %827, %829 : vector<8x128xf32>
    %cst_283 = arith.constant 1.800000e+00 : f32
    %831 = vector.broadcast %cst_283 : f32 to vector<8x128xf32>
    %832 = arith.mulf %831, %830 : vector<8x128xf32>
    %cst_284 = arith.constant 0.00999999977 : f32
    %833 = vector.broadcast %cst_284 : f32 to vector<8x128xf32>
    %834 = arith.addf %833, %832 : vector<8x128xf32>
    %835 = vector.broadcast %21 : vector<1x128xf32> to vector<8x128xf32>
    %836 = arith.mulf %729, %835 : vector<8x128xf32>
    %cst_285 = arith.constant 1.000000e+00 : f32
    %837 = vector.broadcast %cst_285 : f32 to vector<8x128xf32>
    %838 = arith.mulf %837, %825 : vector<8x128xf32>
    %839 = vector.broadcast %23 : vector<1x128xf32> to vector<8x128xf32>
    %840 = arith.mulf %839, %838 : vector<8x128xf32>
    %841 = arith.addf %836, %840 : vector<8x128xf32>
    %842 = arith.mulf %834, %734 : vector<8x128xf32>
    %cst_286 = arith.constant 1.000000e+00 : f32
    %843 = vector.broadcast %cst_286 : f32 to vector<8x128xf32>
    %844 = arith.mulf %842, %843 : vector<8x128xf32>
    %845 = arith.subf %841, %844 : vector<8x128xf32>
    %846 = arith.subf %845, %834 : vector<8x128xf32>
    %cst_287 = arith.constant 0.000000e+00 : f32
    %847 = vector.broadcast %cst_287 : f32 to vector<8x128xf32>
    %848 = arith.cmpf ogt, %846, %847 : vector<8x128xf32>
    %849 = arith.extui %848 : vector<8x128xi1> to vector<8x128xi32>
    %850 = arith.sitofp %849 : vector<8x128xi32> to vector<8x128xf32>
    %851 = arith.addf %735, %850 : vector<8x128xf32>
    %c0_288 = arith.constant 0 : index
    %c56 = arith.constant 56 : index
    %c0_289 = arith.constant 0 : index
    %852 = vector.load %arg2[%c0_288, %c56, %c0_289] : memref<1x64x32xf32, #tpu.memory_space<vmem>>, vector<1x8x32xf32>
    %853 = vector.shape_cast %852 : vector<1x8x32xf32> to vector<8x32xf32>
    %854 = tpu.concatenate %767, %796 in 1 : vector<8x32xf32>, vector<8x32xf32> -> vector<8x64xf32>
    %c0_290 = arith.constant 0 : index
    %c0_291 = arith.constant 0 : index
    %855 = vector.load %arg3[%c0_290, %c0_291] : memref<64x64xf32, #tpu.memory_space<vmem>>, vector<64x64xf32>
    %cst_292 = arith.constant dense<0.000000e+00> : vector<8x64xf32>
    %856 = tpu.matmul %854, %855, %cst_292 {dimension_numbers = #tpu.dot_dimension_numbers<[1], [0], [0], [1], [0, 0, 1, 1], [], []>} : vector<8x64xf32>, vector<64x64xf32>, vector<8x64xf32> -> vector<8x64xf32>
    %857 = vector.extract_strided_slice %856 {offsets = [0, 0], sizes = [8, 32], strides = [1, 1]} : vector<8x64xf32> to vector<8x32xf32>
    %858 = arith.addf %853, %857 : vector<8x32xf32>
    %859 = vector.broadcast %6 : vector<1x32xf32> to vector<8x32xf32>
    %860 = arith.mulf %859, %747 : vector<8x32xf32>
    %861 = vector.broadcast %8 : vector<1x32xf32> to vector<8x32xf32>
    %862 = arith.mulf %861, %767 : vector<8x32xf32>
    %863 = arith.addf %860, %862 : vector<8x32xf32>
    %cst_293 = arith.constant 1.800000e+00 : f32
    %864 = vector.broadcast %cst_293 : f32 to vector<8x32xf32>
    %865 = arith.mulf %864, %863 : vector<8x32xf32>
    %cst_294 = arith.constant 0.00999999977 : f32
    %866 = vector.broadcast %cst_294 : f32 to vector<8x32xf32>
    %867 = arith.addf %866, %865 : vector<8x32xf32>
    %868 = vector.broadcast %3 : vector<1x32xf32> to vector<8x32xf32>
    %869 = arith.mulf %762, %868 : vector<8x32xf32>
    %cst_295 = arith.constant 1.000000e+00 : f32
    %870 = vector.broadcast %cst_295 : f32 to vector<8x32xf32>
    %871 = arith.mulf %870, %858 : vector<8x32xf32>
    %872 = vector.broadcast %5 : vector<1x32xf32> to vector<8x32xf32>
    %873 = arith.mulf %872, %871 : vector<8x32xf32>
    %874 = arith.addf %869, %873 : vector<8x32xf32>
    %875 = arith.mulf %867, %767 : vector<8x32xf32>
    %cst_296 = arith.constant 1.000000e+00 : f32
    %876 = vector.broadcast %cst_296 : f32 to vector<8x32xf32>
    %877 = arith.mulf %875, %876 : vector<8x32xf32>
    %878 = arith.subf %874, %877 : vector<8x32xf32>
    %879 = arith.subf %878, %867 : vector<8x32xf32>
    %cst_297 = arith.constant 0.000000e+00 : f32
    %880 = vector.broadcast %cst_297 : f32 to vector<8x32xf32>
    %881 = arith.cmpf ogt, %879, %880 : vector<8x32xf32>
    %882 = arith.extui %881 : vector<8x32xi1> to vector<8x32xi32>
    %883 = arith.sitofp %882 : vector<8x32xi32> to vector<8x32xf32>
    %c0_298 = arith.constant 0 : index
    %c0_299 = arith.constant 0 : index
    %884 = vector.load %arg4[%c0_298, %c0_299] : memref<32x32xf32, #tpu.memory_space<vmem>>, vector<32x32xf32>
    %cst_300 = arith.constant dense<0.000000e+00> : vector<8x32xf32>
    %885 = tpu.matmul %883, %884, %cst_300 {dimension_numbers = #tpu.dot_dimension_numbers<[1], [0], [0], [1], [0, 0, 1, 1], [], []>} : vector<8x32xf32>, vector<32x32xf32>, vector<8x32xf32> -> vector<8x32xf32>
    %886 = vector.extract_strided_slice %856 {offsets = [0, 32], sizes = [8, 32], strides = [1, 1]} : vector<8x64xf32> to vector<8x32xf32>
    %887 = arith.addf %885, %886 : vector<8x32xf32>
    %888 = vector.broadcast %12 : vector<1x32xf32> to vector<8x32xf32>
    %889 = arith.mulf %888, %776 : vector<8x32xf32>
    %890 = vector.broadcast %14 : vector<1x32xf32> to vector<8x32xf32>
    %891 = arith.mulf %890, %796 : vector<8x32xf32>
    %892 = arith.addf %889, %891 : vector<8x32xf32>
    %cst_301 = arith.constant 1.800000e+00 : f32
    %893 = vector.broadcast %cst_301 : f32 to vector<8x32xf32>
    %894 = arith.mulf %893, %892 : vector<8x32xf32>
    %cst_302 = arith.constant 0.00999999977 : f32
    %895 = vector.broadcast %cst_302 : f32 to vector<8x32xf32>
    %896 = arith.addf %895, %894 : vector<8x32xf32>
    %897 = vector.broadcast %9 : vector<1x32xf32> to vector<8x32xf32>
    %898 = arith.mulf %791, %897 : vector<8x32xf32>
    %cst_303 = arith.constant 1.000000e+00 : f32
    %899 = vector.broadcast %cst_303 : f32 to vector<8x32xf32>
    %900 = arith.mulf %899, %887 : vector<8x32xf32>
    %901 = vector.broadcast %11 : vector<1x32xf32> to vector<8x32xf32>
    %902 = arith.mulf %901, %900 : vector<8x32xf32>
    %903 = arith.addf %898, %902 : vector<8x32xf32>
    %904 = arith.mulf %896, %796 : vector<8x32xf32>
    %cst_304 = arith.constant 1.000000e+00 : f32
    %905 = vector.broadcast %cst_304 : f32 to vector<8x32xf32>
    %906 = arith.mulf %904, %905 : vector<8x32xf32>
    %907 = arith.subf %903, %906 : vector<8x32xf32>
    %908 = arith.subf %907, %896 : vector<8x32xf32>
    %cst_305 = arith.constant 0.000000e+00 : f32
    %909 = vector.broadcast %cst_305 : f32 to vector<8x32xf32>
    %910 = arith.cmpf ogt, %908, %909 : vector<8x32xf32>
    %911 = arith.extui %910 : vector<8x32xi1> to vector<8x32xi32>
    %912 = arith.sitofp %911 : vector<8x32xi32> to vector<8x32xf32>
    %c0_306 = arith.constant 0 : index
    %c0_307 = arith.constant 0 : index
    %913 = vector.load %arg5[%c0_306, %c0_307] : memref<32x32xf32, #tpu.memory_space<vmem>>, vector<32x32xf32>
    %cst_308 = arith.constant dense<0.000000e+00> : vector<8x32xf32>
    %914 = tpu.matmul %912, %913, %cst_308 {dimension_numbers = #tpu.dot_dimension_numbers<[1], [0], [0], [1], [0, 0, 1, 1], [], []>} : vector<8x32xf32>, vector<32x32xf32>, vector<8x32xf32> -> vector<8x32xf32>
    %915 = vector.broadcast %18 : vector<1x32xf32> to vector<8x32xf32>
    %916 = arith.mulf %915, %803 : vector<8x32xf32>
    %917 = vector.broadcast %20 : vector<1x32xf32> to vector<8x32xf32>
    %918 = arith.mulf %917, %823 : vector<8x32xf32>
    %919 = arith.addf %916, %918 : vector<8x32xf32>
    %cst_309 = arith.constant 1.800000e+00 : f32
    %920 = vector.broadcast %cst_309 : f32 to vector<8x32xf32>
    %921 = arith.mulf %920, %919 : vector<8x32xf32>
    %cst_310 = arith.constant 0.00999999977 : f32
    %922 = vector.broadcast %cst_310 : f32 to vector<8x32xf32>
    %923 = arith.addf %922, %921 : vector<8x32xf32>
    %924 = vector.broadcast %15 : vector<1x32xf32> to vector<8x32xf32>
    %925 = arith.mulf %818, %924 : vector<8x32xf32>
    %cst_311 = arith.constant 1.000000e+00 : f32
    %926 = vector.broadcast %cst_311 : f32 to vector<8x32xf32>
    %927 = arith.mulf %926, %914 : vector<8x32xf32>
    %928 = vector.broadcast %17 : vector<1x32xf32> to vector<8x32xf32>
    %929 = arith.mulf %928, %927 : vector<8x32xf32>
    %930 = arith.addf %925, %929 : vector<8x32xf32>
    %931 = arith.mulf %923, %823 : vector<8x32xf32>
    %cst_312 = arith.constant 1.000000e+00 : f32
    %932 = vector.broadcast %cst_312 : f32 to vector<8x32xf32>
    %933 = arith.mulf %931, %932 : vector<8x32xf32>
    %934 = arith.subf %930, %933 : vector<8x32xf32>
    %935 = arith.subf %934, %923 : vector<8x32xf32>
    %cst_313 = arith.constant 0.000000e+00 : f32
    %936 = vector.broadcast %cst_313 : f32 to vector<8x32xf32>
    %937 = arith.cmpf ogt, %935, %936 : vector<8x32xf32>
    %938 = arith.extui %937 : vector<8x32xi1> to vector<8x32xi32>
    %939 = arith.sitofp %938 : vector<8x32xi32> to vector<8x32xf32>
    %c0_314 = arith.constant 0 : index
    %c0_315 = arith.constant 0 : index
    %940 = vector.load %arg6[%c0_314, %c0_315] : memref<32x128xf32, #tpu.memory_space<vmem>>, vector<32x128xf32>
    %cst_316 = arith.constant dense<0.000000e+00> : vector<8x128xf32>
    %941 = tpu.matmul %939, %940, %cst_316 {dimension_numbers = #tpu.dot_dimension_numbers<[1], [0], [0], [1], [0, 0, 1, 1], [], []>} : vector<8x32xf32>, vector<32x128xf32>, vector<8x128xf32> -> vector<8x128xf32>
    %942 = vector.broadcast %24 : vector<1x128xf32> to vector<8x128xf32>
    %943 = arith.mulf %942, %830 : vector<8x128xf32>
    %944 = vector.broadcast %26 : vector<1x128xf32> to vector<8x128xf32>
    %945 = arith.mulf %944, %850 : vector<8x128xf32>
    %946 = arith.addf %943, %945 : vector<8x128xf32>
    %cst_317 = arith.constant 1.800000e+00 : f32
    %947 = vector.broadcast %cst_317 : f32 to vector<8x128xf32>
    %948 = arith.mulf %947, %946 : vector<8x128xf32>
    %cst_318 = arith.constant 0.00999999977 : f32
    %949 = vector.broadcast %cst_318 : f32 to vector<8x128xf32>
    %950 = arith.addf %949, %948 : vector<8x128xf32>
    %951 = vector.broadcast %21 : vector<1x128xf32> to vector<8x128xf32>
    %952 = arith.mulf %845, %951 : vector<8x128xf32>
    %cst_319 = arith.constant 1.000000e+00 : f32
    %953 = vector.broadcast %cst_319 : f32 to vector<8x128xf32>
    %954 = arith.mulf %953, %941 : vector<8x128xf32>
    %955 = vector.broadcast %23 : vector<1x128xf32> to vector<8x128xf32>
    %956 = arith.mulf %955, %954 : vector<8x128xf32>
    %957 = arith.addf %952, %956 : vector<8x128xf32>
    %958 = arith.mulf %950, %850 : vector<8x128xf32>
    %cst_320 = arith.constant 1.000000e+00 : f32
    %959 = vector.broadcast %cst_320 : f32 to vector<8x128xf32>
    %960 = arith.mulf %958, %959 : vector<8x128xf32>
    %961 = arith.subf %957, %960 : vector<8x128xf32>
    %962 = arith.subf %961, %950 : vector<8x128xf32>
    %cst_321 = arith.constant 0.000000e+00 : f32
    %963 = vector.broadcast %cst_321 : f32 to vector<8x128xf32>
    %964 = arith.cmpf ogt, %962, %963 : vector<8x128xf32>
    %965 = arith.extui %964 : vector<8x128xi1> to vector<8x128xi32>
    %966 = arith.sitofp %965 : vector<8x128xi32> to vector<8x128xf32>
    %967 = arith.addf %851, %966 : vector<8x128xf32>
    %c0_322 = arith.constant 0 : index
    %c0_323 = arith.constant 0 : index
    %968 = vector.load %arg20[%c0_322, %c0_323] : memref<8x32xf32, #tpu.memory_space<vmem>>, vector<8x32xf32>
    tpu.vector_store %arg20[%c0_322, %c0_323], %878 {strides = array<i32>} : memref<8x32xf32, #tpu.memory_space<vmem>>, vector<8x32xf32>,
    %c0_324 = arith.constant 0 : index
    %c0_325 = arith.constant 0 : index
    %969 = vector.load %arg21[%c0_324, %c0_325] : memref<8x32xf32, #tpu.memory_space<vmem>>, vector<8x32xf32>
    tpu.vector_store %arg21[%c0_324, %c0_325], %883 {strides = array<i32>} : memref<8x32xf32, #tpu.memory_space<vmem>>, vector<8x32xf32>,
    %c0_326 = arith.constant 0 : index
    %c0_327 = arith.constant 0 : index
    %970 = vector.load %arg22[%c0_326, %c0_327] : memref<8x32xf32, #tpu.memory_space<vmem>>, vector<8x32xf32>
    tpu.vector_store %arg22[%c0_326, %c0_327], %863 {strides = array<i32>} : memref<8x32xf32, #tpu.memory_space<vmem>>, vector<8x32xf32>,
    %c0_328 = arith.constant 0 : index
    %c0_329 = arith.constant 0 : index
    %971 = vector.load %arg23[%c0_328, %c0_329] : memref<8x32xf32, #tpu.memory_space<vmem>>, vector<8x32xf32>
    tpu.vector_store %arg23[%c0_328, %c0_329], %907 {strides = array<i32>} : memref<8x32xf32, #tpu.memory_space<vmem>>, vector<8x32xf32>,
    %c0_330 = arith.constant 0 : index
    %c0_331 = arith.constant 0 : index
    %972 = vector.load %arg24[%c0_330, %c0_331] : memref<8x32xf32, #tpu.memory_space<vmem>>, vector<8x32xf32>
    tpu.vector_store %arg24[%c0_330, %c0_331], %912 {strides = array<i32>} : memref<8x32xf32, #tpu.memory_space<vmem>>, vector<8x32xf32>,
    %c0_332 = arith.constant 0 : index
    %c0_333 = arith.constant 0 : index
    %973 = vector.load %arg25[%c0_332, %c0_333] : memref<8x32xf32, #tpu.memory_space<vmem>>, vector<8x32xf32>
    tpu.vector_store %arg25[%c0_332, %c0_333], %892 {strides = array<i32>} : memref<8x32xf32, #tpu.memory_space<vmem>>, vector<8x32xf32>,
    %c0_334 = arith.constant 0 : index
    %c0_335 = arith.constant 0 : index
    %974 = vector.load %arg26[%c0_334, %c0_335] : memref<8x32xf32, #tpu.memory_space<vmem>>, vector<8x32xf32>
    tpu.vector_store %arg26[%c0_334, %c0_335], %934 {strides = array<i32>} : memref<8x32xf32, #tpu.memory_space<vmem>>, vector<8x32xf32>,
    %c0_336 = arith.constant 0 : index
    %c0_337 = arith.constant 0 : index
    %975 = vector.load %arg27[%c0_336, %c0_337] : memref<8x32xf32, #tpu.memory_space<vmem>>, vector<8x32xf32>
    tpu.vector_store %arg27[%c0_336, %c0_337], %939 {strides = array<i32>} : memref<8x32xf32, #tpu.memory_space<vmem>>, vector<8x32xf32>,
    %c0_338 = arith.constant 0 : index
    %c0_339 = arith.constant 0 : index
    %976 = vector.load %arg28[%c0_338, %c0_339] : memref<8x32xf32, #tpu.memory_space<vmem>>, vector<8x32xf32>
    tpu.vector_store %arg28[%c0_338, %c0_339], %919 {strides = array<i32>} : memref<8x32xf32, #tpu.memory_space<vmem>>, vector<8x32xf32>,
    %c0_340 = arith.constant 0 : index
    %c0_341 = arith.constant 0 : index
    %977 = vector.load %arg29[%c0_340, %c0_341] : memref<8x128xf32, #tpu.memory_space<vmem>>, vector<8x128xf32>
    tpu.vector_store %arg29[%c0_340, %c0_341], %961 {strides = array<i32>} : memref<8x128xf32, #tpu.memory_space<vmem>>, vector<8x128xf32>,
    %c0_342 = arith.constant 0 : index
    %c0_343 = arith.constant 0 : index
    %978 = vector.load %arg30[%c0_342, %c0_343] : memref<8x128xf32, #tpu.memory_space<vmem>>, vector<8x128xf32>
    tpu.vector_store %arg30[%c0_342, %c0_343], %966 {strides = array<i32>} : memref<8x128xf32, #tpu.memory_space<vmem>>, vector<8x128xf32>,
    %c0_344 = arith.constant 0 : index
    %c0_345 = arith.constant 0 : index
    %979 = vector.load %arg31[%c0_344, %c0_345] : memref<8x128xf32, #tpu.memory_space<vmem>>, vector<8x128xf32>
    tpu.vector_store %arg31[%c0_344, %c0_345], %946 {strides = array<i32>} : memref<8x128xf32, #tpu.memory_space<vmem>>, vector<8x128xf32>,
    %c0_346 = arith.constant 0 : index
    %c0_347 = arith.constant 0 : index
    %980 = vector.load %arg19[%c0_346, %c0_347] : memref<8x128xf32, #tpu.memory_space<vmem>>, vector<8x128xf32>
    tpu.vector_store %arg19[%c0_346, %c0_347], %967 {strides = array<i32>} : memref<8x128xf32, #tpu.memory_space<vmem>>, vector<8x128xf32>,
    return
  }
  func.func @transform_0(%arg0: i32, %arg1: i32) -> (i32, i32, i32) {
    %c0_i32 = arith.constant 0 : i32
    %c0_i32_0 = arith.constant 0 : i32
    return %arg0, %arg1, %c0_i32 : i32, i32, i32
  }
  func.func @transform_1(%arg0: i32, %arg1: i32) -> (i32, i32) {
    %c0_i32 = arith.constant 0 : i32
    %c0_i32_0 = arith.constant 0 : i32
    %c0_i32_1 = arith.constant 0 : i32
    return %c0_i32, %c0_i32_0 : i32, i32
  }
  func.func @transform_2(%arg0: i32, %arg1: i32) -> (i32, i32) {
    %c0_i32 = arith.constant 0 : i32
    %c0_i32_0 = arith.constant 0 : i32
    %c0_i32_1 = arith.constant 0 : i32
    return %c0_i32, %c0_i32_0 : i32, i32
  }
  func.func @transform_3(%arg0: i32, %arg1: i32) -> (i32, i32) {
    %c0_i32 = arith.constant 0 : i32
    %c0_i32_0 = arith.constant 0 : i32
    %c0_i32_1 = arith.constant 0 : i32
    return %c0_i32, %c0_i32_0 : i32, i32
  }
  func.func @transform_4(%arg0: i32, %arg1: i32) -> (i32, i32) {
    %c0_i32 = arith.constant 0 : i32
    %c0_i32_0 = arith.constant 0 : i32
    %c0_i32_1 = arith.constant 0 : i32
    return %c0_i32, %c0_i32_0 : i32, i32
  }
  func.func @transform_5(%arg0: i32, %arg1: i32) -> (i32, i32) {
    %c0_i32 = arith.constant 0 : i32
    %c0_i32_0 = arith.constant 0 : i32
    %c0_i32_1 = arith.constant 0 : i32
    return %c0_i32, %c0_i32_0 : i32, i32
  }
  func.func @transform_6(%arg0: i32, %arg1: i32) -> (i32, i32) {
    %c0_i32 = arith.constant 0 : i32
    %c0_i32_0 = arith.constant 0 : i32
    %c0_i32_1 = arith.constant 0 : i32
    return %c0_i32, %c0_i32_0 : i32, i32
  }
  func.func @transform_7(%arg0: i32, %arg1: i32) -> (i32, i32) {
    %c0_i32 = arith.constant 0 : i32
    %c0_i32_0 = arith.constant 0 : i32
    %c0_i32_1 = arith.constant 0 : i32
    return %c0_i32, %c0_i32_0 : i32, i32
  }
  func.func @transform_8(%arg0: i32, %arg1: i32) -> (i32, i32) {
    %c0_i32 = arith.constant 0 : i32
    %c0_i32_0 = arith.constant 0 : i32
    %c0_i32_1 = arith.constant 0 : i32
    return %c0_i32, %c0_i32_0 : i32, i32
  }
  func.func @transform_9(%arg0: i32, %arg1: i32) -> (i32, i32) {
    %c0_i32 = arith.constant 0 : i32
    %c0_i32_0 = arith.constant 0 : i32
    %c0_i32_1 = arith.constant 0 : i32
    return %c0_i32, %c0_i32_0 : i32, i32
  }
  func.func @transform_10(%arg0: i32, %arg1: i32) -> (i32, i32) {
    %c0_i32 = arith.constant 0 : i32
    %c0_i32_0 = arith.constant 0 : i32
    %c0_i32_1 = arith.constant 0 : i32
    return %c0_i32, %c0_i32_0 : i32, i32
  }
  func.func @transform_11(%arg0: i32, %arg1: i32) -> (i32, i32) {
    %c0_i32 = arith.constant 0 : i32
    %c0_i32_0 = arith.constant 0 : i32
    %c0_i32_1 = arith.constant 0 : i32
    return %c0_i32, %c0_i32_0 : i32, i32
  }
  func.func @transform_12(%arg0: i32, %arg1: i32) -> (i32, i32) {
    %c0_i32 = arith.constant 0 : i32
    %c0_i32_0 = arith.constant 0 : i32
    %c0_i32_1 = arith.constant 0 : i32
    return %c0_i32, %c0_i32_0 : i32, i32
  }
  func.func @transform_13(%arg0: i32, %arg1: i32) -> (i32, i32) {
    %c0_i32 = arith.constant 0 : i32
    %c0_i32_0 = arith.constant 0 : i32
    return %arg0, %c0_i32 : i32, i32
  }
  func.func @transform_14(%arg0: i32, %arg1: i32) -> (i32, i32) {
    %c0_i32 = arith.constant 0 : i32
    %c0_i32_0 = arith.constant 0 : i32
    return %arg0, %c0_i32 : i32, i32
  }
  func.func @transform_15(%arg0: i32, %arg1: i32) -> (i32, i32) {
    %c0_i32 = arith.constant 0 : i32
    %c0_i32_0 = arith.constant 0 : i32
    return %arg0, %c0_i32 : i32, i32
  }
  func.func @transform_16(%arg0: i32, %arg1: i32) -> (i32, i32) {
    %c0_i32 = arith.constant 0 : i32
    %c0_i32_0 = arith.constant 0 : i32
    return %arg0, %c0_i32 : i32, i32
  }
  func.func @transform_17(%arg0: i32, %arg1: i32) -> (i32, i32) {
    %c0_i32 = arith.constant 0 : i32
    %c0_i32_0 = arith.constant 0 : i32
    return %arg0, %c0_i32 : i32, i32
  }
}

</mosaic_0001>

<llo_original>
// kernel: tpu_custom_call.1
$region0: #{tpu_custom_call.1}
  #allocation0 [shape = 'u32[]', space=smem, size = 0x4, offset = 0x4, fixed_abs, tag = 'smem constant byte address 0x4 - core index']
  #allocation1 [shape = 'u32[144,128]{1,0:T(1,128)}', space=vmem, size = 0x12000, scoped, tag = 'internal scratch']
  #allocation2 [shape = 'f32[8,32]{1,0:T(8,128)}', space=vmem, size = 0x1000, scoped, tag = 'scratch operand']
  #allocation3 [shape = 'f32[8,32]{1,0:T(8,128)}', space=vmem, size = 0x1000, scoped, tag = 'scratch operand']
  #allocation4 [shape = 'f32[8,32]{1,0:T(8,128)}', space=vmem, size = 0x1000, scoped, tag = 'scratch operand']
  #allocation5 [shape = 'f32[8,32]{1,0:T(8,128)}', space=vmem, size = 0x1000, scoped, tag = 'scratch operand']
  #allocation6 [shape = 'f32[8,32]{1,0:T(8,128)}', space=vmem, size = 0x1000, scoped, tag = 'scratch operand']
  #allocation7 [shape = 'f32[8,32]{1,0:T(8,128)}', space=vmem, size = 0x1000, scoped, tag = 'scratch operand']
  #allocation8 [shape = 'f32[8,32]{1,0:T(8,128)}', space=vmem, size = 0x1000, scoped, tag = 'scratch operand']
  #allocation9 [shape = 'f32[8,32]{1,0:T(8,128)}', space=vmem, size = 0x1000, scoped, tag = 'scratch operand']
  #allocation10 [shape = 'f32[8,32]{1,0:T(8,128)}', space=vmem, size = 0x1000, scoped, tag = 'scratch operand']
  #allocation11 [shape = 'f32[8,128]{1,0:T(8,128)}', space=vmem, size = 0x1000, scoped, tag = 'scratch operand']
  #allocation12 [shape = 'f32[8,128]{1,0:T(8,128)}', space=vmem, size = 0x1000, scoped, tag = 'scratch operand']
  #allocation13 [shape = 'f32[8,128]{1,0:T(8,128)}', space=vmem, size = 0x1000, scoped, tag = 'scratch operand']
  %s0 = inlined_call_operand.vmem [shape: f32[1,64,32], index: 0, kind: input, shape index: {}]
  %s1 = inlined_call_operand.vmem [shape: f32[64,64], index: 1, kind: input, shape index: {}]
  %s2 = inlined_call_operand.vmem [shape: f32[32,32], index: 2, kind: input, shape index: {}]
  %s3 = inlined_call_operand.hbm [shape: f32[32,32], index: 3, kind: input, shape index: {}]
  %s4 = inlined_call_operand.hbm [shape: f32[32,128], index: 4, kind: input, shape index: {}]
  %s5 = inlined_call_operand.hbm [shape: f32[1,32], index: 5, kind: input, shape index: {}]
  %s6 = inlined_call_operand.hbm [shape: f32[1,32], index: 6, kind: input, shape index: {}]
  %s7 = inlined_call_operand.hbm [shape: f32[1,32], index: 7, kind: input, shape index: {}]
  %s8 = inlined_call_operand.hbm [shape: f32[1,32], index: 8, kind: input, shape index: {}]
  %s9 = inlined_call_operand.hbm [shape: f32[1,32], index: 9, kind: input, shape index: {}]
  %s10 = inlined_call_operand.vmem [shape: f32[1,32], index: 10, kind: input, shape index: {}]
  %s11 = inlined_call_operand.hbm [shape: f32[1,128], index: 11, kind: input, shape index: {}]
  %s12 = inlined_call_operand.hbm [shape: f32[1,128], index: 12, kind: input, shape index: {}]
  %s13 = inlined_call_operand.vmem [shape: f32[8,32], index: 13, kind: input, shape index: {}]
  %s14 = inlined_call_operand.vmem [shape: f32[8,32], index: 14, kind: input, shape index: {}]
  %s15 = inlined_call_operand.vmem [shape: f32[8,32], index: 15, kind: input, shape index: {}]
  %s16 = inlined_call_operand.hbm [shape: f32[8,128], index: 16, kind: input, shape index: {}]
  %s17 = inlined_call_operand.hbm [shape: f32[8,128], index: 17, kind: output, shape index: {}]
  %s18 = sld [smem:[#allocation0]]
  $region122: #{tpu_custom_call.1} parent=0
    _
  %s20 = ssub.s32 1, %s18
  %s21 = scalar_select 0, %s20, %s18
  $region1: #{tpu_custom_call.1} parent=0
    #allocation14 [shape = 'u8[16384]{0}', space=vmem, size = 0x4000, scoped, tag = 'input window, operand 3, single buffered']
    #allocation15 [shape = 's32[1]{0}', space=sflag, size = 0x4, scoped, tag = 'scoped memory for tpu_custom_call.1']
    #allocation16 [shape = 's32[1]{0}', space=sflag, size = 0x4, scoped, tag = 'scoped memory for tpu_custom_call.1']
    #allocation17 [shape = 'u8[16384]{0}', space=vmem, size = 0x4000, scoped, tag = 'input window, operand 4, single buffered']
    #allocation18 [shape = 's32[1]{0}', space=sflag, size = 0x4, scoped, tag = 'scoped memory for tpu_custom_call.1']
    #allocation19 [shape = 'u8[512]{0}', space=vmem, size = 0x400, scoped, tag = 'input window, operand 5, single buffered']
    #allocation20 [shape = 'u8[512]{0}', space=vmem, size = 0x400, scoped, tag = 'input window, operand 6, single buffered']
    #allocation21 [shape = 's32[1]{0}', space=sflag, size = 0x4, scoped, tag = 'scoped memory for tpu_custom_call.1']
    #allocation22 [shape = 'u8[512]{0}', space=vmem, size = 0x400, scoped, tag = 'input window, operand 7, single buffered']
    #allocation23 [shape = 'u8[512]{0}', space=vmem, size = 0x400, scoped, tag = 'input window, operand 8, single buffered']
    #allocation24 [shape = 's32[1]{0}', space=sflag, size = 0x4, scoped, tag = 'scoped memory for tpu_custom_call.1']
    #allocation25 [shape = 'u8[512]{0}', space=vmem, size = 0x400, scoped, tag = 'input window, operand 9, single buffered']
    #allocation26 [shape = 'u8[512]{0}', space=vmem, size = 0x400, scoped, tag = 'input window, operand 11, single buffered']
    #allocation27 [shape = 's32[1]{0}', space=sflag, size = 0x4, scoped, tag = 'scoped memory for tpu_custom_call.1']
    #allocation28 [shape = 'u8[512]{0}', space=vmem, size = 0x400, scoped, tag = 'input window, operand 12, single buffered']
    #allocation29 [shape = 'u8[4096]{0}', space=vmem, size = 0x1000, scoped, tag = 'input window, operand 16, single buffered']
    #allocation30 [shape = 's32[1]{0}', space=sflag, size = 0x4, scoped, tag = 'scoped memory for tpu_custom_call.1']
    #allocation31 [shape = 'u8[4096]{0}', space=vmem, size = 0x1000, scoped, tag = 'output window, operand 0, single buffered']
    %22 = vsyncpa [#allocation15], 0
    %23 = vsyncpa [#allocation18], 0
    %24 = vsyncpa [#allocation21], 0
    %25 = vsyncpa [#allocation24], 0
    %26 = vsyncpa [#allocation27], 0
    %27 = vsyncpa [#allocation30], 0
    %28 = vsyncpa [#allocation16], 0
    // Predicated region
    $region2: #{tpu_custom_call.1} parent=1 // pred_check
      _
    $region3: #{tpu_custom_call.1} parent=1 // pred_check_branch
      %30 = sbr.rel (0) target = $region5
    $region4: #{tpu_custom_call.1} parent=1 // pred_region
      _
    $region5: #{tpu_custom_call.1} parent=1 // pred_fallthru
      _
    // Predicated region
    $region6: #{tpu_custom_call.1} parent=1 // pred_check
      _
    $region7: #{tpu_custom_call.1} parent=1 // pred_check_branch
      %32 = sbr.rel (0) target = $region9
    $region8: #{tpu_custom_call.1} parent=1 // pred_region
      _
    $region9: #{tpu_custom_call.1} parent=1 // pred_fallthru
      _
    // Predicated region
    $region10: #{tpu_custom_call.1} parent=1 // pred_check
      _
    $region11: #{tpu_custom_call.1} parent=1 // pred_check_branch
      %34 = sbr.rel (0) target = $region13
    $region12: #{tpu_custom_call.1} parent=1 // pred_region
      _
    $region13: #{tpu_custom_call.1} parent=1 // pred_fallthru
      _
    // Predicated region
    $region14: #{tpu_custom_call.1} parent=1 // pred_check
      _
    $region15: #{tpu_custom_call.1} parent=1 // pred_check_branch
      %36 = sbr.rel (0) target = $region17
    $region16: #{tpu_custom_call.1} parent=1 // pred_region
      %s38 = ssub.s32 512, 512
      %39 = vsyncadd [#allocation15], %s38
      %s40 = sshll.u32 [#allocation14], 4
      %s41 = int_to_ptr.vmem [resolvable:$true] %s40
      %46 = dma.hbm_to_vmem [thread:$0]  %s3, 512, %s41, [#allocation15], 128, 128, 8
    $region17: #{tpu_custom_call.1} parent=1 // pred_fallthru
      _
    // Predicated region
    $region18: #{tpu_custom_call.1} parent=1 // pred_check
      _
    $region19: #{tpu_custom_call.1} parent=1 // pred_check_branch
      %48 = sbr.rel (0) target = $region21
    $region20: #{tpu_custom_call.1} parent=1 // pred_region
      %s50 = ssub.s32 512, 512
      %51 = vsyncadd [#allocation18], %s50
      %s52 = sshll.u32 [#allocation17], 4
      %s53 = int_to_ptr.vmem [resolvable:$true] %s52
      %58 = dma.hbm_to_vmem [thread:$0]  %s4, 512, %s53, [#allocation18], 128, 128, 8
    $region21: #{tpu_custom_call.1} parent=1 // pred_fallthru
      _
    // Predicated region
    $region22: #{tpu_custom_call.1} parent=1 // pred_check
      _
    $region23: #{tpu_custom_call.1} parent=1 // pred_check_branch
      %60 = sbr.rel (0) target = $region25
    $region24: #{tpu_custom_call.1} parent=1 // pred_region
      %s62 = ssub.s32 16, 16
      %63 = vsyncadd [#allocation18], %s62
      %s65 = sshll.u32 [#allocation19], 4
      %s66 = int_to_ptr.vmem [resolvable:$true] %s65
      %68 = dma.hbm_to_vmem [thread:$0]  %s5, 16, %s66, [#allocation18]
    $region25: #{tpu_custom_call.1} parent=1 // pred_fallthru
      _
    // Predicated region
    $region26: #{tpu_custom_call.1} parent=1 // pred_check
      _
    $region27: #{tpu_custom_call.1} parent=1 // pred_check_branch
      %70 = sbr.rel (0) target = $region29
    $region28: #{tpu_custom_call.1} parent=1 // pred_region
      %s72 = ssub.s32 16, 16
      %73 = vsyncadd [#allocation21], %s72
      %s75 = sshll.u32 [#allocation20], 4
      %s76 = int_to_ptr.vmem [resolvable:$true] %s75
      %78 = dma.hbm_to_vmem [thread:$0]  %s6, 16, %s76, [#allocation21]
    $region29: #{tpu_custom_call.1} parent=1 // pred_fallthru
      _
    // Predicated region
    $region30: #{tpu_custom_call.1} parent=1 // pred_check
      _
    $region31: #{tpu_custom_call.1} parent=1 // pred_check_branch
      %80 = sbr.rel (0) target = $region33
    $region32: #{tpu_custom_call.1} parent=1 // pred_region
      %s82 = ssub.s32 16, 16
      %83 = vsyncadd [#allocation21], %s82
      %s85 = sshll.u32 [#allocation22], 4
      %s86 = int_to_ptr.vmem [resolvable:$true] %s85
      %88 = dma.hbm_to_vmem [thread:$0]  %s7, 16, %s86, [#allocation21]
    $region33: #{tpu_custom_call.1} parent=1 // pred_fallthru
      _
    // Predicated region
    $region34: #{tpu_custom_call.1} parent=1 // pred_check
      _
    $region35: #{tpu_custom_call.1} parent=1 // pred_check_branch
      %90 = sbr.rel (0) target = $region37
    $region36: #{tpu_custom_call.1} parent=1 // pred_region
      %s92 = ssub.s32 16, 16
      %93 = vsyncadd [#allocation24], %s92
      %s95 = sshll.u32 [#allocation23], 4
      %s96 = int_to_ptr.vmem [resolvable:$true] %s95
      %98 = dma.hbm_to_vmem [thread:$0]  %s8, 16, %s96, [#allocation24]
    $region37: #{tpu_custom_call.1} parent=1 // pred_fallthru
      _
    // Predicated region
    $region38: #{tpu_custom_call.1} parent=1 // pred_check
      _
    $region39: #{tpu_custom_call.1} parent=1 // pred_check_branch
      %100 = sbr.rel (0) target = $region41
    $region40: #{tpu_custom_call.1} parent=1 // pred_region
      %s102 = ssub.s32 16, 16
      %103 = vsyncadd [#allocation24], %s102
      %s105 = sshll.u32 [#allocation25], 4
      %s106 = int_to_ptr.vmem [resolvable:$true] %s105
      %108 = dma.hbm_to_vmem [thread:$0]  %s9, 16, %s106, [#allocation24]
    $region41: #{tpu_custom_call.1} parent=1 // pred_fallthru
      _
    // Predicated region
    $region42: #{tpu_custom_call.1} parent=1 // pred_check
      _
    $region43: #{tpu_custom_call.1} parent=1 // pred_check_branch
      %110 = sbr.rel (0) target = $region45
    $region44: #{tpu_custom_call.1} parent=1 // pred_region
      _
    $region45: #{tpu_custom_call.1} parent=1 // pred_fallthru
      _
    // Predicated region
    $region46: #{tpu_custom_call.1} parent=1 // pred_check
      _
    $region47: #{tpu_custom_call.1} parent=1 // pred_check_branch
      %112 = sbr.rel (0) target = $region49
    $region48: #{tpu_custom_call.1} parent=1 // pred_region
      %s114 = ssub.s32 16, 16
      %115 = vsyncadd [#allocation27], %s114
      %s117 = sshll.u32 [#allocation26], 4
      %s118 = int_to_ptr.vmem [resolvable:$true] %s117
      %120 = dma.hbm_to_vmem [thread:$0]  %s11, 16, %s118, [#allocation27]
    $region49: #{tpu_custom_call.1} parent=1 // pred_fallthru
      _
    // Predicated region
    $region50: #{tpu_custom_call.1} parent=1 // pred_check
      _
    $region51: #{tpu_custom_call.1} parent=1 // pred_check_branch
      %122 = sbr.rel (0) target = $region53
    $region52: #{tpu_custom_call.1} parent=1 // pred_region
      %s124 = ssub.s32 16, 16
      %125 = vsyncadd [#allocation27], %s124
      %s127 = sshll.u32 [#allocation28], 4
      %s128 = int_to_ptr.vmem [resolvable:$true] %s127
      %130 = dma.hbm_to_vmem [thread:$0]  %s12, 16, %s128, [#allocation27]
    $region53: #{tpu_custom_call.1} parent=1 // pred_fallthru
      _
    // Predicated region
    $region54: #{tpu_custom_call.1} parent=1 // pred_check
      _
    $region55: #{tpu_custom_call.1} parent=1 // pred_check_branch
      %132 = sbr.rel (0) target = $region57
    $region56: #{tpu_custom_call.1} parent=1 // pred_region
      _
    $region57: #{tpu_custom_call.1} parent=1 // pred_fallthru
      _
    // Predicated region
    $region58: #{tpu_custom_call.1} parent=1 // pred_check
      _
    $region59: #{tpu_custom_call.1} parent=1 // pred_check_branch
      %134 = sbr.rel (0) target = $region61
    $region60: #{tpu_custom_call.1} parent=1 // pred_region
      _
    $region61: #{tpu_custom_call.1} parent=1 // pred_fallthru
      _
    // Predicated region
    $region62: #{tpu_custom_call.1} parent=1 // pred_check
      _
    $region63: #{tpu_custom_call.1} parent=1 // pred_check_branch
      %136 = sbr.rel (0) target = $region65
    $region64: #{tpu_custom_call.1} parent=1 // pred_region
      _
    $region65: #{tpu_custom_call.1} parent=1 // pred_fallthru
      _
    // Predicated region
    $region66: #{tpu_custom_call.1} parent=1 // pred_check
      _
    $region67: #{tpu_custom_call.1} parent=1 // pred_check_branch
      %138 = sbr.rel (0) target = $region69
    $region68: #{tpu_custom_call.1} parent=1 // pred_region
      %s140 = ssub.s32 128, 128
      %141 = vsyncadd [#allocation30], %s140
      %s143 = sshll.u32 [#allocation29], 4
      %s144 = int_to_ptr.vmem [resolvable:$true] %s143
      %146 = dma.hbm_to_vmem [thread:$0]  %s16, 128, %s144, [#allocation30]
    $region69: #{tpu_custom_call.1} parent=1 // pred_fallthru
      _
    // Predicated region
    $region70: #{tpu_custom_call.1} parent=1 // pred_check
      _
    $region71: #{tpu_custom_call.1} parent=1 // pred_check_branch
      %148 = sbr.rel (0) target = $region73
    $region72: #{tpu_custom_call.1} parent=1 // pred_region
      %149 = dma.done [#allocation15], 512
    $region73: #{tpu_custom_call.1} parent=1 // pred_fallthru
      _
    // Predicated region
    $region74: #{tpu_custom_call.1} parent=1 // pred_check
      _
    $region75: #{tpu_custom_call.1} parent=1 // pred_check_branch
      %151 = sbr.rel (0) target = $region77
    $region76: #{tpu_custom_call.1} parent=1 // pred_region
      %152 = dma.done [#allocation18], 512
    $region77: #{tpu_custom_call.1} parent=1 // pred_fallthru
      _
    // Predicated region
    $region78: #{tpu_custom_call.1} parent=1 // pred_check
      _
    $region79: #{tpu_custom_call.1} parent=1 // pred_check_branch
      %154 = sbr.rel (0) target = $region81
    $region80: #{tpu_custom_call.1} parent=1 // pred_region
      %155 = dma.done [#allocation18], 16
    $region81: #{tpu_custom_call.1} parent=1 // pred_fallthru
      _
    // Predicated region
    $region82: #{tpu_custom_call.1} parent=1 // pred_check
      _
    $region83: #{tpu_custom_call.1} parent=1 // pred_check_branch
      %157 = sbr.rel (0) target = $region85
    $region84: #{tpu_custom_call.1} parent=1 // pred_region
      %158 = dma.done [#allocation21], 16
    $region85: #{tpu_custom_call.1} parent=1 // pred_fallthru
      _
    // Predicated region
    $region86: #{tpu_custom_call.1} parent=1 // pred_check
      _
    $region87: #{tpu_custom_call.1} parent=1 // pred_check_branch
      %160 = sbr.rel (0) target = $region89
    $region88: #{tpu_custom_call.1} parent=1 // pred_region
      %161 = dma.done [#allocation21], 16
    $region89: #{tpu_custom_call.1} parent=1 // pred_fallthru
      _
    // Predicated region
    $region90: #{tpu_custom_call.1} parent=1 // pred_check
      _
    $region91: #{tpu_custom_call.1} parent=1 // pred_check_branch
      %163 = sbr.rel (0) target = $region93
    $region92: #{tpu_custom_call.1} parent=1 // pred_region
      %164 = dma.done [#allocation24], 16
    $region93: #{tpu_custom_call.1} parent=1 // pred_fallthru
      _
    // Predicated region
    $region94: #{tpu_custom_call.1} parent=1 // pred_check
      _
    $region95: #{tpu_custom_call.1} parent=1 // pred_check_branch
      %166 = sbr.rel (0) target = $region97
    $region96: #{tpu_custom_call.1} parent=1 // pred_region
      %167 = dma.done [#allocation24], 16
    $region97: #{tpu_custom_call.1} parent=1 // pred_fallthru
      _
    // Predicated region
    $region98: #{tpu_custom_call.1} parent=1 // pred_check
      _
    $region99: #{tpu_custom_call.1} parent=1 // pred_check_branch
      %169 = sbr.rel (0) target = $region101
    $region100: #{tpu_custom_call.1} parent=1 // pred_region
      %170 = dma.done [#allocation27], 16
    $region101: #{tpu_custom_call.1} parent=1 // pred_fallthru
      _
    // Predicated region
    $region102: #{tpu_custom_call.1} parent=1 // pred_check
      _
    $region103: #{tpu_custom_call.1} parent=1 // pred_check_branch
      %172 = sbr.rel (0) target = $region105
    $region104: #{tpu_custom_call.1} parent=1 // pred_region
      %173 = dma.done [#allocation27], 16
    $region105: #{tpu_custom_call.1} parent=1 // pred_fallthru
      _
    // Predicated region
    $region106: #{tpu_custom_call.1} parent=1 // pred_check
      _
    $region107: #{tpu_custom_call.1} parent=1 // pred_check_branch
      %175 = sbr.rel (0) target = $region109
    $region108: #{tpu_custom_call.1} parent=1 // pred_region
      %176 = dma.done [#allocation30], 128
    $region109: #{tpu_custom_call.1} parent=1 // pred_fallthru
      _
    %p177 = scmp.eq.s32.totalorder 0, 0
    // Predicated region
    $region110: #{tpu_custom_call.1} parent=1 // pred_check
      %p178 = pneg %p177
    $region111: #{tpu_custom_call.1} parent=1 // pred_check_branch
      %180 = sbr.rel (%p178) target = $region113
    $region112: #{tpu_custom_call.1} parent=1 // pred_region
      %v181 = vld [vmem:[%s13] sm:$0xff]
      %vm182 = vcmask 261120
      %183 = vst.msk [vmem:[#allocation2] sm:$0xff] %vm182, %v181
      %v184 = vld [vmem:[%s13] sm:$0xff]
      %185 = vst.msk [vmem:[#allocation3] sm:$0xff] %vm182, %v184
      %186 = vst.msk [vmem:[#allocation4] sm:$0xff] %vm182, 0.01
      %v187 = vld [vmem:[%s14] sm:$0xff]
      %188 = vst.msk [vmem:[#allocation5] sm:$0xff] %vm182, %v187
      %v189 = vld [vmem:[%s14] sm:$0xff]
      %190 = vst.msk [vmem:[#allocation6] sm:$0xff] %vm182, %v189
      %191 = vst.msk [vmem:[#allocation7] sm:$0xff] %vm182, 0.01
      %v192 = vld [vmem:[%s15] sm:$0xff]
      %193 = vst.msk [vmem:[#allocation8] sm:$0xff] %vm182, %v192
      %v194 = vld [vmem:[%s15] sm:$0xff]
      %195 = vst.msk [vmem:[#allocation9] sm:$0xff] %vm182, %v194
      %196 = vst.msk [vmem:[#allocation10] sm:$0xff] %vm182, 0.01
      %v197 = vld [vmem:[#allocation29] sm:$0xff]
      %198 = vst [vmem:[#allocation11] sm:$0xff] %v197
      %v199 = vld [vmem:[#allocation29] sm:$0xff]
      %200 = vst [vmem:[#allocation12] sm:$0xff] %v199
      %201 = vst [vmem:[#allocation13] sm:$0xff] 0.01
      %v202 = vld [vmem:[#allocation29] sm:$0xff]
      %203 = vst [vmem:[#allocation31] sm:$0xff] %v202
    $region113: #{tpu_custom_call.1} parent=1 // pred_fallthru
      _
    %v204 = vld [vmem:[#allocation19] sm:$0x1]
    %v205 = vsub.f32 1.0, %v204
    %v206 = vld [vmem:[#allocation20] sm:$0x1]
    %v207 = vsub.f32 1.0, %v206
    %v208 = vld [vmem:[#allocation22] sm:$0x1]
    %v209 = vsub.f32 1.0, %v208
    %v210 = vld [vmem:[#allocation23] sm:$0x1]
    %v211 = vsub.f32 1.0, %v210
    %v212 = vld [vmem:[#allocation25] sm:$0x1]
    %v213 = vsub.f32 1.0, %v212
    %v214 = vld [vmem:[%s10] sm:$0x1]
    %v215 = vsub.f32 1.0, %v214
    %v216 = vld [vmem:[#allocation26] sm:$0x1]
    %v217 = vsub.f32 1.0, %v216
    %v218 = vld [vmem:[#allocation28] sm:$0x1]
    %v219 = vsub.f32 1.0, %v218
    %v220 = vld [vmem:[#allocation2] sm:$0xff]
    %v221 = vld [vmem:[#allocation3] sm:$0xff]
    %v222 = vld [vmem:[#allocation4] sm:$0xff]
    %v223 = vld [vmem:[#allocation5] sm:$0xff]
    %v224 = vld [vmem:[#allocation6] sm:$0xff]
    %v225 = vld [vmem:[#allocation7] sm:$0xff]
    %v226 = vld [vmem:[#allocation8] sm:$0xff]
    %v227 = vld [vmem:[#allocation9] sm:$0xff]
    %v228 = vld [vmem:[#allocation10] sm:$0xff]
    %v229 = vld [vmem:[#allocation11] sm:$0xff]
    %v230 = vld [vmem:[#allocation12] sm:$0xff]
    %v231 = vld [vmem:[#allocation13] sm:$0xff]
    %v232 = vld [vmem:[#allocation31] sm:$0xff]
    %v233 = vld [vmem:[%s0] sm:$0xff]
    %235 = vrot.lane.b32.xlu0 %v224, 32
    %v236 = vpop.permute.xlu0 %235
    %vm238 = vcmask 261120
    %v239 = vsel %vm238, %v221, %v236
    %v240 = vld [vmem:[%s1] sm:$0xff]
    %v241 = vld [vmem:[%s1 + $0x8] sm:$0xff]
    %v242 = vld [vmem:[%s1 + $0x10] sm:$0xff]
    %v243 = vld [vmem:[%s1 + $0x18] sm:$0xff]
    %v244 = vld [vmem:[%s1 + $0x20] sm:$0xff]
    %v245 = vld [vmem:[%s1 + $0x28] sm:$0xff]
    %v246 = vld [vmem:[%s1 + $0x30] sm:$0xff]
    %v247 = vld [vmem:[%s1 + $0x38] sm:$0xff]
    %vm248 = vcmask 523264
    %v250 = vsel %vm248, %v239, 0
    %252 = vmatprep.subr.mxu0 0.0
    %253 = vmatpush1.msra.mxu0 0.0
    %254 = vmatprep.subr.mxu0 0.0
    %255 = vmatpush1.msra.mxu0 0.0
    %256 = vmatprep.subr.mxu0 0.0
    %257 = vmatpush1.msra.mxu0 0.0
    %258 = vmatprep.subr.mxu0 0.0
    %259 = vmatpush1.msra.mxu0 0.0
    %260 = vmatprep.subr.mxu0 0.0
    %261 = vmatpush1.msra.mxu0 0.0
    %262 = vmatprep.subr.mxu0 0.0
    %263 = vmatpush1.msra.mxu0 0.0
    %264 = vmatprep.subr.mxu0 0.0
    %265 = vmatpush1.msra.mxu0 0.0
    %266 = vmatprep.subr.mxu0 0.0
    %267 = vmatpush1.msra.mxu0 0.0
    %268 = vmatprep.subr.mxu0 0.0
    %269 = vmatpush1.msra.mxu0 %v247
    %270 = vmatprep.subr.mxu0 0.0
    %271 = vmatpush1.msra.mxu0 %v246
    %272 = vmatprep.subr.mxu0 0.0
    %273 = vmatpush1.msra.mxu0 %v245
    %274 = vmatprep.subr.mxu0 0.0
    %275 = vmatpush1.msra.mxu0 %v244
    %276 = vmatprep.subr.mxu0 0.0
    %277 = vmatpush1.msra.mxu0 %v243
    %278 = vmatprep.subr.mxu0 0.0
    %279 = vmatpush1.msra.mxu0 %v242
    %280 = vmatprep.subr.mxu0 0.0
    %281 = vmatpush1.msra.mxu0 %v241
    %282 = vmatprep.subr.mxu0 0.0
    %283 = vmatpush1.msra.mxu0 %v240
    %284 = vmatprep.subr.mxu0 0.0
    %285 = vmatpush2.msra.mxu0 0.0
    %286 = vmatprep.subr.mxu0 0.0
    %287 = vmatpush2.msra.mxu0 0.0
    %288 = vmatprep.subr.mxu0 0.0
    %289 = vmatpush2.msra.mxu0 0.0
    %290 = vmatprep.subr.mxu0 0.0
    %291 = vmatpush2.msra.mxu0 0.0
    %292 = vmatprep.subr.mxu0 0.0
    %293 = vmatpush2.msra.mxu0 0.0
    %294 = vmatprep.subr.mxu0 0.0
    %295 = vmatpush2.msra.mxu0 0.0
    %296 = vmatprep.subr.mxu0 0.0
    %297 = vmatpush2.msra.mxu0 0.0
    %298 = vmatprep.subr.mxu0 0.0
    %299 = vmatpush2.msra.mxu0 0.0
    %300 = vmatprep.subr.mxu0 0.0
    %301 = vmatpush2.msra.mxu0 0.0
    %302 = vmatprep.subr.mxu0 0.0
    %303 = vmatpush2.msra.mxu0 0.0
    %304 = vmatprep.subr.mxu0 0.0
    %305 = vmatpush2.msra.mxu0 0.0
    %306 = vmatprep.subr.mxu0 0.0
    %307 = vmatpush2.msra.mxu0 0.0
    %308 = vmatprep.subr.mxu0 0.0
    %309 = vmatpush2.msra.mxu0 0.0
    %310 = vmatprep.subr.mxu0 0.0
    %311 = vmatpush2.msra.mxu0 0.0
    %312 = vmatprep.subr.mxu0 0.0
    %313 = vmatpush2.msra.mxu0 0.0
    %314 = vmatprep.subr.mxu0 0.0
    %315 = vmatpush2.msra.mxu0 0.0
    %316 = vmatprep.mubr.f32.mxu0 0.0
    %317 = vmatmul.mubr.f32.gmra.mxu0 %v250
    %v318 = vpop.f32.mrf.mxu0
    %v319 = vadd.f32 0.0, %v318
    %v320 = vpop.f32.mrf.mxu0
    %321 = vdwg.mxu0
    %v322 = vadd.f32 %v233, %v319
    %v324 = vlaneseq
    %v325 = vshrl.u32 %v324, 7
    %v326 = vsub.s32 0, %v325
    %v327 = vrot.slane %v206, %v326
    %v329 = vmul.f32 %v327, %v222
    %v331 = vlaneseq
    %v332 = vshrl.u32 %v331, 7
    %v333 = vsub.s32 0, %v332
    %v334 = vrot.slane %v207, %v333
    %v336 = vmul.f32 %v334, %v221
    %v337 = vadd.f32 %v329, %v336
    %v338 = vmul.f32 %v337, 1.8
    %v339 = vadd.f32 %v338, 0.01
    %v341 = vlaneseq
    %v342 = vshrl.u32 %v341, 7
    %v343 = vsub.s32 0, %v342
    %v344 = vrot.slane %v204, %v343
    %v346 = vmul.f32 %v220, %v344
    %v348 = vlaneseq
    %v349 = vshrl.u32 %v348, 7
    %v350 = vsub.s32 0, %v349
    %v351 = vrot.slane %v205, %v350
    %v353 = vmul.f32 %v351, %v322
    %v354 = vadd.f32 %v346, %v353
    %v355 = vmul.f32 %v339, %v221
    %v356 = vsub.f32 %v354, %v355
    %v357 = vsub.f32 %v356, %v339
    %vm358 = vcmp.gt.f32.partialorder %v357, 0.0
    %v359 = vsel %vm358, 1, 0
    %v360 = vcvt.s32.f32 %v359
    %v361 = vld [vmem:[%s2] sm:$0xff]
    %v362 = vld [vmem:[%s2 + $0x8] sm:$0xff]
    %v363 = vld [vmem:[%s2 + $0x10] sm:$0xff]
    %v364 = vld [vmem:[%s2 + $0x18] sm:$0xff]
    %366 = vrot.lane.b32.xlu0 %v319, 96
    %v367 = vpop.permute.xlu0 %366
    %v370 = vsel %vm238, %v360, 0
    %372 = vmatprep.subr.mxu0 0.0
    %373 = vmatpush1.msra.mxu0 0.0
    %374 = vmatprep.subr.mxu0 0.0
    %375 = vmatpush1.msra.mxu0 0.0
    %376 = vmatprep.subr.mxu0 0.0
    %377 = vmatpush1.msra.mxu0 0.0
    %378 = vmatprep.subr.mxu0 0.0
    %379 = vmatpush1.msra.mxu0 0.0
    %380 = vmatprep.subr.mxu0 0.0
    %381 = vmatpush1.msra.mxu0 0.0
    %382 = vmatprep.subr.mxu0 0.0
    %383 = vmatpush1.msra.mxu0 0.0
    %384 = vmatprep.subr.mxu0 0.0
    %385 = vmatpush1.msra.mxu0 0.0
    %386 = vmatprep.subr.mxu0 0.0
    %387 = vmatpush1.msra.mxu0 0.0
    %388 = vmatprep.subr.mxu0 0.0
    %389 = vmatpush1.msra.mxu0 0.0
    %390 = vmatprep.subr.mxu0 0.0
    %391 = vmatpush1.msra.mxu0 0.0
    %392 = vmatprep.subr.mxu0 0.0
    %393 = vmatpush1.msra.mxu0 0.0
    %394 = vmatprep.subr.mxu0 0.0
    %395 = vmatpush1.msra.mxu0 0.0
    %396 = vmatprep.subr.mxu0 0.0
    %397 = vmatpush1.msra.mxu0 %v364
    %398 = vmatprep.subr.mxu0 0.0
    %399 = vmatpush1.msra.mxu0 %v363
    %400 = vmatprep.subr.mxu0 0.0
    %401 = vmatpush1.msra.mxu0 %v362
    %402 = vmatprep.subr.mxu0 0.0
    %403 = vmatpush1.msra.mxu0 %v361
    %404 = vmatprep.subr.mxu0 0.0
    %405 = vmatpush2.msra.mxu0 0.0
    %406 = vmatprep.subr.mxu0 0.0
    %407 = vmatpush2.msra.mxu0 0.0
    %408 = vmatprep.subr.mxu0 0.0
    %409 = vmatpush2.msra.mxu0 0.0
    %410 = vmatprep.subr.mxu0 0.0
    %411 = vmatpush2.msra.mxu0 0.0
    %412 = vmatprep.subr.mxu0 0.0
    %413 = vmatpush2.msra.mxu0 0.0
    %414 = vmatprep.subr.mxu0 0.0
    %415 = vmatpush2.msra.mxu0 0.0
    %416 = vmatprep.subr.mxu0 0.0
    %417 = vmatpush2.msra.mxu0 0.0
    %418 = vmatprep.subr.mxu0 0.0
    %419 = vmatpush2.msra.mxu0 0.0
    %420 = vmatprep.subr.mxu0 0.0
    %421 = vmatpush2.msra.mxu0 0.0
    %422 = vmatprep.subr.mxu0 0.0
    %423 = vmatpush2.msra.mxu0 0.0
    %424 = vmatprep.subr.mxu0 0.0
    %425 = vmatpush2.msra.mxu0 0.0
    %426 = vmatprep.subr.mxu0 0.0
    %427 = vmatpush2.msra.mxu0 0.0
    %428 = vmatprep.subr.mxu0 0.0
    %429 = vmatpush2.msra.mxu0 0.0
    %430 = vmatprep.subr.mxu0 0.0
    %431 = vmatpush2.msra.mxu0 0.0
    %432 = vmatprep.subr.mxu0 0.0
    %433 = vmatpush2.msra.mxu0 0.0
    %434 = vmatprep.subr.mxu0 0.0
    %435 = vmatpush2.msra.mxu0 0.0
    %436 = vmatprep.mubr.f32.mxu0 0.0
    %437 = vmatmul.mubr.f32.gmra.mxu0 %v370
    %v438 = vpop.f32.mrf.mxu0
    %v439 = vadd.f32 %v367, %v438
    %v440 = vpop.f32.mrf.mxu0
    %441 = vdwg.mxu0
    %v443 = vlaneseq
    %v444 = vshrl.u32 %v443, 7
    %v445 = vsub.s32 0, %v444
    %v446 = vrot.slane %v210, %v445
    %v448 = vmul.f32 %v446, %v225
    %v450 = vlaneseq
    %v451 = vshrl.u32 %v450, 7
    %v452 = vsub.s32 0, %v451
    %v453 = vrot.slane %v211, %v452
    %v455 = vmul.f32 %v453, %v224
    %v456 = vadd.f32 %v448, %v455
    %v457 = vmul.f32 %v456, 1.8
    %v458 = vadd.f32 %v457, 0.01
    %v460 = vlaneseq
    %v461 = vshrl.u32 %v460, 7
    %v462 = vsub.s32 0, %v461
    %v463 = vrot.slane %v208, %v462
    %v465 = vmul.f32 %v223, %v463
    %v467 = vlaneseq
    %v468 = vshrl.u32 %v467, 7
    %v469 = vsub.s32 0, %v468
    %v470 = vrot.slane %v209, %v469
    %v472 = vmul.f32 %v470, %v439
    %v473 = vadd.f32 %v465, %v472
    %v474 = vmul.f32 %v458, %v224
    %v475 = vsub.f32 %v473, %v474
    %v476 = vsub.f32 %v475, %v458
    %vm477 = vcmp.gt.f32.partialorder %v476, 0.0
    %v478 = vsel %vm477, 1, 0
    %v479 = vcvt.s32.f32 %v478
    %v480 = vld [vmem:[#allocation14] sm:$0xff]
    %v481 = vld [vmem:[#allocation14 + $0x8] sm:$0xff]
    %v482 = vld [vmem:[#allocation14 + $0x10] sm:$0xff]
    %v483 = vld [vmem:[#allocation14 + $0x18] sm:$0xff]
    %v485 = vsel %vm238, %v479, 0
    %487 = vmatprep.subr.mxu0 0.0
    %488 = vmatpush1.msra.mxu0 0.0
    %489 = vmatprep.subr.mxu0 0.0
    %490 = vmatpush1.msra.mxu0 0.0
    %491 = vmatprep.subr.mxu0 0.0
    %492 = vmatpush1.msra.mxu0 0.0
    %493 = vmatprep.subr.mxu0 0.0
    %494 = vmatpush1.msra.mxu0 0.0
    %495 = vmatprep.subr.mxu0 0.0
    %496 = vmatpush1.msra.mxu0 0.0
    %497 = vmatprep.subr.mxu0 0.0
    %498 = vmatpush1.msra.mxu0 0.0
    %499 = vmatprep.subr.mxu0 0.0
    %500 = vmatpush1.msra.mxu0 0.0
    %501 = vmatprep.subr.mxu0 0.0
    %502 = vmatpush1.msra.mxu0 0.0
    %503 = vmatprep.subr.mxu0 0.0
    %504 = vmatpush1.msra.mxu0 0.0
    %505 = vmatprep.subr.mxu0 0.0
    %506 = vmatpush1.msra.mxu0 0.0
    %507 = vmatprep.subr.mxu0 0.0
    %508 = vmatpush1.msra.mxu0 0.0
    %509 = vmatprep.subr.mxu0 0.0
    %510 = vmatpush1.msra.mxu0 0.0
    %511 = vmatprep.subr.mxu0 0.0
    %512 = vmatpush1.msra.mxu0 %v483
    %513 = vmatprep.subr.mxu0 0.0
    %514 = vmatpush1.msra.mxu0 %v482
    %515 = vmatprep.subr.mxu0 0.0
    %516 = vmatpush1.msra.mxu0 %v481
    %517 = vmatprep.subr.mxu0 0.0
    %518 = vmatpush1.msra.mxu0 %v480
    %519 = vmatprep.subr.mxu0 0.0
    %520 = vmatpush2.msra.mxu0 0.0
    %521 = vmatprep.subr.mxu0 0.0
    %522 = vmatpush2.msra.mxu0 0.0
    %523 = vmatprep.subr.mxu0 0.0
    %524 = vmatpush2.msra.mxu0 0.0
    %525 = vmatprep.subr.mxu0 0.0
    %526 = vmatpush2.msra.mxu0 0.0
    %527 = vmatprep.subr.mxu0 0.0
    %528 = vmatpush2.msra.mxu0 0.0
    %529 = vmatprep.subr.mxu0 0.0
    %530 = vmatpush2.msra.mxu0 0.0
    %531 = vmatprep.subr.mxu0 0.0
    %532 = vmatpush2.msra.mxu0 0.0
    %533 = vmatprep.subr.mxu0 0.0
    %534 = vmatpush2.msra.mxu0 0.0
    %535 = vmatprep.subr.mxu0 0.0
    %536 = vmatpush2.msra.mxu0 0.0
    %537 = vmatprep.subr.mxu0 0.0
    %538 = vmatpush2.msra.mxu0 0.0
    %539 = vmatprep.subr.mxu0 0.0
    %540 = vmatpush2.msra.mxu0 0.0
    %541 = vmatprep.subr.mxu0 0.0
    %542 = vmatpush2.msra.mxu0 0.0
    %543 = vmatprep.subr.mxu0 0.0
    %544 = vmatpush2.msra.mxu0 0.0
    %545 = vmatprep.subr.mxu0 0.0
    %546 = vmatpush2.msra.mxu0 0.0
    %547 = vmatprep.subr.mxu0 0.0
    %548 = vmatpush2.msra.mxu0 0.0
    %549 = vmatprep.subr.mxu0 0.0
    %550 = vmatpush2.msra.mxu0 0.0
    %551 = vmatprep.mubr.f32.mxu0 0.0
    %552 = vmatmul.mubr.f32.gmra.mxu0 %v485
    %v553 = vpop.f32.mrf.mxu0
    %v554 = vadd.f32 0.0, %v553
    %v555 = vpop.f32.mrf.mxu0
    %556 = vdwg.mxu0
    %v558 = vlaneseq
    %v559 = vshrl.u32 %v558, 7
    %v560 = vsub.s32 0, %v559
    %v561 = vrot.slane %v214, %v560
    %v563 = vmul.f32 %v561, %v228
    %v565 = vlaneseq
    %v566 = vshrl.u32 %v565, 7
    %v567 = vsub.s32 0, %v566
    %v568 = vrot.slane %v215, %v567
    %v570 = vmul.f32 %v568, %v227
    %v571 = vadd.f32 %v563, %v570
    %v572 = vmul.f32 %v571, 1.8
    %v573 = vadd.f32 %v572, 0.01
    %v575 = vlaneseq
    %v576 = vshrl.u32 %v575, 7
    %v577 = vsub.s32 0, %v576
    %v578 = vrot.slane %v212, %v577
    %v580 = vmul.f32 %v226, %v578
    %v582 = vlaneseq
    %v583 = vshrl.u32 %v582, 7
    %v584 = vsub.s32 0, %v583
    %v585 = vrot.slane %v213, %v584
    %v587 = vmul.f32 %v585, %v554
    %v588 = vadd.f32 %v580, %v587
    %v589 = vmul.f32 %v573, %v227
    %v590 = vsub.f32 %v588, %v589
    %v591 = vsub.f32 %v590, %v573
    %vm592 = vcmp.gt.f32.partialorder %v591, 0.0
    %v593 = vsel %vm592, 1, 0
    %v594 = vcvt.s32.f32 %v593
    %v595 = vld [vmem:[#allocation17] sm:$0xff]
    %v596 = vld [vmem:[#allocation17 + $0x8] sm:$0xff]
    %v597 = vld [vmem:[#allocation17 + $0x10] sm:$0xff]
    %v598 = vld [vmem:[#allocation17 + $0x18] sm:$0xff]
    %v600 = vsel %vm238, %v594, 0
    %602 = vmatprep.subr.mxu0 0.0
    %603 = vmatpush1.msra.mxu0 0.0
    %604 = vmatprep.subr.mxu0 0.0
    %605 = vmatpush1.msra.mxu0 0.0
    %606 = vmatprep.subr.mxu0 0.0
    %607 = vmatpush1.msra.mxu0 0.0
    %608 = vmatprep.subr.mxu0 0.0
    %609 = vmatpush1.msra.mxu0 0.0
    %610 = vmatprep.subr.mxu0 0.0
    %611 = vmatpush1.msra.mxu0 0.0
    %612 = vmatprep.subr.mxu0 0.0
    %613 = vmatpush1.msra.mxu0 0.0
    %614 = vmatprep.subr.mxu0 0.0
    %615 = vmatpush1.msra.mxu0 0.0
    %616 = vmatprep.subr.mxu0 0.0
    %617 = vmatpush1.msra.mxu0 0.0
    %618 = vmatprep.subr.mxu0 0.0
    %619 = vmatpush1.msra.mxu0 0.0
    %620 = vmatprep.subr.mxu0 0.0
    %621 = vmatpush1.msra.mxu0 0.0
    %622 = vmatprep.subr.mxu0 0.0
    %623 = vmatpush1.msra.mxu0 0.0
    %624 = vmatprep.subr.mxu0 0.0
    %625 = vmatpush1.msra.mxu0 0.0
    %626 = vmatprep.subr.mxu0 0.0
    %627 = vmatpush1.msra.mxu0 %v598
    %628 = vmatprep.subr.mxu0 0.0
    %629 = vmatpush1.msra.mxu0 %v597
    %630 = vmatprep.subr.mxu0 0.0
    %631 = vmatpush1.msra.mxu0 %v596
    %632 = vmatprep.subr.mxu0 0.0
    %633 = vmatpush1.msra.mxu0 %v595
    %634 = vmatprep.subr.mxu0 0.0
    %635 = vmatpush2.msra.mxu0 0.0
    %636 = vmatprep.subr.mxu0 0.0
    %637 = vmatpush2.msra.mxu0 0.0
    %638 = vmatprep.subr.mxu0 0.0
    %639 = vmatpush2.msra.mxu0 0.0
    %640 = vmatprep.subr.mxu0 0.0
    %641 = vmatpush2.msra.mxu0 0.0
    %642 = vmatprep.subr.mxu0 0.0
    %643 = vmatpush2.msra.mxu0 0.0
    %644 = vmatprep.subr.mxu0 0.0
    %645 = vmatpush2.msra.mxu0 0.0
    %646 = vmatprep.subr.mxu0 0.0
    %647 = vmatpush2.msra.mxu0 0.0
    %648 = vmatprep.subr.mxu0 0.0
    %649 = vmatpush2.msra.mxu0 0.0
    %650 = vmatprep.subr.mxu0 0.0
    %651 = vmatpush2.msra.mxu0 0.0
    %652 = vmatprep.subr.mxu0 0.0
    %653 = vmatpush2.msra.mxu0 0.0
    %654 = vmatprep.subr.mxu0 0.0
    %655 = vmatpush2.msra.mxu0 0.0
    %656 = vmatprep.subr.mxu0 0.0
    %657 = vmatpush2.msra.mxu0 0.0
    %658 = vmatprep.subr.mxu0 0.0
    %659 = vmatpush2.msra.mxu0 0.0
    %660 = vmatprep.subr.mxu0 0.0
    %661 = vmatpush2.msra.mxu0 0.0
    %662 = vmatprep.subr.mxu0 0.0
    %663 = vmatpush2.msra.mxu0 0.0
    %664 = vmatprep.subr.mxu0 0.0
    %665 = vmatpush2.msra.mxu0 0.0
    %666 = vmatprep.mubr.f32.mxu0 0.0
    %667 = vmatmul.mubr.f32.gmra.mxu0 %v600
    %v668 = vpop.f32.mrf.mxu0
    %v669 = vadd.f32 0.0, %v668
    %v670 = vpop.f32.mrf.mxu0
    %671 = vdwg.mxu0
    %v673 = vlaneseq
    %v674 = vshrl.u32 %v673, 7
    %v675 = vsub.s32 0, %v674
    %v676 = vrot.slane %v218, %v675
    %v678 = vmul.f32 %v676, %v231
    %v680 = vlaneseq
    %v681 = vshrl.u32 %v680, 7
    %v682 = vsub.s32 0, %v681
    %v683 = vrot.slane %v219, %v682
    %v685 = vmul.f32 %v683, %v230
    %v686 = vadd.f32 %v678, %v685
    %v687 = vmul.f32 %v686, 1.8
    %v688 = vadd.f32 %v687, 0.01
    %v690 = vlaneseq
    %v691 = vshrl.u32 %v690, 7
    %v692 = vsub.s32 0, %v691
    %v693 = vrot.slane %v216, %v692
    %v695 = vmul.f32 %v229, %v693
    %v697 = vlaneseq
    %v698 = vshrl.u32 %v697, 7
    %v699 = vsub.s32 0, %v698
    %v700 = vrot.slane %v217, %v699
    %v702 = vmul.f32 %v700, %v669
    %v703 = vadd.f32 %v695, %v702
    %v704 = vmul.f32 %v688, %v230
    %v705 = vsub.f32 %v703, %v704
    %v706 = vsub.f32 %v705, %v688
    %vm707 = vcmp.gt.f32.partialorder %v706, 0.0
    %v708 = vsel %vm707, 1, 0
    %v709 = vcvt.s32.f32 %v708
    %v710 = vadd.f32 %v232, %v709
    %v711 = vld [vmem:[%s0 + $0x8] sm:$0xff]
    %712 = vrot.lane.b32.xlu0 %v479, 32
    %v713 = vpop.permute.xlu0 %712
    %v715 = vsel %vm238, %v360, %v713
    %v717 = vsel %vm248, %v715, 0
    %719 = vmatprep.subr.mxu0 0.0
    %720 = vmatpush1.msra.mxu0 0.0
    %721 = vmatprep.subr.mxu0 0.0
    %722 = vmatpush1.msra.mxu0 0.0
    %723 = vmatprep.subr.mxu0 0.0
    %724 = vmatpush1.msra.mxu0 0.0
    %725 = vmatprep.subr.mxu0 0.0
    %726 = vmatpush1.msra.mxu0 0.0
    %727 = vmatprep.subr.mxu0 0.0
    %728 = vmatpush1.msra.mxu0 0.0
    %729 = vmatprep.subr.mxu0 0.0
    %730 = vmatpush1.msra.mxu0 0.0
    %731 = vmatprep.subr.mxu0 0.0
    %732 = vmatpush1.msra.mxu0 0.0
    %733 = vmatprep.subr.mxu0 0.0
    %734 = vmatpush1.msra.mxu0 0.0
    %735 = vmatprep.subr.mxu0 0.0
    %736 = vmatpush1.msra.mxu0 %v247
    %737 = vmatprep.subr.mxu0 0.0
    %738 = vmatpush1.msra.mxu0 %v246
    %739 = vmatprep.subr.mxu0 0.0
    %740 = vmatpush1.msra.mxu0 %v245
    %741 = vmatprep.subr.mxu0 0.0
    %742 = vmatpush1.msra.mxu0 %v244
    %743 = vmatprep.subr.mxu0 0.0
    %744 = vmatpush1.msra.mxu0 %v243
    %745 = vmatprep.subr.mxu0 0.0
    %746 = vmatpush1.msra.mxu0 %v242
    %747 = vmatprep.subr.mxu0 0.0
    %748 = vmatpush1.msra.mxu0 %v241
    %749 = vmatprep.subr.mxu0 0.0
    %750 = vmatpush1.msra.mxu0 %v240
    %751 = vmatprep.subr.mxu0 0.0
    %752 = vmatpush2.msra.mxu0 0.0
    %753 = vmatprep.subr.mxu0 0.0
    %754 = vmatpush2.msra.mxu0 0.0
    %755 = vmatprep.subr.mxu0 0.0
    %756 = vmatpush2.msra.mxu0 0.0
    %757 = vmatprep.subr.mxu0 0.0
    %758 = vmatpush2.msra.mxu0 0.0
    %759 = vmatprep.subr.mxu0 0.0
    %760 = vmatpush2.msra.mxu0 0.0
    %761 = vmatprep.subr.mxu0 0.0
    %762 = vmatpush2.msra.mxu0 0.0
    %763 = vmatprep.subr.mxu0 0.0
    %764 = vmatpush2.msra.mxu0 0.0
    %765 = vmatprep.subr.mxu0 0.0
    %766 = vmatpush2.msra.mxu0 0.0
    %767 = vmatprep.subr.mxu0 0.0
    %768 = vmatpush2.msra.mxu0 0.0
    %769 = vmatprep.subr.mxu0 0.0
    %770 = vmatpush2.msra.mxu0 0.0
    %771 = vmatprep.subr.mxu0 0.0
    %772 = vmatpush2.msra.mxu0 0.0
    %773 = vmatprep.subr.mxu0 0.0
    %774 = vmatpush2.msra.mxu0 0.0
    %775 = vmatprep.subr.mxu0 0.0
    %776 = vmatpush2.msra.mxu0 0.0
    %777 = vmatprep.subr.mxu0 0.0
    %778 = vmatpush2.msra.mxu0 0.0
    %779 = vmatprep.subr.mxu0 0.0
    %780 = vmatpush2.msra.mxu0 0.0
    %781 = vmatprep.subr.mxu0 0.0
    %782 = vmatpush2.msra.mxu0 0.0
    %783 = vmatprep.mubr.f32.mxu0 0.0
    %784 = vmatmul.mubr.f32.gmra.mxu0 %v717
    %v785 = vpop.f32.mrf.mxu0
    %v786 = vadd.f32 0.0, %v785
    %v787 = vpop.f32.mrf.mxu0
    %788 = vdwg.mxu0
    %v789 = vadd.f32 %v711, %v786
    %v790 = vmul.f32 %v327, %v337
    %v791 = vmul.f32 %v334, %v360
    %v792 = vadd.f32 %v790, %v791
    %v793 = vmul.f32 %v792, 1.8
    %v794 = vadd.f32 %v793, 0.01
    %v795 = vmul.f32 %v356, %v344
    %v796 = vmul.f32 %v351, %v789
    %v797 = vadd.f32 %v795, %v796
    %v798 = vmul.f32 %v794, %v360
    %v799 = vsub.f32 %v797, %v798
    %v800 = vsub.f32 %v799, %v794
    %vm801 = vcmp.gt.f32.partialorder %v800, 0.0
    %v802 = vsel %vm801, 1, 0
    %v803 = vcvt.s32.f32 %v802
    %805 = vrot.lane.b32.xlu0 %v786, 96
    %v806 = vpop.permute.xlu0 %805
    %v809 = vsel %vm238, %v803, 0
    %811 = vmatprep.subr.mxu0 0.0
    %812 = vmatpush1.msra.mxu0 0.0
    %813 = vmatprep.subr.mxu0 0.0
    %814 = vmatpush1.msra.mxu0 0.0
    %815 = vmatprep.subr.mxu0 0.0
    %816 = vmatpush1.msra.mxu0 0.0
    %817 = vmatprep.subr.mxu0 0.0
    %818 = vmatpush1.msra.mxu0 0.0
    %819 = vmatprep.subr.mxu0 0.0
    %820 = vmatpush1.msra.mxu0 0.0
    %821 = vmatprep.subr.mxu0 0.0
    %822 = vmatpush1.msra.mxu0 0.0
    %823 = vmatprep.subr.mxu0 0.0
    %824 = vmatpush1.msra.mxu0 0.0
    %825 = vmatprep.subr.mxu0 0.0
    %826 = vmatpush1.msra.mxu0 0.0
    %827 = vmatprep.subr.mxu0 0.0
    %828 = vmatpush1.msra.mxu0 0.0
    %829 = vmatprep.subr.mxu0 0.0
    %830 = vmatpush1.msra.mxu0 0.0
    %831 = vmatprep.subr.mxu0 0.0
    %832 = vmatpush1.msra.mxu0 0.0
    %833 = vmatprep.subr.mxu0 0.0
    %834 = vmatpush1.msra.mxu0 0.0
    %835 = vmatprep.subr.mxu0 0.0
    %836 = vmatpush1.msra.mxu0 %v364
    %837 = vmatprep.subr.mxu0 0.0
    %838 = vmatpush1.msra.mxu0 %v363
    %839 = vmatprep.subr.mxu0 0.0
    %840 = vmatpush1.msra.mxu0 %v362
    %841 = vmatprep.subr.mxu0 0.0
    %842 = vmatpush1.msra.mxu0 %v361
    %843 = vmatprep.subr.mxu0 0.0
    %844 = vmatpush2.msra.mxu0 0.0
    %845 = vmatprep.subr.mxu0 0.0
    %846 = vmatpush2.msra.mxu0 0.0
    %847 = vmatprep.subr.mxu0 0.0
    %848 = vmatpush2.msra.mxu0 0.0
    %849 = vmatprep.subr.mxu0 0.0
    %850 = vmatpush2.msra.mxu0 0.0
    %851 = vmatprep.subr.mxu0 0.0
    %852 = vmatpush2.msra.mxu0 0.0
    %853 = vmatprep.subr.mxu0 0.0
    %854 = vmatpush2.msra.mxu0 0.0
    %855 = vmatprep.subr.mxu0 0.0
    %856 = vmatpush2.msra.mxu0 0.0
    %857 = vmatprep.subr.mxu0 0.0
    %858 = vmatpush2.msra.mxu0 0.0
    %859 = vmatprep.subr.mxu0 0.0
    %860 = vmatpush2.msra.mxu0 0.0
    %861 = vmatprep.subr.mxu0 0.0
    %862 = vmatpush2.msra.mxu0 0.0
    %863 = vmatprep.subr.mxu0 0.0
    %864 = vmatpush2.msra.mxu0 0.0
    %865 = vmatprep.subr.mxu0 0.0
    %866 = vmatpush2.msra.mxu0 0.0
    %867 = vmatprep.subr.mxu0 0.0
    %868 = vmatpush2.msra.mxu0 0.0
    %869 = vmatprep.subr.mxu0 0.0
    %870 = vmatpush2.msra.mxu0 0.0
    %871 = vmatprep.subr.mxu0 0.0
    %872 = vmatpush2.msra.mxu0 0.0
    %873 = vmatprep.subr.mxu0 0.0
    %874 = vmatpush2.msra.mxu0 0.0
    %875 = vmatprep.mubr.f32.mxu0 0.0
    %876 = vmatmul.mubr.f32.gmra.mxu0 %v809
    %v877 = vpop.f32.mrf.mxu0
    %v878 = vadd.f32 %v806, %v877
    %v879 = vpop.f32.mrf.mxu0
    %880 = vdwg.mxu0
    %v881 = vmul.f32 %v446, %v456
    %v882 = vmul.f32 %v453, %v479
    %v883 = vadd.f32 %v881, %v882
    %v884 = vmul.f32 %v883, 1.8
    %v885 = vadd.f32 %v884, 0.01
    %v886 = vmul.f32 %v475, %v463
    %v887 = vmul.f32 %v470, %v878
    %v888 = vadd.f32 %v886, %v887
    %v889 = vmul.f32 %v885, %v479
    %v890 = vsub.f32 %v888, %v889
    %v891 = vsub.f32 %v890, %v885
    %vm892 = vcmp.gt.f32.partialorder %v891, 0.0
    %v893 = vsel %vm892, 1, 0
    %v894 = vcvt.s32.f32 %v893
    %v896 = vsel %vm238, %v894, 0
    %898 = vmatprep.subr.mxu0 0.0
    %899 = vmatpush1.msra.mxu0 0.0
    %900 = vmatprep.subr.mxu0 0.0
    %901 = vmatpush1.msra.mxu0 0.0
    %902 = vmatprep.subr.mxu0 0.0
    %903 = vmatpush1.msra.mxu0 0.0
    %904 = vmatprep.subr.mxu0 0.0
    %905 = vmatpush1.msra.mxu0 0.0
    %906 = vmatprep.subr.mxu0 0.0
    %907 = vmatpush1.msra.mxu0 0.0
    %908 = vmatprep.subr.mxu0 0.0
    %909 = vmatpush1.msra.mxu0 0.0
    %910 = vmatprep.subr.mxu0 0.0
    %911 = vmatpush1.msra.mxu0 0.0
    %912 = vmatprep.subr.mxu0 0.0
    %913 = vmatpush1.msra.mxu0 0.0
    %914 = vmatprep.subr.mxu0 0.0
    %915 = vmatpush1.msra.mxu0 0.0
    %916 = vmatprep.subr.mxu0 0.0
    %917 = vmatpush1.msra.mxu0 0.0
    %918 = vmatprep.subr.mxu0 0.0
    %919 = vmatpush1.msra.mxu0 0.0
    %920 = vmatprep.subr.mxu0 0.0
    %921 = vmatpush1.msra.mxu0 0.0
    %922 = vmatprep.subr.mxu0 0.0
    %923 = vmatpush1.msra.mxu0 %v483
    %924 = vmatprep.subr.mxu0 0.0
    %925 = vmatpush1.msra.mxu0 %v482
    %926 = vmatprep.subr.mxu0 0.0
    %927 = vmatpush1.msra.mxu0 %v481
    %928 = vmatprep.subr.mxu0 0.0
    %929 = vmatpush1.msra.mxu0 %v480
    %930 = vmatprep.subr.mxu0 0.0
    %931 = vmatpush2.msra.mxu0 0.0
    %932 = vmatprep.subr.mxu0 0.0
    %933 = vmatpush2.msra.mxu0 0.0
    %934 = vmatprep.subr.mxu0 0.0
    %935 = vmatpush2.msra.mxu0 0.0
    %936 = vmatprep.subr.mxu0 0.0
    %937 = vmatpush2.msra.mxu0 0.0
    %938 = vmatprep.subr.mxu0 0.0
    %939 = vmatpush2.msra.mxu0 0.0
    %940 = vmatprep.subr.mxu0 0.0
    %941 = vmatpush2.msra.mxu0 0.0
    %942 = vmatprep.subr.mxu0 0.0
    %943 = vmatpush2.msra.mxu0 0.0
    %944 = vmatprep.subr.mxu0 0.0
    %945 = vmatpush2.msra.mxu0 0.0
    %946 = vmatprep.subr.mxu0 0.0
    %947 = vmatpush2.msra.mxu0 0.0
    %948 = vmatprep.subr.mxu0 0.0
    %949 = vmatpush2.msra.mxu0 0.0
    %950 = vmatprep.subr.mxu0 0.0
    %951 = vmatpush2.msra.mxu0 0.0
    %952 = vmatprep.subr.mxu0 0.0
    %953 = vmatpush2.msra.mxu0 0.0
    %954 = vmatprep.subr.mxu0 0.0
    %955 = vmatpush2.msra.mxu0 0.0
    %956 = vmatprep.subr.mxu0 0.0
    %957 = vmatpush2.msra.mxu0 0.0
    %958 = vmatprep.subr.mxu0 0.0
    %959 = vmatpush2.msra.mxu0 0.0
    %960 = vmatprep.subr.mxu0 0.0
    %961 = vmatpush2.msra.mxu0 0.0
    %962 = vmatprep.mubr.f32.mxu0 0.0
    %963 = vmatmul.mubr.f32.gmra.mxu0 %v896
    %v964 = vpop.f32.mrf.mxu0
    %v965 = vadd.f32 0.0, %v964
    %v966 = vpop.f32.mrf.mxu0
    %967 = vdwg.mxu0
    %v968 = vmul.f32 %v561, %v571
    %v969 = vmul.f32 %v568, %v594
    %v970 = vadd.f32 %v968, %v969
    %v971 = vmul.f32 %v970, 1.8
    %v972 = vadd.f32 %v971, 0.01
    %v973 = vmul.f32 %v590, %v578
    %v974 = vmul.f32 %v585, %v965
    %v975 = vadd.f32 %v973, %v974
    %v976 = vmul.f32 %v972, %v594
    %v977 = vsub.f32 %v975, %v976
    %v978 = vsub.f32 %v977, %v972
    %vm979 = vcmp.gt.f32.partialorder %v978, 0.0
    %v980 = vsel %vm979, 1, 0
    %v981 = vcvt.s32.f32 %v980
    %v983 = vsel %vm238, %v981, 0
    %985 = vmatprep.subr.mxu0 0.0
    %986 = vmatpush1.msra.mxu0 0.0
    %987 = vmatprep.subr.mxu0 0.0
    %988 = vmatpush1.msra.mxu0 0.0
    %989 = vmatprep.subr.mxu0 0.0
    %990 = vmatpush1.msra.mxu0 0.0
    %991 = vmatprep.subr.mxu0 0.0
    %992 = vmatpush1.msra.mxu0 0.0
    %993 = vmatprep.subr.mxu0 0.0
    %994 = vmatpush1.msra.mxu0 0.0
    %995 = vmatprep.subr.mxu0 0.0
    %996 = vmatpush1.msra.mxu0 0.0
    %997 = vmatprep.subr.mxu0 0.0
    %998 = vmatpush1.msra.mxu0 0.0
    %999 = vmatprep.subr.mxu0 0.0
    %1000 = vmatpush1.msra.mxu0 0.0
    %1001 = vmatprep.subr.mxu0 0.0
    %1002 = vmatpush1.msra.mxu0 0.0
    %1003 = vmatprep.subr.mxu0 0.0
    %1004 = vmatpush1.msra.mxu0 0.0
    %1005 = vmatprep.subr.mxu0 0.0
    %1006 = vmatpush1.msra.mxu0 0.0
    %1007 = vmatprep.subr.mxu0 0.0
    %1008 = vmatpush1.msra.mxu0 0.0
    %1009 = vmatprep.subr.mxu0 0.0
    %1010 = vmatpush1.msra.mxu0 %v598
    %1011 = vmatprep.subr.mxu0 0.0
    %1012 = vmatpush1.msra.mxu0 %v597
    %1013 = vmatprep.subr.mxu0 0.0
    %1014 = vmatpush1.msra.mxu0 %v596
    %1015 = vmatprep.subr.mxu0 0.0
    %1016 = vmatpush1.msra.mxu0 %v595
    %1017 = vmatprep.subr.mxu0 0.0
    %1018 = vmatpush2.msra.mxu0 0.0
    %1019 = vmatprep.subr.mxu0 0.0
    %1020 = vmatpush2.msra.mxu0 0.0
    %1021 = vmatprep.subr.mxu0 0.0
    %1022 = vmatpush2.msra.mxu0 0.0
    %1023 = vmatprep.subr.mxu0 0.0
    %1024 = vmatpush2.msra.mxu0 0.0
    %1025 = vmatprep.subr.mxu0 0.0
    %1026 = vmatpush2.msra.mxu0 0.0
    %1027 = vmatprep.subr.mxu0 0.0
    %1028 = vmatpush2.msra.mxu0 0.0
    %1029 = vmatprep.subr.mxu0 0.0
    %1030 = vmatpush2.msra.mxu0 0.0
    %1031 = vmatprep.subr.mxu0 0.0
    %1032 = vmatpush2.msra.mxu0 0.0
    %1033 = vmatprep.subr.mxu0 0.0
    %1034 = vmatpush2.msra.mxu0 0.0
    %1035 = vmatprep.subr.mxu0 0.0
    %1036 = vmatpush2.msra.mxu0 0.0
    %1037 = vmatprep.subr.mxu0 0.0
    %1038 = vmatpush2.msra.mxu0 0.0
    %1039 = vmatprep.subr.mxu0 0.0
    %1040 = vmatpush2.msra.mxu0 0.0
    %1041 = vmatprep.subr.mxu0 0.0
    %1042 = vmatpush2.msra.mxu0 0.0
    %1043 = vmatprep.subr.mxu0 0.0
    %1044 = vmatpush2.msra.mxu0 0.0
    %1045 = vmatprep.subr.mxu0 0.0
    %1046 = vmatpush2.msra.mxu0 0.0
    %1047 = vmatprep.subr.mxu0 0.0
    %1048 = vmatpush2.msra.mxu0 0.0
    %1049 = vmatprep.mubr.f32.mxu0 0.0
    %1050 = vmatmul.mubr.f32.gmra.mxu0 %v983
    %v1051 = vpop.f32.mrf.mxu0
    %v1052 = vadd.f32 0.0, %v1051
    %v1053 = vpop.f32.mrf.mxu0
    %1054 = vdwg.mxu0
    %v1055 = vmul.f32 %v676, %v686
    %v1056 = vmul.f32 %v683, %v709
    %v1057 = vadd.f32 %v1055, %v1056
    %v1058 = vmul.f32 %v1057, 1.8
    %v1059 = vadd.f32 %v1058, 0.01
    %v1060 = vmul.f32 %v705, %v693
    %v1061 = vmul.f32 %v700, %v1052
    %v1062 = vadd.f32 %v1060, %v1061
    %v1063 = vmul.f32 %v1059, %v709
    %v1064 = vsub.f32 %v1062, %v1063
    %v1065 = vsub.f32 %v1064, %v1059
    %vm1066 = vcmp.gt.f32.partialorder %v1065, 0.0
    %v1067 = vsel %vm1066, 1, 0
    %v1068 = vcvt.s32.f32 %v1067
    %v1069 = vadd.f32 %v710, %v1068
    %v1070 = vld [vmem:[%s0 + $0x10] sm:$0xff]
    %1071 = vrot.lane.b32.xlu0 %v894, 32
    %v1072 = vpop.permute.xlu0 %1071
    %v1074 = vsel %vm238, %v803, %v1072
    %v1076 = vsel %vm248, %v1074, 0
    %1078 = vmatprep.subr.mxu0 0.0
    %1079 = vmatpush1.msra.mxu0 0.0
    %1080 = vmatprep.subr.mxu0 0.0
    %1081 = vmatpush1.msra.mxu0 0.0
    %1082 = vmatprep.subr.mxu0 0.0
    %1083 = vmatpush1.msra.mxu0 0.0
    %1084 = vmatprep.subr.mxu0 0.0
    %1085 = vmatpush1.msra.mxu0 0.0
    %1086 = vmatprep.subr.mxu0 0.0
    %1087 = vmatpush1.msra.mxu0 0.0
    %1088 = vmatprep.subr.mxu0 0.0
    %1089 = vmatpush1.msra.mxu0 0.0
    %1090 = vmatprep.subr.mxu0 0.0
    %1091 = vmatpush1.msra.mxu0 0.0
    %1092 = vmatprep.subr.mxu0 0.0
    %1093 = vmatpush1.msra.mxu0 0.0
    %1094 = vmatprep.subr.mxu0 0.0
    %1095 = vmatpush1.msra.mxu0 %v247
    %1096 = vmatprep.subr.mxu0 0.0
    %1097 = vmatpush1.msra.mxu0 %v246
    %1098 = vmatprep.subr.mxu0 0.0
    %1099 = vmatpush1.msra.mxu0 %v245
    %1100 = vmatprep.subr.mxu0 0.0
    %1101 = vmatpush1.msra.mxu0 %v244
    %1102 = vmatprep.subr.mxu0 0.0
    %1103 = vmatpush1.msra.mxu0 %v243
    %1104 = vmatprep.subr.mxu0 0.0
    %1105 = vmatpush1.msra.mxu0 %v242
    %1106 = vmatprep.subr.mxu0 0.0
    %1107 = vmatpush1.msra.mxu0 %v241
    %1108 = vmatprep.subr.mxu0 0.0
    %1109 = vmatpush1.msra.mxu0 %v240
    %1110 = vmatprep.subr.mxu0 0.0
    %1111 = vmatpush2.msra.mxu0 0.0
    %1112 = vmatprep.subr.mxu0 0.0
    %1113 = vmatpush2.msra.mxu0 0.0
    %1114 = vmatprep.subr.mxu0 0.0
    %1115 = vmatpush2.msra.mxu0 0.0
    %1116 = vmatprep.subr.mxu0 0.0
    %1117 = vmatpush2.msra.mxu0 0.0
    %1118 = vmatprep.subr.mxu0 0.0
    %1119 = vmatpush2.msra.mxu0 0.0
    %1120 = vmatprep.subr.mxu0 0.0
    %1121 = vmatpush2.msra.mxu0 0.0
    %1122 = vmatprep.subr.mxu0 0.0
    %1123 = vmatpush2.msra.mxu0 0.0
    %1124 = vmatprep.subr.mxu0 0.0
    %1125 = vmatpush2.msra.mxu0 0.0
    %1126 = vmatprep.subr.mxu0 0.0
    %1127 = vmatpush2.msra.mxu0 0.0
    %1128 = vmatprep.subr.mxu0 0.0
    %1129 = vmatpush2.msra.mxu0 0.0
    %1130 = vmatprep.subr.mxu0 0.0
    %1131 = vmatpush2.msra.mxu0 0.0
    %1132 = vmatprep.subr.mxu0 0.0
    %1133 = vmatpush2.msra.mxu0 0.0
    %1134 = vmatprep.subr.mxu0 0.0
    %1135 = vmatpush2.msra.mxu0 0.0
    %1136 = vmatprep.subr.mxu0 0.0
    %1137 = vmatpush2.msra.mxu0 0.0
    %1138 = vmatprep.subr.mxu0 0.0
    %1139 = vmatpush2.msra.mxu0 0.0
    %1140 = vmatprep.subr.mxu0 0.0
    %1141 = vmatpush2.msra.mxu0 0.0
    %1142 = vmatprep.mubr.f32.mxu0 0.0
    %1143 = vmatmul.mubr.f32.gmra.mxu0 %v1076
    %v1144 = vpop.f32.mrf.mxu0
    %v1145 = vadd.f32 0.0, %v1144
    %v1146 = vpop.f32.mrf.mxu0
    %1147 = vdwg.mxu0
    %v1148 = vadd.f32 %v1070, %v1145
    %v1149 = vmul.f32 %v327, %v792
    %v1150 = vmul.f32 %v334, %v803
    %v1151 = vadd.f32 %v1149, %v1150
    %v1152 = vmul.f32 %v1151, 1.8
    %v1153 = vadd.f32 %v1152, 0.01
    %v1154 = vmul.f32 %v799, %v344
    %v1155 = vmul.f32 %v351, %v1148
    %v1156 = vadd.f32 %v1154, %v1155
    %v1157 = vmul.f32 %v1153, %v803
    %v1158 = vsub.f32 %v1156, %v1157
    %v1159 = vsub.f32 %v1158, %v1153
    %vm1160 = vcmp.gt.f32.partialorder %v1159, 0.0
    %v1161 = vsel %vm1160, 1, 0
    %v1162 = vcvt.s32.f32 %v1161
    %1164 = vrot.lane.b32.xlu0 %v1145, 96
    %v1165 = vpop.permute.xlu0 %1164
    %v1168 = vsel %vm238, %v1162, 0
    %1170 = vmatprep.subr.mxu0 0.0
    %1171 = vmatpush1.msra.mxu0 0.0
    %1172 = vmatprep.subr.mxu0 0.0
    %1173 = vmatpush1.msra.mxu0 0.0
    %1174 = vmatprep.subr.mxu0 0.0
    %1175 = vmatpush1.msra.mxu0 0.0
    %1176 = vmatprep.subr.mxu0 0.0
    %1177 = vmatpush1.msra.mxu0 0.0
    %1178 = vmatprep.subr.mxu0 0.0
    %1179 = vmatpush1.msra.mxu0 0.0
    %1180 = vmatprep.subr.mxu0 0.0
    %1181 = vmatpush1.msra.mxu0 0.0
    %1182 = vmatprep.subr.mxu0 0.0
    %1183 = vmatpush1.msra.mxu0 0.0
    %1184 = vmatprep.subr.mxu0 0.0
    %1185 = vmatpush1.msra.mxu0 0.0
    %1186 = vmatprep.subr.mxu0 0.0
    %1187 = vmatpush1.msra.mxu0 0.0
    %1188 = vmatprep.subr.mxu0 0.0
    %1189 = vmatpush1.msra.mxu0 0.0
    %1190 = vmatprep.subr.mxu0 0.0
    %1191 = vmatpush1.msra.mxu0 0.0
    %1192 = vmatprep.subr.mxu0 0.0
    %1193 = vmatpush1.msra.mxu0 0.0
    %1194 = vmatprep.subr.mxu0 0.0
    %1195 = vmatpush1.msra.mxu0 %v364
    %1196 = vmatprep.subr.mxu0 0.0
    %1197 = vmatpush1.msra.mxu0 %v363
    %1198 = vmatprep.subr.mxu0 0.0
    %1199 = vmatpush1.msra.mxu0 %v362
    %1200 = vmatprep.subr.mxu0 0.0
    %1201 = vmatpush1.msra.mxu0 %v361
    %1202 = vmatprep.subr.mxu0 0.0
    %1203 = vmatpush2.msra.mxu0 0.0
    %1204 = vmatprep.subr.mxu0 0.0
    %1205 = vmatpush2.msra.mxu0 0.0
    %1206 = vmatprep.subr.mxu0 0.0
    %1207 = vmatpush2.msra.mxu0 0.0
    %1208 = vmatprep.subr.mxu0 0.0
    %1209 = vmatpush2.msra.mxu0 0.0
    %1210 = vmatprep.subr.mxu0 0.0
    %1211 = vmatpush2.msra.mxu0 0.0
    %1212 = vmatprep.subr.mxu0 0.0
    %1213 = vmatpush2.msra.mxu0 0.0
    %1214 = vmatprep.subr.mxu0 0.0
    %1215 = vmatpush2.msra.mxu0 0.0
    %1216 = vmatprep.subr.mxu0 0.0
    %1217 = vmatpush2.msra.mxu0 0.0
    %1218 = vmatprep.subr.mxu0 0.0
    %1219 = vmatpush2.msra.mxu0 0.0
    %1220 = vmatprep.subr.mxu0 0.0
    %1221 = vmatpush2.msra.mxu0 0.0
    %1222 = vmatprep.subr.mxu0 0.0
    %1223 = vmatpush2.msra.mxu0 0.0
    %1224 = vmatprep.subr.mxu0 0.0
    %1225 = vmatpush2.msra.mxu0 0.0
    %1226 = vmatprep.subr.mxu0 0.0
    %1227 = vmatpush2.msra.mxu0 0.0
    %1228 = vmatprep.subr.mxu0 0.0
    %1229 = vmatpush2.msra.mxu0 0.0
    %1230 = vmatprep.subr.mxu0 0.0
    %1231 = vmatpush2.msra.mxu0 0.0
    %1232 = vmatprep.subr.mxu0 0.0
    %1233 = vmatpush2.msra.mxu0 0.0
    %1234 = vmatprep.mubr.f32.mxu0 0.0
    %1235 = vmatmul.mubr.f32.gmra.mxu0 %v1168
    %v1236 = vpop.f32.mrf.mxu0
    %v1237 = vadd.f32 %v1165, %v1236
    %v1238 = vpop.f32.mrf.mxu0
    %1239 = vdwg.mxu0
    %v1240 = vmul.f32 %v446, %v883
    %v1241 = vmul.f32 %v453, %v894
    %v1242 = vadd.f32 %v1240, %v1241
    %v1243 = vmul.f32 %v1242, 1.8
    %v1244 = vadd.f32 %v1243, 0.01
    %v1245 = vmul.f32 %v890, %v463
    %v1246 = vmul.f32 %v470, %v1237
    %v1247 = vadd.f32 %v1245, %v1246
    %v1248 = vmul.f32 %v1244, %v894
    %v1249 = vsub.f32 %v1247, %v1248
    %v1250 = vsub.f32 %v1249, %v1244
    %vm1251 = vcmp.gt.f32.partialorder %v1250, 0.0
    %v1252 = vsel %vm1251, 1, 0
    %v1253 = vcvt.s32.f32 %v1252
    %v1255 = vsel %vm238, %v1253, 0
    %1257 = vmatprep.subr.mxu0 0.0
    %1258 = vmatpush1.msra.mxu0 0.0
    %1259 = vmatprep.subr.mxu0 0.0
    %1260 = vmatpush1.msra.mxu0 0.0
    %1261 = vmatprep.subr.mxu0 0.0
    %1262 = vmatpush1.msra.mxu0 0.0
    %1263 = vmatprep.subr.mxu0 0.0
    %1264 = vmatpush1.msra.mxu0 0.0
    %1265 = vmatprep.subr.mxu0 0.0
    %1266 = vmatpush1.msra.mxu0 0.0
    %1267 = vmatprep.subr.mxu0 0.0
    %1268 = vmatpush1.msra.mxu0 0.0
    %1269 = vmatprep.subr.mxu0 0.0
    %1270 = vmatpush1.msra.mxu0 0.0
    %1271 = vmatprep.subr.mxu0 0.0
    %1272 = vmatpush1.msra.mxu0 0.0
    %1273 = vmatprep.subr.mxu0 0.0
    %1274 = vmatpush1.msra.mxu0 0.0
    %1275 = vmatprep.subr.mxu0 0.0
    %1276 = vmatpush1.msra.mxu0 0.0
    %1277 = vmatprep.subr.mxu0 0.0
    %1278 = vmatpush1.msra.mxu0 0.0
    %1279 = vmatprep.subr.mxu0 0.0
    %1280 = vmatpush1.msra.mxu0 0.0
    %1281 = vmatprep.subr.mxu0 0.0
    %1282 = vmatpush1.msra.mxu0 %v483
    %1283 = vmatprep.subr.mxu0 0.0
    %1284 = vmatpush1.msra.mxu0 %v482
    %1285 = vmatprep.subr.mxu0 0.0
    %1286 = vmatpush1.msra.mxu0 %v481
    %1287 = vmatprep.subr.mxu0 0.0
    %1288 = vmatpush1.msra.mxu0 %v480
    %1289 = vmatprep.subr.mxu0 0.0
    %1290 = vmatpush2.msra.mxu0 0.0
    %1291 = vmatprep.subr.mxu0 0.0
    %1292 = vmatpush2.msra.mxu0 0.0
    %1293 = vmatprep.subr.mxu0 0.0
    %1294 = vmatpush2.msra.mxu0 0.0
    %1295 = vmatprep.subr.mxu0 0.0
    %1296 = vmatpush2.msra.mxu0 0.0
    %1297 = vmatprep.subr.mxu0 0.0
    %1298 = vmatpush2.msra.mxu0 0.0
    %1299 = vmatprep.subr.mxu0 0.0
    %1300 = vmatpush2.msra.mxu0 0.0
    %1301 = vmatprep.subr.mxu0 0.0
    %1302 = vmatpush2.msra.mxu0 0.0
    %1303 = vmatprep.subr.mxu0 0.0
    %1304 = vmatpush2.msra.mxu0 0.0
    %1305 = vmatprep.subr.mxu0 0.0
    %1306 = vmatpush2.msra.mxu0 0.0
    %1307 = vmatprep.subr.mxu0 0.0
    %1308 = vmatpush2.msra.mxu0 0.0
    %1309 = vmatprep.subr.mxu0 0.0
    %1310 = vmatpush2.msra.mxu0 0.0
    %1311 = vmatprep.subr.mxu0 0.0
    %1312 = vmatpush2.msra.mxu0 0.0
    %1313 = vmatprep.subr.mxu0 0.0
    %1314 = vmatpush2.msra.mxu0 0.0
    %1315 = vmatprep.subr.mxu0 0.0
    %1316 = vmatpush2.msra.mxu0 0.0
    %1317 = vmatprep.subr.mxu0 0.0
    %1318 = vmatpush2.msra.mxu0 0.0
    %1319 = vmatprep.subr.mxu0 0.0
    %1320 = vmatpush2.msra.mxu0 0.0
    %1321 = vmatprep.mubr.f32.mxu0 0.0
    %1322 = vmatmul.mubr.f32.gmra.mxu0 %v1255
    %v1323 = vpop.f32.mrf.mxu0
    %v1324 = vadd.f32 0.0, %v1323
    %v1325 = vpop.f32.mrf.mxu0
    %1326 = vdwg.mxu0
    %v1327 = vmul.f32 %v561, %v970
    %v1328 = vmul.f32 %v568, %v981
    %v1329 = vadd.f32 %v1327, %v1328
    %v1330 = vmul.f32 %v1329, 1.8
    %v1331 = vadd.f32 %v1330, 0.01
    %v1332 = vmul.f32 %v977, %v578
    %v1333 = vmul.f32 %v585, %v1324
    %v1334 = vadd.f32 %v1332, %v1333
    %v1335 = vmul.f32 %v1331, %v981
    %v1336 = vsub.f32 %v1334, %v1335
    %v1337 = vsub.f32 %v1336, %v1331
    %vm1338 = vcmp.gt.f32.partialorder %v1337, 0.0
    %v1339 = vsel %vm1338, 1, 0
    %v1340 = vcvt.s32.f32 %v1339
    %v1342 = vsel %vm238, %v1340, 0
    %1344 = vmatprep.subr.mxu0 0.0
    %1345 = vmatpush1.msra.mxu0 0.0
    %1346 = vmatprep.subr.mxu0 0.0
    %1347 = vmatpush1.msra.mxu0 0.0
    %1348 = vmatprep.subr.mxu0 0.0
    %1349 = vmatpush1.msra.mxu0 0.0
    %1350 = vmatprep.subr.mxu0 0.0
    %1351 = vmatpush1.msra.mxu0 0.0
    %1352 = vmatprep.subr.mxu0 0.0
    %1353 = vmatpush1.msra.mxu0 0.0
    %1354 = vmatprep.subr.mxu0 0.0
    %1355 = vmatpush1.msra.mxu0 0.0
    %1356 = vmatprep.subr.mxu0 0.0
    %1357 = vmatpush1.msra.mxu0 0.0
    %1358 = vmatprep.subr.mxu0 0.0
    %1359 = vmatpush1.msra.mxu0 0.0
    %1360 = vmatprep.subr.mxu0 0.0
    %1361 = vmatpush1.msra.mxu0 0.0
    %1362 = vmatprep.subr.mxu0 0.0
    %1363 = vmatpush1.msra.mxu0 0.0
    %1364 = vmatprep.subr.mxu0 0.0
    %1365 = vmatpush1.msra.mxu0 0.0
    %1366 = vmatprep.subr.mxu0 0.0
    %1367 = vmatpush1.msra.mxu0 0.0
    %1368 = vmatprep.subr.mxu0 0.0
    %1369 = vmatpush1.msra.mxu0 %v598
    %1370 = vmatprep.subr.mxu0 0.0
    %1371 = vmatpush1.msra.mxu0 %v597
    %1372 = vmatprep.subr.mxu0 0.0
    %1373 = vmatpush1.msra.mxu0 %v596
    %1374 = vmatprep.subr.mxu0 0.0
    %1375 = vmatpush1.msra.mxu0 %v595
    %1376 = vmatprep.subr.mxu0 0.0
    %1377 = vmatpush2.msra.mxu0 0.0
    %1378 = vmatprep.subr.mxu0 0.0
    %1379 = vmatpush2.msra.mxu0 0.0
    %1380 = vmatprep.subr.mxu0 0.0
    %1381 = vmatpush2.msra.mxu0 0.0
    %1382 = vmatprep.subr.mxu0 0.0
    %1383 = vmatpush2.msra.mxu0 0.0
    %1384 = vmatprep.subr.mxu0 0.0
    %1385 = vmatpush2.msra.mxu0 0.0
    %1386 = vmatprep.subr.mxu0 0.0
    %1387 = vmatpush2.msra.mxu0 0.0
    %1388 = vmatprep.subr.mxu0 0.0
    %1389 = vmatpush2.msra.mxu0 0.0
    %1390 = vmatprep.subr.mxu0 0.0
    %1391 = vmatpush2.msra.mxu0 0.0
    %1392 = vmatprep.subr.mxu0 0.0
    %1393 = vmatpush2.msra.mxu0 0.0
    %1394 = vmatprep.subr.mxu0 0.0
    %1395 = vmatpush2.msra.mxu0 0.0
    %1396 = vmatprep.subr.mxu0 0.0
    %1397 = vmatpush2.msra.mxu0 0.0
    %1398 = vmatprep.subr.mxu0 0.0
    %1399 = vmatpush2.msra.mxu0 0.0
    %1400 = vmatprep.subr.mxu0 0.0
    %1401 = vmatpush2.msra.mxu0 0.0
    %1402 = vmatprep.subr.mxu0 0.0
    %1403 = vmatpush2.msra.mxu0 0.0
    %1404 = vmatprep.subr.mxu0 0.0
    %1405 = vmatpush2.msra.mxu0 0.0
    %1406 = vmatprep.subr.mxu0 0.0
    %1407 = vmatpush2.msra.mxu0 0.0
    %1408 = vmatprep.mubr.f32.mxu0 0.0
    %1409 = vmatmul.mubr.f32.gmra.mxu0 %v1342
    %v1410 = vpop.f32.mrf.mxu0
    %v1411 = vadd.f32 0.0, %v1410
    %v1412 = vpop.f32.mrf.mxu0
    %1413 = vdwg.mxu0
    %v1414 = vmul.f32 %v676, %v1057
    %v1415 = vmul.f32 %v683, %v1068
    %v1416 = vadd.f32 %v1414, %v1415
    %v1417 = vmul.f32 %v1416, 1.8
    %v1418 = vadd.f32 %v1417, 0.01
    %v1419 = vmul.f32 %v1064, %v693
    %v1420 = vmul.f32 %v700, %v1411
    %v1421 = vadd.f32 %v1419, %v1420
    %v1422 = vmul.f32 %v1418, %v1068
    %v1423 = vsub.f32 %v1421, %v1422
    %v1424 = vsub.f32 %v1423, %v1418
    %vm1425 = vcmp.gt.f32.partialorder %v1424, 0.0
    %v1426 = vsel %vm1425, 1, 0
    %v1427 = vcvt.s32.f32 %v1426
    %v1428 = vadd.f32 %v1069, %v1427
    %v1429 = vld [vmem:[%s0 + $0x18] sm:$0xff]
    %1430 = vrot.lane.b32.xlu0 %v1253, 32
    %v1431 = vpop.permute.xlu0 %1430
    %v1433 = vsel %vm238, %v1162, %v1431
    %v1435 = vsel %vm248, %v1433, 0
    %1437 = vmatprep.subr.mxu0 0.0
    %1438 = vmatpush1.msra.mxu0 0.0
    %1439 = vmatprep.subr.mxu0 0.0
    %1440 = vmatpush1.msra.mxu0 0.0
    %1441 = vmatprep.subr.mxu0 0.0
    %1442 = vmatpush1.msra.mxu0 0.0
    %1443 = vmatprep.subr.mxu0 0.0
    %1444 = vmatpush1.msra.mxu0 0.0
    %1445 = vmatprep.subr.mxu0 0.0
    %1446 = vmatpush1.msra.mxu0 0.0
    %1447 = vmatprep.subr.mxu0 0.0
    %1448 = vmatpush1.msra.mxu0 0.0
    %1449 = vmatprep.subr.mxu0 0.0
    %1450 = vmatpush1.msra.mxu0 0.0
    %1451 = vmatprep.subr.mxu0 0.0
    %1452 = vmatpush1.msra.mxu0 0.0
    %1453 = vmatprep.subr.mxu0 0.0
    %1454 = vmatpush1.msra.mxu0 %v247
    %1455 = vmatprep.subr.mxu0 0.0
    %1456 = vmatpush1.msra.mxu0 %v246
    %1457 = vmatprep.subr.mxu0 0.0
    %1458 = vmatpush1.msra.mxu0 %v245
    %1459 = vmatprep.subr.mxu0 0.0
    %1460 = vmatpush1.msra.mxu0 %v244
    %1461 = vmatprep.subr.mxu0 0.0
    %1462 = vmatpush1.msra.mxu0 %v243
    %1463 = vmatprep.subr.mxu0 0.0
    %1464 = vmatpush1.msra.mxu0 %v242
    %1465 = vmatprep.subr.mxu0 0.0
    %1466 = vmatpush1.msra.mxu0 %v241
    %1467 = vmatprep.subr.mxu0 0.0
    %1468 = vmatpush1.msra.mxu0 %v240
    %1469 = vmatprep.subr.mxu0 0.0
    %1470 = vmatpush2.msra.mxu0 0.0
    %1471 = vmatprep.subr.mxu0 0.0
    %1472 = vmatpush2.msra.mxu0 0.0
    %1473 = vmatprep.subr.mxu0 0.0
    %1474 = vmatpush2.msra.mxu0 0.0
    %1475 = vmatprep.subr.mxu0 0.0
    %1476 = vmatpush2.msra.mxu0 0.0
    %1477 = vmatprep.subr.mxu0 0.0
    %1478 = vmatpush2.msra.mxu0 0.0
    %1479 = vmatprep.subr.mxu0 0.0
    %1480 = vmatpush2.msra.mxu0 0.0
    %1481 = vmatprep.subr.mxu0 0.0
    %1482 = vmatpush2.msra.mxu0 0.0
    %1483 = vmatprep.subr.mxu0 0.0
    %1484 = vmatpush2.msra.mxu0 0.0
    %1485 = vmatprep.subr.mxu0 0.0
    %1486 = vmatpush2.msra.mxu0 0.0
    %1487 = vmatprep.subr.mxu0 0.0
    %1488 = vmatpush2.msra.mxu0 0.0
    %1489 = vmatprep.subr.mxu0 0.0
    %1490 = vmatpush2.msra.mxu0 0.0
    %1491 = vmatprep.subr.mxu0 0.0
    %1492 = vmatpush2.msra.mxu0 0.0
    %1493 = vmatprep.subr.mxu0 0.0
    %1494 = vmatpush2.msra.mxu0 0.0
    %1495 = vmatprep.subr.mxu0 0.0
    %1496 = vmatpush2.msra.mxu0 0.0
    %1497 = vmatprep.subr.mxu0 0.0
    %1498 = vmatpush2.msra.mxu0 0.0
    %1499 = vmatprep.subr.mxu0 0.0
    %1500 = vmatpush2.msra.mxu0 0.0
    %1501 = vmatprep.mubr.f32.mxu0 0.0
    %1502 = vmatmul.mubr.f32.gmra.mxu0 %v1435
    %v1503 = vpop.f32.mrf.mxu0
    %v1504 = vadd.f32 0.0, %v1503
    %v1505 = vpop.f32.mrf.mxu0
    %1506 = vdwg.mxu0
    %v1507 = vadd.f32 %v1429, %v1504
    %v1508 = vmul.f32 %v327, %v1151
    %v1509 = vmul.f32 %v334, %v1162
    %v1510 = vadd.f32 %v1508, %v1509
    %v1511 = vmul.f32 %v1510, 1.8
    %v1512 = vadd.f32 %v1511, 0.01
    %v1513 = vmul.f32 %v1158, %v344
    %v1514 = vmul.f32 %v351, %v1507
    %v1515 = vadd.f32 %v1513, %v1514
    %v1516 = vmul.f32 %v1512, %v1162
    %v1517 = vsub.f32 %v1515, %v1516
    %v1518 = vsub.f32 %v1517, %v1512
    %vm1519 = vcmp.gt.f32.partialorder %v1518, 0.0
    %v1520 = vsel %vm1519, 1, 0
    %v1521 = vcvt.s32.f32 %v1520
    %1523 = vrot.lane.b32.xlu0 %v1504, 96
    %v1524 = vpop.permute.xlu0 %1523
    %v1527 = vsel %vm238, %v1521, 0
    %1529 = vmatprep.subr.mxu0 0.0
    %1530 = vmatpush1.msra.mxu0 0.0
    %1531 = vmatprep.subr.mxu0 0.0
    %1532 = vmatpush1.msra.mxu0 0.0
    %1533 = vmatprep.subr.mxu0 0.0
    %1534 = vmatpush1.msra.mxu0 0.0
    %1535 = vmatprep.subr.mxu0 0.0
    %1536 = vmatpush1.msra.mxu0 0.0
    %1537 = vmatprep.subr.mxu0 0.0
    %1538 = vmatpush1.msra.mxu0 0.0
    %1539 = vmatprep.subr.mxu0 0.0
    %1540 = vmatpush1.msra.mxu0 0.0
    %1541 = vmatprep.subr.mxu0 0.0
    %1542 = vmatpush1.msra.mxu0 0.0
    %1543 = vmatprep.subr.mxu0 0.0
    %1544 = vmatpush1.msra.mxu0 0.0
    %1545 = vmatprep.subr.mxu0 0.0
    %1546 = vmatpush1.msra.mxu0 0.0
    %1547 = vmatprep.subr.mxu0 0.0
    %1548 = vmatpush1.msra.mxu0 0.0
    %1549 = vmatprep.subr.mxu0 0.0
    %1550 = vmatpush1.msra.mxu0 0.0
    %1551 = vmatprep.subr.mxu0 0.0
    %1552 = vmatpush1.msra.mxu0 0.0
    %1553 = vmatprep.subr.mxu0 0.0
    %1554 = vmatpush1.msra.mxu0 %v364
    %1555 = vmatprep.subr.mxu0 0.0
    %1556 = vmatpush1.msra.mxu0 %v363
    %1557 = vmatprep.subr.mxu0 0.0
    %1558 = vmatpush1.msra.mxu0 %v362
    %1559 = vmatprep.subr.mxu0 0.0
    %1560 = vmatpush1.msra.mxu0 %v361
    %1561 = vmatprep.subr.mxu0 0.0
    %1562 = vmatpush2.msra.mxu0 0.0
    %1563 = vmatprep.subr.mxu0 0.0
    %1564 = vmatpush2.msra.mxu0 0.0
    %1565 = vmatprep.subr.mxu0 0.0
    %1566 = vmatpush2.msra.mxu0 0.0
    %1567 = vmatprep.subr.mxu0 0.0
    %1568 = vmatpush2.msra.mxu0 0.0
    %1569 = vmatprep.subr.mxu0 0.0
    %1570 = vmatpush2.msra.mxu0 0.0
    %1571 = vmatprep.subr.mxu0 0.0
    %1572 = vmatpush2.msra.mxu0 0.0
    %1573 = vmatprep.subr.mxu0 0.0
    %1574 = vmatpush2.msra.mxu0 0.0
    %1575 = vmatprep.subr.mxu0 0.0
    %1576 = vmatpush2.msra.mxu0 0.0
    %1577 = vmatprep.subr.mxu0 0.0
    %1578 = vmatpush2.msra.mxu0 0.0
    %1579 = vmatprep.subr.mxu0 0.0
    %1580 = vmatpush2.msra.mxu0 0.0
    %1581 = vmatprep.subr.mxu0 0.0
    %1582 = vmatpush2.msra.mxu0 0.0
    %1583 = vmatprep.subr.mxu0 0.0
    %1584 = vmatpush2.msra.mxu0 0.0
    %1585 = vmatprep.subr.mxu0 0.0
    %1586 = vmatpush2.msra.mxu0 0.0
    %1587 = vmatprep.subr.mxu0 0.0
    %1588 = vmatpush2.msra.mxu0 0.0
    %1589 = vmatprep.subr.mxu0 0.0
    %1590 = vmatpush2.msra.mxu0 0.0
    %1591 = vmatprep.subr.mxu0 0.0
    %1592 = vmatpush2.msra.mxu0 0.0
    %1593 = vmatprep.mubr.f32.mxu0 0.0
    %1594 = vmatmul.mubr.f32.gmra.mxu0 %v1527
    %v1595 = vpop.f32.mrf.mxu0
    %v1596 = vadd.f32 %v1524, %v1595
    %v1597 = vpop.f32.mrf.mxu0
    %1598 = vdwg.mxu0
    %v1599 = vmul.f32 %v446, %v1242
    %v1600 = vmul.f32 %v453, %v1253
    %v1601 = vadd.f32 %v1599, %v1600
    %v1602 = vmul.f32 %v1601, 1.8
    %v1603 = vadd.f32 %v1602, 0.01
    %v1604 = vmul.f32 %v1249, %v463
    %v1605 = vmul.f32 %v470, %v1596
    %v1606 = vadd.f32 %v1604, %v1605
    %v1607 = vmul.f32 %v1603, %v1253
    %v1608 = vsub.f32 %v1606, %v1607
    %v1609 = vsub.f32 %v1608, %v1603
    %vm1610 = vcmp.gt.f32.partialorder %v1609, 0.0
    %v1611 = vsel %vm1610, 1, 0
    %v1612 = vcvt.s32.f32 %v1611
    %v1614 = vsel %vm238, %v1612, 0
    %1616 = vmatprep.subr.mxu0 0.0
    %1617 = vmatpush1.msra.mxu0 0.0
    %1618 = vmatprep.subr.mxu0 0.0
    %1619 = vmatpush1.msra.mxu0 0.0
    %1620 = vmatprep.subr.mxu0 0.0
    %1621 = vmatpush1.msra.mxu0 0.0
    %1622 = vmatprep.subr.mxu0 0.0
    %1623 = vmatpush1.msra.mxu0 0.0
    %1624 = vmatprep.subr.mxu0 0.0
    %1625 = vmatpush1.msra.mxu0 0.0
    %1626 = vmatprep.subr.mxu0 0.0
    %1627 = vmatpush1.msra.mxu0 0.0
    %1628 = vmatprep.subr.mxu0 0.0
    %1629 = vmatpush1.msra.mxu0 0.0
    %1630 = vmatprep.subr.mxu0 0.0
    %1631 = vmatpush1.msra.mxu0 0.0
    %1632 = vmatprep.subr.mxu0 0.0
    %1633 = vmatpush1.msra.mxu0 0.0
    %1634 = vmatprep.subr.mxu0 0.0
    %1635 = vmatpush1.msra.mxu0 0.0
    %1636 = vmatprep.subr.mxu0 0.0
    %1637 = vmatpush1.msra.mxu0 0.0
    %1638 = vmatprep.subr.mxu0 0.0
    %1639 = vmatpush1.msra.mxu0 0.0
    %1640 = vmatprep.subr.mxu0 0.0
    %1641 = vmatpush1.msra.mxu0 %v483
    %1642 = vmatprep.subr.mxu0 0.0
    %1643 = vmatpush1.msra.mxu0 %v482
    %1644 = vmatprep.subr.mxu0 0.0
    %1645 = vmatpush1.msra.mxu0 %v481
    %1646 = vmatprep.subr.mxu0 0.0
    %1647 = vmatpush1.msra.mxu0 %v480
    %1648 = vmatprep.subr.mxu0 0.0
    %1649 = vmatpush2.msra.mxu0 0.0
    %1650 = vmatprep.subr.mxu0 0.0
    %1651 = vmatpush2.msra.mxu0 0.0
    %1652 = vmatprep.subr.mxu0 0.0
    %1653 = vmatpush2.msra.mxu0 0.0
    %1654 = vmatprep.subr.mxu0 0.0
    %1655 = vmatpush2.msra.mxu0 0.0
    %1656 = vmatprep.subr.mxu0 0.0
    %1657 = vmatpush2.msra.mxu0 0.0
    %1658 = vmatprep.subr.mxu0 0.0
    %1659 = vmatpush2.msra.mxu0 0.0
    %1660 = vmatprep.subr.mxu0 0.0
    %1661 = vmatpush2.msra.mxu0 0.0
    %1662 = vmatprep.subr.mxu0 0.0
    %1663 = vmatpush2.msra.mxu0 0.0
    %1664 = vmatprep.subr.mxu0 0.0
    %1665 = vmatpush2.msra.mxu0 0.0
    %1666 = vmatprep.subr.mxu0 0.0
    %1667 = vmatpush2.msra.mxu0 0.0
    %1668 = vmatprep.subr.mxu0 0.0
    %1669 = vmatpush2.msra.mxu0 0.0
    %1670 = vmatprep.subr.mxu0 0.0
    %1671 = vmatpush2.msra.mxu0 0.0
    %1672 = vmatprep.subr.mxu0 0.0
    %1673 = vmatpush2.msra.mxu0 0.0
    %1674 = vmatprep.subr.mxu0 0.0
    %1675 = vmatpush2.msra.mxu0 0.0
    %1676 = vmatprep.subr.mxu0 0.0
    %1677 = vmatpush2.msra.mxu0 0.0
    %1678 = vmatprep.subr.mxu0 0.0
    %1679 = vmatpush2.msra.mxu0 0.0
    %1680 = vmatprep.mubr.f32.mxu0 0.0
    %1681 = vmatmul.mubr.f32.gmra.mxu0 %v1614
    %v1682 = vpop.f32.mrf.mxu0
    %v1683 = vadd.f32 0.0, %v1682
    %v1684 = vpop.f32.mrf.mxu0
    %1685 = vdwg.mxu0
    %v1686 = vmul.f32 %v561, %v1329
    %v1687 = vmul.f32 %v568, %v1340
    %v1688 = vadd.f32 %v1686, %v1687
    %v1689 = vmul.f32 %v1688, 1.8
    %v1690 = vadd.f32 %v1689, 0.01
    %v1691 = vmul.f32 %v1336, %v578
    %v1692 = vmul.f32 %v585, %v1683
    %v1693 = vadd.f32 %v1691, %v1692
    %v1694 = vmul.f32 %v1690, %v1340
    %v1695 = vsub.f32 %v1693, %v1694
    %v1696 = vsub.f32 %v1695, %v1690
    %vm1697 = vcmp.gt.f32.partialorder %v1696, 0.0
    %v1698 = vsel %vm1697, 1, 0
    %v1699 = vcvt.s32.f32 %v1698
    %v1701 = vsel %vm238, %v1699, 0
    %1703 = vmatprep.subr.mxu0 0.0
    %1704 = vmatpush1.msra.mxu0 0.0
    %1705 = vmatprep.subr.mxu0 0.0
    %1706 = vmatpush1.msra.mxu0 0.0
    %1707 = vmatprep.subr.mxu0 0.0
    %1708 = vmatpush1.msra.mxu0 0.0
    %1709 = vmatprep.subr.mxu0 0.0
    %1710 = vmatpush1.msra.mxu0 0.0
    %1711 = vmatprep.subr.mxu0 0.0
    %1712 = vmatpush1.msra.mxu0 0.0
    %1713 = vmatprep.subr.mxu0 0.0
    %1714 = vmatpush1.msra.mxu0 0.0
    %1715 = vmatprep.subr.mxu0 0.0
    %1716 = vmatpush1.msra.mxu0 0.0
    %1717 = vmatprep.subr.mxu0 0.0
    %1718 = vmatpush1.msra.mxu0 0.0
    %1719 = vmatprep.subr.mxu0 0.0
    %1720 = vmatpush1.msra.mxu0 0.0
    %1721 = vmatprep.subr.mxu0 0.0
    %1722 = vmatpush1.msra.mxu0 0.0
    %1723 = vmatprep.subr.mxu0 0.0
    %1724 = vmatpush1.msra.mxu0 0.0
    %1725 = vmatprep.subr.mxu0 0.0
    %1726 = vmatpush1.msra.mxu0 0.0
    %1727 = vmatprep.subr.mxu0 0.0
    %1728 = vmatpush1.msra.mxu0 %v598
    %1729 = vmatprep.subr.mxu0 0.0
    %1730 = vmatpush1.msra.mxu0 %v597
    %1731 = vmatprep.subr.mxu0 0.0
    %1732 = vmatpush1.msra.mxu0 %v596
    %1733 = vmatprep.subr.mxu0 0.0
    %1734 = vmatpush1.msra.mxu0 %v595
    %1735 = vmatprep.subr.mxu0 0.0
    %1736 = vmatpush2.msra.mxu0 0.0
    %1737 = vmatprep.subr.mxu0 0.0
    %1738 = vmatpush2.msra.mxu0 0.0
    %1739 = vmatprep.subr.mxu0 0.0
    %1740 = vmatpush2.msra.mxu0 0.0
    %1741 = vmatprep.subr.mxu0 0.0
    %1742 = vmatpush2.msra.mxu0 0.0
    %1743 = vmatprep.subr.mxu0 0.0
    %1744 = vmatpush2.msra.mxu0 0.0
    %1745 = vmatprep.subr.mxu0 0.0
    %1746 = vmatpush2.msra.mxu0 0.0
    %1747 = vmatprep.subr.mxu0 0.0
    %1748 = vmatpush2.msra.mxu0 0.0
    %1749 = vmatprep.subr.mxu0 0.0
    %1750 = vmatpush2.msra.mxu0 0.0
    %1751 = vmatprep.subr.mxu0 0.0
    %1752 = vmatpush2.msra.mxu0 0.0
    %1753 = vmatprep.subr.mxu0 0.0
    %1754 = vmatpush2.msra.mxu0 0.0
    %1755 = vmatprep.subr.mxu0 0.0
    %1756 = vmatpush2.msra.mxu0 0.0
    %1757 = vmatprep.subr.mxu0 0.0
    %1758 = vmatpush2.msra.mxu0 0.0
    %1759 = vmatprep.subr.mxu0 0.0
    %1760 = vmatpush2.msra.mxu0 0.0
    %1761 = vmatprep.subr.mxu0 0.0
    %1762 = vmatpush2.msra.mxu0 0.0
    %1763 = vmatprep.subr.mxu0 0.0
    %1764 = vmatpush2.msra.mxu0 0.0
    %1765 = vmatprep.subr.mxu0 0.0
    %1766 = vmatpush2.msra.mxu0 0.0
    %1767 = vmatprep.mubr.f32.mxu0 0.0
    %1768 = vmatmul.mubr.f32.gmra.mxu0 %v1701
    %v1769 = vpop.f32.mrf.mxu0
    %v1770 = vadd.f32 0.0, %v1769
    %v1771 = vpop.f32.mrf.mxu0
    %1772 = vdwg.mxu0
    %v1773 = vmul.f32 %v676, %v1416
    %v1774 = vmul.f32 %v683, %v1427
    %v1775 = vadd.f32 %v1773, %v1774
    %v1776 = vmul.f32 %v1775, 1.8
    %v1777 = vadd.f32 %v1776, 0.01
    %v1778 = vmul.f32 %v1423, %v693
    %v1779 = vmul.f32 %v700, %v1770
    %v1780 = vadd.f32 %v1778, %v1779
    %v1781 = vmul.f32 %v1777, %v1427
    %v1782 = vsub.f32 %v1780, %v1781
    %v1783 = vsub.f32 %v1782, %v1777
    %vm1784 = vcmp.gt.f32.partialorder %v1783, 0.0
    %v1785 = vsel %vm1784, 1, 0
    %v1786 = vcvt.s32.f32 %v1785
    %v1787 = vadd.f32 %v1428, %v1786
    %v1788 = vld [vmem:[%s0 + $0x20] sm:$0xff]
    %1789 = vrot.lane.b32.xlu0 %v1612, 32
    %v1790 = vpop.permute.xlu0 %1789
    %v1792 = vsel %vm238, %v1521, %v1790
    %v1794 = vsel %vm248, %v1792, 0
    %1796 = vmatprep.subr.mxu0 0.0
    %1797 = vmatpush1.msra.mxu0 0.0
    %1798 = vmatprep.subr.mxu0 0.0
    %1799 = vmatpush1.msra.mxu0 0.0
    %1800 = vmatprep.subr.mxu0 0.0
    %1801 = vmatpush1.msra.mxu0 0.0
    %1802 = vmatprep.subr.mxu0 0.0
    %1803 = vmatpush1.msra.mxu0 0.0
    %1804 = vmatprep.subr.mxu0 0.0
    %1805 = vmatpush1.msra.mxu0 0.0
    %1806 = vmatprep.subr.mxu0 0.0
    %1807 = vmatpush1.msra.mxu0 0.0
    %1808 = vmatprep.subr.mxu0 0.0
    %1809 = vmatpush1.msra.mxu0 0.0
    %1810 = vmatprep.subr.mxu0 0.0
    %1811 = vmatpush1.msra.mxu0 0.0
    %1812 = vmatprep.subr.mxu0 0.0
    %1813 = vmatpush1.msra.mxu0 %v247
    %1814 = vmatprep.subr.mxu0 0.0
    %1815 = vmatpush1.msra.mxu0 %v246
    %1816 = vmatprep.subr.mxu0 0.0
    %1817 = vmatpush1.msra.mxu0 %v245
    %1818 = vmatprep.subr.mxu0 0.0
    %1819 = vmatpush1.msra.mxu0 %v244
    %1820 = vmatprep.subr.mxu0 0.0
    %1821 = vmatpush1.msra.mxu0 %v243
    %1822 = vmatprep.subr.mxu0 0.0
    %1823 = vmatpush1.msra.mxu0 %v242
    %1824 = vmatprep.subr.mxu0 0.0
    %1825 = vmatpush1.msra.mxu0 %v241
    %1826 = vmatprep.subr.mxu0 0.0
    %1827 = vmatpush1.msra.mxu0 %v240
    %1828 = vmatprep.subr.mxu0 0.0
    %1829 = vmatpush2.msra.mxu0 0.0
    %1830 = vmatprep.subr.mxu0 0.0
    %1831 = vmatpush2.msra.mxu0 0.0
    %1832 = vmatprep.subr.mxu0 0.0
    %1833 = vmatpush2.msra.mxu0 0.0
    %1834 = vmatprep.subr.mxu0 0.0
    %1835 = vmatpush2.msra.mxu0 0.0
    %1836 = vmatprep.subr.mxu0 0.0
    %1837 = vmatpush2.msra.mxu0 0.0
    %1838 = vmatprep.subr.mxu0 0.0
    %1839 = vmatpush2.msra.mxu0 0.0
    %1840 = vmatprep.subr.mxu0 0.0
    %1841 = vmatpush2.msra.mxu0 0.0
    %1842 = vmatprep.subr.mxu0 0.0
    %1843 = vmatpush2.msra.mxu0 0.0
    %1844 = vmatprep.subr.mxu0 0.0
    %1845 = vmatpush2.msra.mxu0 0.0
    %1846 = vmatprep.subr.mxu0 0.0
    %1847 = vmatpush2.msra.mxu0 0.0
    %1848 = vmatprep.subr.mxu0 0.0
    %1849 = vmatpush2.msra.mxu0 0.0
    %1850 = vmatprep.subr.mxu0 0.0
    %1851 = vmatpush2.msra.mxu0 0.0
    %1852 = vmatprep.subr.mxu0 0.0
    %1853 = vmatpush2.msra.mxu0 0.0
    %1854 = vmatprep.subr.mxu0 0.0
    %1855 = vmatpush2.msra.mxu0 0.0
    %1856 = vmatprep.subr.mxu0 0.0
    %1857 = vmatpush2.msra.mxu0 0.0
    %1858 = vmatprep.subr.mxu0 0.0
    %1859 = vmatpush2.msra.mxu0 0.0
    %1860 = vmatprep.mubr.f32.mxu0 0.0
    %1861 = vmatmul.mubr.f32.gmra.mxu0 %v1794
    %v1862 = vpop.f32.mrf.mxu0
    %v1863 = vadd.f32 0.0, %v1862
    %v1864 = vpop.f32.mrf.mxu0
    %1865 = vdwg.mxu0
    %v1866 = vadd.f32 %v1788, %v1863
    %v1867 = vmul.f32 %v327, %v1510
    %v1868 = vmul.f32 %v334, %v1521
    %v1869 = vadd.f32 %v1867, %v1868
    %v1870 = vmul.f32 %v1869, 1.8
    %v1871 = vadd.f32 %v1870, 0.01
    %v1872 = vmul.f32 %v1517, %v344
    %v1873 = vmul.f32 %v351, %v1866
    %v1874 = vadd.f32 %v1872, %v1873
    %v1875 = vmul.f32 %v1871, %v1521
    %v1876 = vsub.f32 %v1874, %v1875
    %v1877 = vsub.f32 %v1876, %v1871
    %vm1878 = vcmp.gt.f32.partialorder %v1877, 0.0
    %v1879 = vsel %vm1878, 1, 0
    %v1880 = vcvt.s32.f32 %v1879
    %1882 = vrot.lane.b32.xlu0 %v1863, 96
    %v1883 = vpop.permute.xlu0 %1882
    %v1886 = vsel %vm238, %v1880, 0
    %1888 = vmatprep.subr.mxu0 0.0
    %1889 = vmatpush1.msra.mxu0 0.0
    %1890 = vmatprep.subr.mxu0 0.0
    %1891 = vmatpush1.msra.mxu0 0.0
    %1892 = vmatprep.subr.mxu0 0.0
    %1893 = vmatpush1.msra.mxu0 0.0
    %1894 = vmatprep.subr.mxu0 0.0
    %1895 = vmatpush1.msra.mxu0 0.0
    %1896 = vmatprep.subr.mxu0 0.0
    %1897 = vmatpush1.msra.mxu0 0.0
    %1898 = vmatprep.subr.mxu0 0.0
    %1899 = vmatpush1.msra.mxu0 0.0
    %1900 = vmatprep.subr.mxu0 0.0
    %1901 = vmatpush1.msra.mxu0 0.0
    %1902 = vmatprep.subr.mxu0 0.0
    %1903 = vmatpush1.msra.mxu0 0.0
    %1904 = vmatprep.subr.mxu0 0.0
    %1905 = vmatpush1.msra.mxu0 0.0
    %1906 = vmatprep.subr.mxu0 0.0
    %1907 = vmatpush1.msra.mxu0 0.0
    %1908 = vmatprep.subr.mxu0 0.0
    %1909 = vmatpush1.msra.mxu0 0.0
    %1910 = vmatprep.subr.mxu0 0.0
    %1911 = vmatpush1.msra.mxu0 0.0
    %1912 = vmatprep.subr.mxu0 0.0
    %1913 = vmatpush1.msra.mxu0 %v364
    %1914 = vmatprep.subr.mxu0 0.0
    %1915 = vmatpush1.msra.mxu0 %v363
    %1916 = vmatprep.subr.mxu0 0.0
    %1917 = vmatpush1.msra.mxu0 %v362
    %1918 = vmatprep.subr.mxu0 0.0
    %1919 = vmatpush1.msra.mxu0 %v361
    %1920 = vmatprep.subr.mxu0 0.0
    %1921 = vmatpush2.msra.mxu0 0.0
    %1922 = vmatprep.subr.mxu0 0.0
    %1923 = vmatpush2.msra.mxu0 0.0
    %1924 = vmatprep.subr.mxu0 0.0
    %1925 = vmatpush2.msra.mxu0 0.0
    %1926 = vmatprep.subr.mxu0 0.0
    %1927 = vmatpush2.msra.mxu0 0.0
    %1928 = vmatprep.subr.mxu0 0.0
    %1929 = vmatpush2.msra.mxu0 0.0
    %1930 = vmatprep.subr.mxu0 0.0
    %1931 = vmatpush2.msra.mxu0 0.0
    %1932 = vmatprep.subr.mxu0 0.0
    %1933 = vmatpush2.msra.mxu0 0.0
    %1934 = vmatprep.subr.mxu0 0.0
    %1935 = vmatpush2.msra.mxu0 0.0
    %1936 = vmatprep.subr.mxu0 0.0
    %1937 = vmatpush2.msra.mxu0 0.0
    %1938 = vmatprep.subr.mxu0 0.0
    %1939 = vmatpush2.msra.mxu0 0.0
    %1940 = vmatprep.subr.mxu0 0.0
    %1941 = vmatpush2.msra.mxu0 0.0
    %1942 = vmatprep.subr.mxu0 0.0
    %1943 = vmatpush2.msra.mxu0 0.0
    %1944 = vmatprep.subr.mxu0 0.0
    %1945 = vmatpush2.msra.mxu0 0.0
    %1946 = vmatprep.subr.mxu0 0.0
    %1947 = vmatpush2.msra.mxu0 0.0
    %1948 = vmatprep.subr.mxu0 0.0
    %1949 = vmatpush2.msra.mxu0 0.0
    %1950 = vmatprep.subr.mxu0 0.0
    %1951 = vmatpush2.msra.mxu0 0.0
    %1952 = vmatprep.mubr.f32.mxu0 0.0
    %1953 = vmatmul.mubr.f32.gmra.mxu0 %v1886
    %v1954 = vpop.f32.mrf.mxu0
    %v1955 = vadd.f32 %v1883, %v1954
    %v1956 = vpop.f32.mrf.mxu0
    %1957 = vdwg.mxu0
    %v1958 = vmul.f32 %v446, %v1601
    %v1959 = vmul.f32 %v453, %v1612
    %v1960 = vadd.f32 %v1958, %v1959
    %v1961 = vmul.f32 %v1960, 1.8
    %v1962 = vadd.f32 %v1961, 0.01
    %v1963 = vmul.f32 %v1608, %v463
    %v1964 = vmul.f32 %v470, %v1955
    %v1965 = vadd.f32 %v1963, %v1964
    %v1966 = vmul.f32 %v1962, %v1612
    %v1967 = vsub.f32 %v1965, %v1966
    %v1968 = vsub.f32 %v1967, %v1962
    %vm1969 = vcmp.gt.f32.partialorder %v1968, 0.0
    %v1970 = vsel %vm1969, 1, 0
    %v1971 = vcvt.s32.f32 %v1970
    %v1973 = vsel %vm238, %v1971, 0
    %1975 = vmatprep.subr.mxu0 0.0
    %1976 = vmatpush1.msra.mxu0 0.0
    %1977 = vmatprep.subr.mxu0 0.0
    %1978 = vmatpush1.msra.mxu0 0.0
    %1979 = vmatprep.subr.mxu0 0.0
    %1980 = vmatpush1.msra.mxu0 0.0
    %1981 = vmatprep.subr.mxu0 0.0
    %1982 = vmatpush1.msra.mxu0 0.0
    %1983 = vmatprep.subr.mxu0 0.0
    %1984 = vmatpush1.msra.mxu0 0.0
    %1985 = vmatprep.subr.mxu0 0.0
    %1986 = vmatpush1.msra.mxu0 0.0
    %1987 = vmatprep.subr.mxu0 0.0
    %1988 = vmatpush1.msra.mxu0 0.0
    %1989 = vmatprep.subr.mxu0 0.0
    %1990 = vmatpush1.msra.mxu0 0.0
    %1991 = vmatprep.subr.mxu0 0.0
    %1992 = vmatpush1.msra.mxu0 0.0
    %1993 = vmatprep.subr.mxu0 0.0
    %1994 = vmatpush1.msra.mxu0 0.0
    %1995 = vmatprep.subr.mxu0 0.0
    %1996 = vmatpush1.msra.mxu0 0.0
    %1997 = vmatprep.subr.mxu0 0.0
    %1998 = vmatpush1.msra.mxu0 0.0
    %1999 = vmatprep.subr.mxu0 0.0
    %2000 = vmatpush1.msra.mxu0 %v483
    %2001 = vmatprep.subr.mxu0 0.0
    %2002 = vmatpush1.msra.mxu0 %v482
    %2003 = vmatprep.subr.mxu0 0.0
    %2004 = vmatpush1.msra.mxu0 %v481
    %2005 = vmatprep.subr.mxu0 0.0
    %2006 = vmatpush1.msra.mxu0 %v480
    %2007 = vmatprep.subr.mxu0 0.0
    %2008 = vmatpush2.msra.mxu0 0.0
    %2009 = vmatprep.subr.mxu0 0.0
    %2010 = vmatpush2.msra.mxu0 0.0
    %2011 = vmatprep.subr.mxu0 0.0
    %2012 = vmatpush2.msra.mxu0 0.0
    %2013 = vmatprep.subr.mxu0 0.0
    %2014 = vmatpush2.msra.mxu0 0.0
    %2015 = vmatprep.subr.mxu0 0.0
    %2016 = vmatpush2.msra.mxu0 0.0
    %2017 = vmatprep.subr.mxu0 0.0
    %2018 = vmatpush2.msra.mxu0 0.0
    %2019 = vmatprep.subr.mxu0 0.0
    %2020 = vmatpush2.msra.mxu0 0.0
    %2021 = vmatprep.subr.mxu0 0.0
    %2022 = vmatpush2.msra.mxu0 0.0
    %2023 = vmatprep.subr.mxu0 0.0
    %2024 = vmatpush2.msra.mxu0 0.0
    %2025 = vmatprep.subr.mxu0 0.0
    %2026 = vmatpush2.msra.mxu0 0.0
    %2027 = vmatprep.subr.mxu0 0.0
    %2028 = vmatpush2.msra.mxu0 0.0
    %2029 = vmatprep.subr.mxu0 0.0
    %2030 = vmatpush2.msra.mxu0 0.0
    %2031 = vmatprep.subr.mxu0 0.0
    %2032 = vmatpush2.msra.mxu0 0.0
    %2033 = vmatprep.subr.mxu0 0.0
    %2034 = vmatpush2.msra.mxu0 0.0
    %2035 = vmatprep.subr.mxu0 0.0
    %2036 = vmatpush2.msra.mxu0 0.0
    %2037 = vmatprep.subr.mxu0 0.0
    %2038 = vmatpush2.msra.mxu0 0.0
    %2039 = vmatprep.mubr.f32.mxu0 0.0
    %2040 = vmatmul.mubr.f32.gmra.mxu0 %v1973
    %v2041 = vpop.f32.mrf.mxu0
    %v2042 = vadd.f32 0.0, %v2041
    %v2043 = vpop.f32.mrf.mxu0
    %2044 = vdwg.mxu0
    %v2045 = vmul.f32 %v561, %v1688
    %v2046 = vmul.f32 %v568, %v1699
    %v2047 = vadd.f32 %v2045, %v2046
    %v2048 = vmul.f32 %v2047, 1.8
    %v2049 = vadd.f32 %v2048, 0.01
    %v2050 = vmul.f32 %v1695, %v578
    %v2051 = vmul.f32 %v585, %v2042
    %v2052 = vadd.f32 %v2050, %v2051
    %v2053 = vmul.f32 %v2049, %v1699
    %v2054 = vsub.f32 %v2052, %v2053
    %v2055 = vsub.f32 %v2054, %v2049
    %vm2056 = vcmp.gt.f32.partialorder %v2055, 0.0
    %v2057 = vsel %vm2056, 1, 0
    %v2058 = vcvt.s32.f32 %v2057
    %v2060 = vsel %vm238, %v2058, 0
    %2062 = vmatprep.subr.mxu0 0.0
    %2063 = vmatpush1.msra.mxu0 0.0
    %2064 = vmatprep.subr.mxu0 0.0
    %2065 = vmatpush1.msra.mxu0 0.0
    %2066 = vmatprep.subr.mxu0 0.0
    %2067 = vmatpush1.msra.mxu0 0.0
    %2068 = vmatprep.subr.mxu0 0.0
    %2069 = vmatpush1.msra.mxu0 0.0
    %2070 = vmatprep.subr.mxu0 0.0
    %2071 = vmatpush1.msra.mxu0 0.0
    %2072 = vmatprep.subr.mxu0 0.0
    %2073 = vmatpush1.msra.mxu0 0.0
    %2074 = vmatprep.subr.mxu0 0.0
    %2075 = vmatpush1.msra.mxu0 0.0
    %2076 = vmatprep.subr.mxu0 0.0
    %2077 = vmatpush1.msra.mxu0 0.0
    %2078 = vmatprep.subr.mxu0 0.0
    %2079 = vmatpush1.msra.mxu0 0.0
    %2080 = vmatprep.subr.mxu0 0.0
    %2081 = vmatpush1.msra.mxu0 0.0
    %2082 = vmatprep.subr.mxu0 0.0
    %2083 = vmatpush1.msra.mxu0 0.0
    %2084 = vmatprep.subr.mxu0 0.0
    %2085 = vmatpush1.msra.mxu0 0.0
    %2086 = vmatprep.subr.mxu0 0.0
    %2087 = vmatpush1.msra.mxu0 %v598
    %2088 = vmatprep.subr.mxu0 0.0
    %2089 = vmatpush1.msra.mxu0 %v597
    %2090 = vmatprep.subr.mxu0 0.0
    %2091 = vmatpush1.msra.mxu0 %v596
    %2092 = vmatprep.subr.mxu0 0.0
    %2093 = vmatpush1.msra.mxu0 %v595
    %2094 = vmatprep.subr.mxu0 0.0
    %2095 = vmatpush2.msra.mxu0 0.0
    %2096 = vmatprep.subr.mxu0 0.0
    %2097 = vmatpush2.msra.mxu0 0.0
    %2098 = vmatprep.subr.mxu0 0.0
    %2099 = vmatpush2.msra.mxu0 0.0
    %2100 = vmatprep.subr.mxu0 0.0
    %2101 = vmatpush2.msra.mxu0 0.0
    %2102 = vmatprep.subr.mxu0 0.0
    %2103 = vmatpush2.msra.mxu0 0.0
    %2104 = vmatprep.subr.mxu0 0.0
    %2105 = vmatpush2.msra.mxu0 0.0
    %2106 = vmatprep.subr.mxu0 0.0
    %2107 = vmatpush2.msra.mxu0 0.0
    %2108 = vmatprep.subr.mxu0 0.0
    %2109 = vmatpush2.msra.mxu0 0.0
    %2110 = vmatprep.subr.mxu0 0.0
    %2111 = vmatpush2.msra.mxu0 0.0
    %2112 = vmatprep.subr.mxu0 0.0
    %2113 = vmatpush2.msra.mxu0 0.0
    %2114 = vmatprep.subr.mxu0 0.0
    %2115 = vmatpush2.msra.mxu0 0.0
    %2116 = vmatprep.subr.mxu0 0.0
    %2117 = vmatpush2.msra.mxu0 0.0
    %2118 = vmatprep.subr.mxu0 0.0
    %2119 = vmatpush2.msra.mxu0 0.0
    %2120 = vmatprep.subr.mxu0 0.0
    %2121 = vmatpush2.msra.mxu0 0.0
    %2122 = vmatprep.subr.mxu0 0.0
    %2123 = vmatpush2.msra.mxu0 0.0
    %2124 = vmatprep.subr.mxu0 0.0
    %2125 = vmatpush2.msra.mxu0 0.0
    %2126 = vmatprep.mubr.f32.mxu0 0.0
    %2127 = vmatmul.mubr.f32.gmra.mxu0 %v2060
    %v2128 = vpop.f32.mrf.mxu0
    %v2129 = vadd.f32 0.0, %v2128
    %v2130 = vpop.f32.mrf.mxu0
    %2131 = vdwg.mxu0
    %v2132 = vmul.f32 %v676, %v1775
    %v2133 = vmul.f32 %v683, %v1786
    %v2134 = vadd.f32 %v2132, %v2133
    %v2135 = vmul.f32 %v2134, 1.8
    %v2136 = vadd.f32 %v2135, 0.01
    %v2137 = vmul.f32 %v1782, %v693
    %v2138 = vmul.f32 %v700, %v2129
    %v2139 = vadd.f32 %v2137, %v2138
    %v2140 = vmul.f32 %v2136, %v1786
    %v2141 = vsub.f32 %v2139, %v2140
    %v2142 = vsub.f32 %v2141, %v2136
    %vm2143 = vcmp.gt.f32.partialorder %v2142, 0.0
    %v2144 = vsel %vm2143, 1, 0
    %v2145 = vcvt.s32.f32 %v2144
    %v2146 = vadd.f32 %v1787, %v2145
    %v2147 = vld [vmem:[%s0 + $0x28] sm:$0xff]
    %2148 = vrot.lane.b32.xlu0 %v1971, 32
    %v2149 = vpop.permute.xlu0 %2148
    %v2151 = vsel %vm238, %v1880, %v2149
    %v2153 = vsel %vm248, %v2151, 0
    %2155 = vmatprep.subr.mxu0 0.0
    %2156 = vmatpush1.msra.mxu0 0.0
    %2157 = vmatprep.subr.mxu0 0.0
    %2158 = vmatpush1.msra.mxu0 0.0
    %2159 = vmatprep.subr.mxu0 0.0
    %2160 = vmatpush1.msra.mxu0 0.0
    %2161 = vmatprep.subr.mxu0 0.0
    %2162 = vmatpush1.msra.mxu0 0.0
    %2163 = vmatprep.subr.mxu0 0.0
    %2164 = vmatpush1.msra.mxu0 0.0
    %2165 = vmatprep.subr.mxu0 0.0
    %2166 = vmatpush1.msra.mxu0 0.0
    %2167 = vmatprep.subr.mxu0 0.0
    %2168 = vmatpush1.msra.mxu0 0.0
    %2169 = vmatprep.subr.mxu0 0.0
    %2170 = vmatpush1.msra.mxu0 0.0
    %2171 = vmatprep.subr.mxu0 0.0
    %2172 = vmatpush1.msra.mxu0 %v247
    %2173 = vmatprep.subr.mxu0 0.0
    %2174 = vmatpush1.msra.mxu0 %v246
    %2175 = vmatprep.subr.mxu0 0.0
    %2176 = vmatpush1.msra.mxu0 %v245
    %2177 = vmatprep.subr.mxu0 0.0
    %2178 = vmatpush1.msra.mxu0 %v244
    %2179 = vmatprep.subr.mxu0 0.0
    %2180 = vmatpush1.msra.mxu0 %v243
    %2181 = vmatprep.subr.mxu0 0.0
    %2182 = vmatpush1.msra.mxu0 %v242
    %2183 = vmatprep.subr.mxu0 0.0
    %2184 = vmatpush1.msra.mxu0 %v241
    %2185 = vmatprep.subr.mxu0 0.0
    %2186 = vmatpush1.msra.mxu0 %v240
    %2187 = vmatprep.subr.mxu0 0.0
    %2188 = vmatpush2.msra.mxu0 0.0
    %2189 = vmatprep.subr.mxu0 0.0
    %2190 = vmatpush2.msra.mxu0 0.0
    %2191 = vmatprep.subr.mxu0 0.0
    %2192 = vmatpush2.msra.mxu0 0.0
    %2193 = vmatprep.subr.mxu0 0.0
    %2194 = vmatpush2.msra.mxu0 0.0
    %2195 = vmatprep.subr.mxu0 0.0
    %2196 = vmatpush2.msra.mxu0 0.0
    %2197 = vmatprep.subr.mxu0 0.0
    %2198 = vmatpush2.msra.mxu0 0.0
    %2199 = vmatprep.subr.mxu0 0.0
    %2200 = vmatpush2.msra.mxu0 0.0
    %2201 = vmatprep.subr.mxu0 0.0
    %2202 = vmatpush2.msra.mxu0 0.0
    %2203 = vmatprep.subr.mxu0 0.0
    %2204 = vmatpush2.msra.mxu0 0.0
    %2205 = vmatprep.subr.mxu0 0.0
    %2206 = vmatpush2.msra.mxu0 0.0
    %2207 = vmatprep.subr.mxu0 0.0
    %2208 = vmatpush2.msra.mxu0 0.0
    %2209 = vmatprep.subr.mxu0 0.0
    %2210 = vmatpush2.msra.mxu0 0.0
    %2211 = vmatprep.subr.mxu0 0.0
    %2212 = vmatpush2.msra.mxu0 0.0
    %2213 = vmatprep.subr.mxu0 0.0
    %2214 = vmatpush2.msra.mxu0 0.0
    %2215 = vmatprep.subr.mxu0 0.0
    %2216 = vmatpush2.msra.mxu0 0.0
    %2217 = vmatprep.subr.mxu0 0.0
    %2218 = vmatpush2.msra.mxu0 0.0
    %2219 = vmatprep.mubr.f32.mxu0 0.0
    %2220 = vmatmul.mubr.f32.gmra.mxu0 %v2153
    %v2221 = vpop.f32.mrf.mxu0
    %v2222 = vadd.f32 0.0, %v2221
    %v2223 = vpop.f32.mrf.mxu0
    %2224 = vdwg.mxu0
    %v2225 = vadd.f32 %v2147, %v2222
    %v2226 = vmul.f32 %v327, %v1869
    %v2227 = vmul.f32 %v334, %v1880
    %v2228 = vadd.f32 %v2226, %v2227
    %v2229 = vmul.f32 %v2228, 1.8
    %v2230 = vadd.f32 %v2229, 0.01
    %v2231 = vmul.f32 %v1876, %v344
    %v2232 = vmul.f32 %v351, %v2225
    %v2233 = vadd.f32 %v2231, %v2232
    %v2234 = vmul.f32 %v2230, %v1880
    %v2235 = vsub.f32 %v2233, %v2234
    %v2236 = vsub.f32 %v2235, %v2230
    %vm2237 = vcmp.gt.f32.partialorder %v2236, 0.0
    %v2238 = vsel %vm2237, 1, 0
    %v2239 = vcvt.s32.f32 %v2238
    %2241 = vrot.lane.b32.xlu0 %v2222, 96
    %v2242 = vpop.permute.xlu0 %2241
    %v2245 = vsel %vm238, %v2239, 0
    %2247 = vmatprep.subr.mxu0 0.0
    %2248 = vmatpush1.msra.mxu0 0.0
    %2249 = vmatprep.subr.mxu0 0.0
    %2250 = vmatpush1.msra.mxu0 0.0
    %2251 = vmatprep.subr.mxu0 0.0
    %2252 = vmatpush1.msra.mxu0 0.0
    %2253 = vmatprep.subr.mxu0 0.0
    %2254 = vmatpush1.msra.mxu0 0.0
    %2255 = vmatprep.subr.mxu0 0.0
    %2256 = vmatpush1.msra.mxu0 0.0
    %2257 = vmatprep.subr.mxu0 0.0
    %2258 = vmatpush1.msra.mxu0 0.0
    %2259 = vmatprep.subr.mxu0 0.0
    %2260 = vmatpush1.msra.mxu0 0.0
    %2261 = vmatprep.subr.mxu0 0.0
    %2262 = vmatpush1.msra.mxu0 0.0
    %2263 = vmatprep.subr.mxu0 0.0
    %2264 = vmatpush1.msra.mxu0 0.0
    %2265 = vmatprep.subr.mxu0 0.0
    %2266 = vmatpush1.msra.mxu0 0.0
    %2267 = vmatprep.subr.mxu0 0.0
    %2268 = vmatpush1.msra.mxu0 0.0
    %2269 = vmatprep.subr.mxu0 0.0
    %2270 = vmatpush1.msra.mxu0 0.0
    %2271 = vmatprep.subr.mxu0 0.0
    %2272 = vmatpush1.msra.mxu0 %v364
    %2273 = vmatprep.subr.mxu0 0.0
    %2274 = vmatpush1.msra.mxu0 %v363
    %2275 = vmatprep.subr.mxu0 0.0
    %2276 = vmatpush1.msra.mxu0 %v362
    %2277 = vmatprep.subr.mxu0 0.0
    %2278 = vmatpush1.msra.mxu0 %v361
    %2279 = vmatprep.subr.mxu0 0.0
    %2280 = vmatpush2.msra.mxu0 0.0
    %2281 = vmatprep.subr.mxu0 0.0
    %2282 = vmatpush2.msra.mxu0 0.0
    %2283 = vmatprep.subr.mxu0 0.0
    %2284 = vmatpush2.msra.mxu0 0.0
    %2285 = vmatprep.subr.mxu0 0.0
    %2286 = vmatpush2.msra.mxu0 0.0
    %2287 = vmatprep.subr.mxu0 0.0
    %2288 = vmatpush2.msra.mxu0 0.0
    %2289 = vmatprep.subr.mxu0 0.0
    %2290 = vmatpush2.msra.mxu0 0.0
    %2291 = vmatprep.subr.mxu0 0.0
    %2292 = vmatpush2.msra.mxu0 0.0
    %2293 = vmatprep.subr.mxu0 0.0
    %2294 = vmatpush2.msra.mxu0 0.0
    %2295 = vmatprep.subr.mxu0 0.0
    %2296 = vmatpush2.msra.mxu0 0.0
    %2297 = vmatprep.subr.mxu0 0.0
    %2298 = vmatpush2.msra.mxu0 0.0
    %2299 = vmatprep.subr.mxu0 0.0
    %2300 = vmatpush2.msra.mxu0 0.0
    %2301 = vmatprep.subr.mxu0 0.0
    %2302 = vmatpush2.msra.mxu0 0.0
    %2303 = vmatprep.subr.mxu0 0.0
    %2304 = vmatpush2.msra.mxu0 0.0
    %2305 = vmatprep.subr.mxu0 0.0
    %2306 = vmatpush2.msra.mxu0 0.0
    %2307 = vmatprep.subr.mxu0 0.0
    %2308 = vmatpush2.msra.mxu0 0.0
    %2309 = vmatprep.subr.mxu0 0.0
    %2310 = vmatpush2.msra.mxu0 0.0
    %2311 = vmatprep.mubr.f32.mxu0 0.0
    %2312 = vmatmul.mubr.f32.gmra.mxu0 %v2245
    %v2313 = vpop.f32.mrf.mxu0
    %v2314 = vadd.f32 %v2242, %v2313
    %v2315 = vpop.f32.mrf.mxu0
    %2316 = vdwg.mxu0
    %v2317 = vmul.f32 %v446, %v1960
    %v2318 = vmul.f32 %v453, %v1971
    %v2319 = vadd.f32 %v2317, %v2318
    %v2320 = vmul.f32 %v2319, 1.8
    %v2321 = vadd.f32 %v2320, 0.01
    %v2322 = vmul.f32 %v1967, %v463
    %v2323 = vmul.f32 %v470, %v2314
    %v2324 = vadd.f32 %v2322, %v2323
    %v2325 = vmul.f32 %v2321, %v1971
    %v2326 = vsub.f32 %v2324, %v2325
    %v2327 = vsub.f32 %v2326, %v2321
    %vm2328 = vcmp.gt.f32.partialorder %v2327, 0.0
    %v2329 = vsel %vm2328, 1, 0
    %v2330 = vcvt.s32.f32 %v2329
    %v2332 = vsel %vm238, %v2330, 0
    %2334 = vmatprep.subr.mxu0 0.0
    %2335 = vmatpush1.msra.mxu0 0.0
    %2336 = vmatprep.subr.mxu0 0.0
    %2337 = vmatpush1.msra.mxu0 0.0
    %2338 = vmatprep.subr.mxu0 0.0
    %2339 = vmatpush1.msra.mxu0 0.0
    %2340 = vmatprep.subr.mxu0 0.0
    %2341 = vmatpush1.msra.mxu0 0.0
    %2342 = vmatprep.subr.mxu0 0.0
    %2343 = vmatpush1.msra.mxu0 0.0
    %2344 = vmatprep.subr.mxu0 0.0
    %2345 = vmatpush1.msra.mxu0 0.0
    %2346 = vmatprep.subr.mxu0 0.0
    %2347 = vmatpush1.msra.mxu0 0.0
    %2348 = vmatprep.subr.mxu0 0.0
    %2349 = vmatpush1.msra.mxu0 0.0
    %2350 = vmatprep.subr.mxu0 0.0
    %2351 = vmatpush1.msra.mxu0 0.0
    %2352 = vmatprep.subr.mxu0 0.0
    %2353 = vmatpush1.msra.mxu0 0.0
    %2354 = vmatprep.subr.mxu0 0.0
    %2355 = vmatpush1.msra.mxu0 0.0
    %2356 = vmatprep.subr.mxu0 0.0
    %2357 = vmatpush1.msra.mxu0 0.0
    %2358 = vmatprep.subr.mxu0 0.0
    %2359 = vmatpush1.msra.mxu0 %v483
    %2360 = vmatprep.subr.mxu0 0.0
    %2361 = vmatpush1.msra.mxu0 %v482
    %2362 = vmatprep.subr.mxu0 0.0
    %2363 = vmatpush1.msra.mxu0 %v481
    %2364 = vmatprep.subr.mxu0 0.0
    %2365 = vmatpush1.msra.mxu0 %v480
    %2366 = vmatprep.subr.mxu0 0.0
    %2367 = vmatpush2.msra.mxu0 0.0
    %2368 = vmatprep.subr.mxu0 0.0
    %2369 = vmatpush2.msra.mxu0 0.0
    %2370 = vmatprep.subr.mxu0 0.0
    %2371 = vmatpush2.msra.mxu0 0.0
    %2372 = vmatprep.subr.mxu0 0.0
    %2373 = vmatpush2.msra.mxu0 0.0
    %2374 = vmatprep.subr.mxu0 0.0
    %2375 = vmatpush2.msra.mxu0 0.0
    %2376 = vmatprep.subr.mxu0 0.0
    %2377 = vmatpush2.msra.mxu0 0.0
    %2378 = vmatprep.subr.mxu0 0.0
    %2379 = vmatpush2.msra.mxu0 0.0
    %2380 = vmatprep.subr.mxu0 0.0
    %2381 = vmatpush2.msra.mxu0 0.0
    %2382 = vmatprep.subr.mxu0 0.0
    %2383 = vmatpush2.msra.mxu0 0.0
    %2384 = vmatprep.subr.mxu0 0.0
    %2385 = vmatpush2.msra.mxu0 0.0
    %2386 = vmatprep.subr.mxu0 0.0
    %2387 = vmatpush2.msra.mxu0 0.0
    %2388 = vmatprep.subr.mxu0 0.0
    %2389 = vmatpush2.msra.mxu0 0.0
    %2390 = vmatprep.subr.mxu0 0.0
    %2391 = vmatpush2.msra.mxu0 0.0
    %2392 = vmatprep.subr.mxu0 0.0
    %2393 = vmatpush2.msra.mxu0 0.0
    %2394 = vmatprep.subr.mxu0 0.0
    %2395 = vmatpush2.msra.mxu0 0.0
    %2396 = vmatprep.subr.mxu0 0.0
    %2397 = vmatpush2.msra.mxu0 0.0
    %2398 = vmatprep.mubr.f32.mxu0 0.0
    %2399 = vmatmul.mubr.f32.gmra.mxu0 %v2332
    %v2400 = vpop.f32.mrf.mxu0
    %v2401 = vadd.f32 0.0, %v2400
    %v2402 = vpop.f32.mrf.mxu0
    %2403 = vdwg.mxu0
    %v2404 = vmul.f32 %v561, %v2047
    %v2405 = vmul.f32 %v568, %v2058
    %v2406 = vadd.f32 %v2404, %v2405
    %v2407 = vmul.f32 %v2406, 1.8
    %v2408 = vadd.f32 %v2407, 0.01
    %v2409 = vmul.f32 %v2054, %v578
    %v2410 = vmul.f32 %v585, %v2401
    %v2411 = vadd.f32 %v2409, %v2410
    %v2412 = vmul.f32 %v2408, %v2058
    %v2413 = vsub.f32 %v2411, %v2412
    %v2414 = vsub.f32 %v2413, %v2408
    %vm2415 = vcmp.gt.f32.partialorder %v2414, 0.0
    %v2416 = vsel %vm2415, 1, 0
    %v2417 = vcvt.s32.f32 %v2416
    %v2419 = vsel %vm238, %v2417, 0
    %2421 = vmatprep.subr.mxu0 0.0
    %2422 = vmatpush1.msra.mxu0 0.0
    %2423 = vmatprep.subr.mxu0 0.0
    %2424 = vmatpush1.msra.mxu0 0.0
    %2425 = vmatprep.subr.mxu0 0.0
    %2426 = vmatpush1.msra.mxu0 0.0
    %2427 = vmatprep.subr.mxu0 0.0
    %2428 = vmatpush1.msra.mxu0 0.0
    %2429 = vmatprep.subr.mxu0 0.0
    %2430 = vmatpush1.msra.mxu0 0.0
    %2431 = vmatprep.subr.mxu0 0.0
    %2432 = vmatpush1.msra.mxu0 0.0
    %2433 = vmatprep.subr.mxu0 0.0
    %2434 = vmatpush1.msra.mxu0 0.0
    %2435 = vmatprep.subr.mxu0 0.0
    %2436 = vmatpush1.msra.mxu0 0.0
    %2437 = vmatprep.subr.mxu0 0.0
    %2438 = vmatpush1.msra.mxu0 0.0
    %2439 = vmatprep.subr.mxu0 0.0
    %2440 = vmatpush1.msra.mxu0 0.0
    %2441 = vmatprep.subr.mxu0 0.0
    %2442 = vmatpush1.msra.mxu0 0.0
    %2443 = vmatprep.subr.mxu0 0.0
    %2444 = vmatpush1.msra.mxu0 0.0
    %2445 = vmatprep.subr.mxu0 0.0
    %2446 = vmatpush1.msra.mxu0 %v598
    %2447 = vmatprep.subr.mxu0 0.0
    %2448 = vmatpush1.msra.mxu0 %v597
    %2449 = vmatprep.subr.mxu0 0.0
    %2450 = vmatpush1.msra.mxu0 %v596
    %2451 = vmatprep.subr.mxu0 0.0
    %2452 = vmatpush1.msra.mxu0 %v595
    %2453 = vmatprep.subr.mxu0 0.0
    %2454 = vmatpush2.msra.mxu0 0.0
    %2455 = vmatprep.subr.mxu0 0.0
    %2456 = vmatpush2.msra.mxu0 0.0
    %2457 = vmatprep.subr.mxu0 0.0
    %2458 = vmatpush2.msra.mxu0 0.0
    %2459 = vmatprep.subr.mxu0 0.0
    %2460 = vmatpush2.msra.mxu0 0.0
    %2461 = vmatprep.subr.mxu0 0.0
    %2462 = vmatpush2.msra.mxu0 0.0
    %2463 = vmatprep.subr.mxu0 0.0
    %2464 = vmatpush2.msra.mxu0 0.0
    %2465 = vmatprep.subr.mxu0 0.0
    %2466 = vmatpush2.msra.mxu0 0.0
    %2467 = vmatprep.subr.mxu0 0.0
    %2468 = vmatpush2.msra.mxu0 0.0
    %2469 = vmatprep.subr.mxu0 0.0
    %2470 = vmatpush2.msra.mxu0 0.0
    %2471 = vmatprep.subr.mxu0 0.0
    %2472 = vmatpush2.msra.mxu0 0.0
    %2473 = vmatprep.subr.mxu0 0.0
    %2474 = vmatpush2.msra.mxu0 0.0
    %2475 = vmatprep.subr.mxu0 0.0
    %2476 = vmatpush2.msra.mxu0 0.0
    %2477 = vmatprep.subr.mxu0 0.0
    %2478 = vmatpush2.msra.mxu0 0.0
    %2479 = vmatprep.subr.mxu0 0.0
    %2480 = vmatpush2.msra.mxu0 0.0
    %2481 = vmatprep.subr.mxu0 0.0
    %2482 = vmatpush2.msra.mxu0 0.0
    %2483 = vmatprep.subr.mxu0 0.0
    %2484 = vmatpush2.msra.mxu0 0.0
    %2485 = vmatprep.mubr.f32.mxu0 0.0
    %2486 = vmatmul.mubr.f32.gmra.mxu0 %v2419
    %v2487 = vpop.f32.mrf.mxu0
    %v2488 = vadd.f32 0.0, %v2487
    %v2489 = vpop.f32.mrf.mxu0
    %2490 = vdwg.mxu0
    %v2491 = vmul.f32 %v676, %v2134
    %v2492 = vmul.f32 %v683, %v2145
    %v2493 = vadd.f32 %v2491, %v2492
    %v2494 = vmul.f32 %v2493, 1.8
    %v2495 = vadd.f32 %v2494, 0.01
    %v2496 = vmul.f32 %v2141, %v693
    %v2497 = vmul.f32 %v700, %v2488
    %v2498 = vadd.f32 %v2496, %v2497
    %v2499 = vmul.f32 %v2495, %v2145
    %v2500 = vsub.f32 %v2498, %v2499
    %v2501 = vsub.f32 %v2500, %v2495
    %vm2502 = vcmp.gt.f32.partialorder %v2501, 0.0
    %v2503 = vsel %vm2502, 1, 0
    %v2504 = vcvt.s32.f32 %v2503
    %v2505 = vadd.f32 %v2146, %v2504
    %v2506 = vld [vmem:[%s0 + $0x30] sm:$0xff]
    %2507 = vrot.lane.b32.xlu0 %v2330, 32
    %v2508 = vpop.permute.xlu0 %2507
    %v2510 = vsel %vm238, %v2239, %v2508
    %v2512 = vsel %vm248, %v2510, 0
    %2514 = vmatprep.subr.mxu0 0.0
    %2515 = vmatpush1.msra.mxu0 0.0
    %2516 = vmatprep.subr.mxu0 0.0
    %2517 = vmatpush1.msra.mxu0 0.0
    %2518 = vmatprep.subr.mxu0 0.0
    %2519 = vmatpush1.msra.mxu0 0.0
    %2520 = vmatprep.subr.mxu0 0.0
    %2521 = vmatpush1.msra.mxu0 0.0
    %2522 = vmatprep.subr.mxu0 0.0
    %2523 = vmatpush1.msra.mxu0 0.0
    %2524 = vmatprep.subr.mxu0 0.0
    %2525 = vmatpush1.msra.mxu0 0.0
    %2526 = vmatprep.subr.mxu0 0.0
    %2527 = vmatpush1.msra.mxu0 0.0
    %2528 = vmatprep.subr.mxu0 0.0
    %2529 = vmatpush1.msra.mxu0 0.0
    %2530 = vmatprep.subr.mxu0 0.0
    %2531 = vmatpush1.msra.mxu0 %v247
    %2532 = vmatprep.subr.mxu0 0.0
    %2533 = vmatpush1.msra.mxu0 %v246
    %2534 = vmatprep.subr.mxu0 0.0
    %2535 = vmatpush1.msra.mxu0 %v245
    %2536 = vmatprep.subr.mxu0 0.0
    %2537 = vmatpush1.msra.mxu0 %v244
    %2538 = vmatprep.subr.mxu0 0.0
    %2539 = vmatpush1.msra.mxu0 %v243
    %2540 = vmatprep.subr.mxu0 0.0
    %2541 = vmatpush1.msra.mxu0 %v242
    %2542 = vmatprep.subr.mxu0 0.0
    %2543 = vmatpush1.msra.mxu0 %v241
    %2544 = vmatprep.subr.mxu0 0.0
    %2545 = vmatpush1.msra.mxu0 %v240
    %2546 = vmatprep.subr.mxu0 0.0
    %2547 = vmatpush2.msra.mxu0 0.0
    %2548 = vmatprep.subr.mxu0 0.0
    %2549 = vmatpush2.msra.mxu0 0.0
    %2550 = vmatprep.subr.mxu0 0.0
    %2551 = vmatpush2.msra.mxu0 0.0
    %2552 = vmatprep.subr.mxu0 0.0
    %2553 = vmatpush2.msra.mxu0 0.0
    %2554 = vmatprep.subr.mxu0 0.0
    %2555 = vmatpush2.msra.mxu0 0.0
    %2556 = vmatprep.subr.mxu0 0.0
    %2557 = vmatpush2.msra.mxu0 0.0
    %2558 = vmatprep.subr.mxu0 0.0
    %2559 = vmatpush2.msra.mxu0 0.0
    %2560 = vmatprep.subr.mxu0 0.0
    %2561 = vmatpush2.msra.mxu0 0.0
    %2562 = vmatprep.subr.mxu0 0.0
    %2563 = vmatpush2.msra.mxu0 0.0
    %2564 = vmatprep.subr.mxu0 0.0
    %2565 = vmatpush2.msra.mxu0 0.0
    %2566 = vmatprep.subr.mxu0 0.0
    %2567 = vmatpush2.msra.mxu0 0.0
    %2568 = vmatprep.subr.mxu0 0.0
    %2569 = vmatpush2.msra.mxu0 0.0
    %2570 = vmatprep.subr.mxu0 0.0
    %2571 = vmatpush2.msra.mxu0 0.0
    %2572 = vmatprep.subr.mxu0 0.0
    %2573 = vmatpush2.msra.mxu0 0.0
    %2574 = vmatprep.subr.mxu0 0.0
    %2575 = vmatpush2.msra.mxu0 0.0
    %2576 = vmatprep.subr.mxu0 0.0
    %2577 = vmatpush2.msra.mxu0 0.0
    %2578 = vmatprep.mubr.f32.mxu0 0.0
    %2579 = vmatmul.mubr.f32.gmra.mxu0 %v2512
    %v2580 = vpop.f32.mrf.mxu0
    %v2581 = vadd.f32 0.0, %v2580
    %v2582 = vpop.f32.mrf.mxu0
    %2583 = vdwg.mxu0
    %v2584 = vadd.f32 %v2506, %v2581
    %v2585 = vmul.f32 %v327, %v2228
    %v2586 = vmul.f32 %v334, %v2239
    %v2587 = vadd.f32 %v2585, %v2586
    %v2588 = vmul.f32 %v2587, 1.8
    %v2589 = vadd.f32 %v2588, 0.01
    %v2590 = vmul.f32 %v2235, %v344
    %v2591 = vmul.f32 %v351, %v2584
    %v2592 = vadd.f32 %v2590, %v2591
    %v2593 = vmul.f32 %v2589, %v2239
    %v2594 = vsub.f32 %v2592, %v2593
    %v2595 = vsub.f32 %v2594, %v2589
    %vm2596 = vcmp.gt.f32.partialorder %v2595, 0.0
    %v2597 = vsel %vm2596, 1, 0
    %v2598 = vcvt.s32.f32 %v2597
    %2600 = vrot.lane.b32.xlu0 %v2581, 96
    %v2601 = vpop.permute.xlu0 %2600
    %v2604 = vsel %vm238, %v2598, 0
    %2606 = vmatprep.subr.mxu0 0.0
    %2607 = vmatpush1.msra.mxu0 0.0
    %2608 = vmatprep.subr.mxu0 0.0
    %2609 = vmatpush1.msra.mxu0 0.0
    %2610 = vmatprep.subr.mxu0 0.0
    %2611 = vmatpush1.msra.mxu0 0.0
    %2612 = vmatprep.subr.mxu0 0.0
    %2613 = vmatpush1.msra.mxu0 0.0
    %2614 = vmatprep.subr.mxu0 0.0
    %2615 = vmatpush1.msra.mxu0 0.0
    %2616 = vmatprep.subr.mxu0 0.0
    %2617 = vmatpush1.msra.mxu0 0.0
    %2618 = vmatprep.subr.mxu0 0.0
    %2619 = vmatpush1.msra.mxu0 0.0
    %2620 = vmatprep.subr.mxu0 0.0
    %2621 = vmatpush1.msra.mxu0 0.0
    %2622 = vmatprep.subr.mxu0 0.0
    %2623 = vmatpush1.msra.mxu0 0.0
    %2624 = vmatprep.subr.mxu0 0.0
    %2625 = vmatpush1.msra.mxu0 0.0
    %2626 = vmatprep.subr.mxu0 0.0
    %2627 = vmatpush1.msra.mxu0 0.0
    %2628 = vmatprep.subr.mxu0 0.0
    %2629 = vmatpush1.msra.mxu0 0.0
    %2630 = vmatprep.subr.mxu0 0.0
    %2631 = vmatpush1.msra.mxu0 %v364
    %2632 = vmatprep.subr.mxu0 0.0
    %2633 = vmatpush1.msra.mxu0 %v363
    %2634 = vmatprep.subr.mxu0 0.0
    %2635 = vmatpush1.msra.mxu0 %v362
    %2636 = vmatprep.subr.mxu0 0.0
    %2637 = vmatpush1.msra.mxu0 %v361
    %2638 = vmatprep.subr.mxu0 0.0
    %2639 = vmatpush2.msra.mxu0 0.0
    %2640 = vmatprep.subr.mxu0 0.0
    %2641 = vmatpush2.msra.mxu0 0.0
    %2642 = vmatprep.subr.mxu0 0.0
    %2643 = vmatpush2.msra.mxu0 0.0
    %2644 = vmatprep.subr.mxu0 0.0
    %2645 = vmatpush2.msra.mxu0 0.0
    %2646 = vmatprep.subr.mxu0 0.0
    %2647 = vmatpush2.msra.mxu0 0.0
    %2648 = vmatprep.subr.mxu0 0.0
    %2649 = vmatpush2.msra.mxu0 0.0
    %2650 = vmatprep.subr.mxu0 0.0
    %2651 = vmatpush2.msra.mxu0 0.0
    %2652 = vmatprep.subr.mxu0 0.0
    %2653 = vmatpush2.msra.mxu0 0.0
    %2654 = vmatprep.subr.mxu0 0.0
    %2655 = vmatpush2.msra.mxu0 0.0
    %2656 = vmatprep.subr.mxu0 0.0
    %2657 = vmatpush2.msra.mxu0 0.0
    %2658 = vmatprep.subr.mxu0 0.0
    %2659 = vmatpush2.msra.mxu0 0.0
    %2660 = vmatprep.subr.mxu0 0.0
    %2661 = vmatpush2.msra.mxu0 0.0
    %2662 = vmatprep.subr.mxu0 0.0
    %2663 = vmatpush2.msra.mxu0 0.0
    %2664 = vmatprep.subr.mxu0 0.0
    %2665 = vmatpush2.msra.mxu0 0.0
    %2666 = vmatprep.subr.mxu0 0.0
    %2667 = vmatpush2.msra.mxu0 0.0
    %2668 = vmatprep.subr.mxu0 0.0
    %2669 = vmatpush2.msra.mxu0 0.0
    %2670 = vmatprep.mubr.f32.mxu0 0.0
    %2671 = vmatmul.mubr.f32.gmra.mxu0 %v2604
    %v2672 = vpop.f32.mrf.mxu0
    %v2673 = vadd.f32 %v2601, %v2672
    %v2674 = vpop.f32.mrf.mxu0
    %2675 = vdwg.mxu0
    %v2676 = vmul.f32 %v446, %v2319
    %v2677 = vmul.f32 %v453, %v2330
    %v2678 = vadd.f32 %v2676, %v2677
    %v2679 = vmul.f32 %v2678, 1.8
    %v2680 = vadd.f32 %v2679, 0.01
    %v2681 = vmul.f32 %v2326, %v463
    %v2682 = vmul.f32 %v470, %v2673
    %v2683 = vadd.f32 %v2681, %v2682
    %v2684 = vmul.f32 %v2680, %v2330
    %v2685 = vsub.f32 %v2683, %v2684
    %v2686 = vsub.f32 %v2685, %v2680
    %vm2687 = vcmp.gt.f32.partialorder %v2686, 0.0
    %v2688 = vsel %vm2687, 1, 0
    %v2689 = vcvt.s32.f32 %v2688
    %v2691 = vsel %vm238, %v2689, 0
    %2693 = vmatprep.subr.mxu0 0.0
    %2694 = vmatpush1.msra.mxu0 0.0
    %2695 = vmatprep.subr.mxu0 0.0
    %2696 = vmatpush1.msra.mxu0 0.0
    %2697 = vmatprep.subr.mxu0 0.0
    %2698 = vmatpush1.msra.mxu0 0.0
    %2699 = vmatprep.subr.mxu0 0.0
    %2700 = vmatpush1.msra.mxu0 0.0
    %2701 = vmatprep.subr.mxu0 0.0
    %2702 = vmatpush1.msra.mxu0 0.0
    %2703 = vmatprep.subr.mxu0 0.0
    %2704 = vmatpush1.msra.mxu0 0.0
    %2705 = vmatprep.subr.mxu0 0.0
    %2706 = vmatpush1.msra.mxu0 0.0
    %2707 = vmatprep.subr.mxu0 0.0
    %2708 = vmatpush1.msra.mxu0 0.0
    %2709 = vmatprep.subr.mxu0 0.0
    %2710 = vmatpush1.msra.mxu0 0.0
    %2711 = vmatprep.subr.mxu0 0.0
    %2712 = vmatpush1.msra.mxu0 0.0
    %2713 = vmatprep.subr.mxu0 0.0
    %2714 = vmatpush1.msra.mxu0 0.0
    %2715 = vmatprep.subr.mxu0 0.0
    %2716 = vmatpush1.msra.mxu0 0.0
    %2717 = vmatprep.subr.mxu0 0.0
    %2718 = vmatpush1.msra.mxu0 %v483
    %2719 = vmatprep.subr.mxu0 0.0
    %2720 = vmatpush1.msra.mxu0 %v482
    %2721 = vmatprep.subr.mxu0 0.0
    %2722 = vmatpush1.msra.mxu0 %v481
    %2723 = vmatprep.subr.mxu0 0.0
    %2724 = vmatpush1.msra.mxu0 %v480
    %2725 = vmatprep.subr.mxu0 0.0
    %2726 = vmatpush2.msra.mxu0 0.0
    %2727 = vmatprep.subr.mxu0 0.0
    %2728 = vmatpush2.msra.mxu0 0.0
    %2729 = vmatprep.subr.mxu0 0.0
    %2730 = vmatpush2.msra.mxu0 0.0
    %2731 = vmatprep.subr.mxu0 0.0
    %2732 = vmatpush2.msra.mxu0 0.0
    %2733 = vmatprep.subr.mxu0 0.0
    %2734 = vmatpush2.msra.mxu0 0.0
    %2735 = vmatprep.subr.mxu0 0.0
    %2736 = vmatpush2.msra.mxu0 0.0
    %2737 = vmatprep.subr.mxu0 0.0
    %2738 = vmatpush2.msra.mxu0 0.0
    %2739 = vmatprep.subr.mxu0 0.0
    %2740 = vmatpush2.msra.mxu0 0.0
    %2741 = vmatprep.subr.mxu0 0.0
    %2742 = vmatpush2.msra.mxu0 0.0
    %2743 = vmatprep.subr.mxu0 0.0
    %2744 = vmatpush2.msra.mxu0 0.0
    %2745 = vmatprep.subr.mxu0 0.0
    %2746 = vmatpush2.msra.mxu0 0.0
    %2747 = vmatprep.subr.mxu0 0.0
    %2748 = vmatpush2.msra.mxu0 0.0
    %2749 = vmatprep.subr.mxu0 0.0
    %2750 = vmatpush2.msra.mxu0 0.0
    %2751 = vmatprep.subr.mxu0 0.0
    %2752 = vmatpush2.msra.mxu0 0.0
    %2753 = vmatprep.subr.mxu0 0.0
    %2754 = vmatpush2.msra.mxu0 0.0
    %2755 = vmatprep.subr.mxu0 0.0
    %2756 = vmatpush2.msra.mxu0 0.0
    %2757 = vmatprep.mubr.f32.mxu0 0.0
    %2758 = vmatmul.mubr.f32.gmra.mxu0 %v2691
    %v2759 = vpop.f32.mrf.mxu0
    %v2760 = vadd.f32 0.0, %v2759
    %v2761 = vpop.f32.mrf.mxu0
    %2762 = vdwg.mxu0
    %v2763 = vmul.f32 %v561, %v2406
    %v2764 = vmul.f32 %v568, %v2417
    %v2765 = vadd.f32 %v2763, %v2764
    %v2766 = vmul.f32 %v2765, 1.8
    %v2767 = vadd.f32 %v2766, 0.01
    %v2768 = vmul.f32 %v2413, %v578
    %v2769 = vmul.f32 %v585, %v2760
    %v2770 = vadd.f32 %v2768, %v2769
    %v2771 = vmul.f32 %v2767, %v2417
    %v2772 = vsub.f32 %v2770, %v2771
    %v2773 = vsub.f32 %v2772, %v2767
    %vm2774 = vcmp.gt.f32.partialorder %v2773, 0.0
    %v2775 = vsel %vm2774, 1, 0
    %v2776 = vcvt.s32.f32 %v2775
    %v2778 = vsel %vm238, %v2776, 0
    %2780 = vmatprep.subr.mxu0 0.0
    %2781 = vmatpush1.msra.mxu0 0.0
    %2782 = vmatprep.subr.mxu0 0.0
    %2783 = vmatpush1.msra.mxu0 0.0
    %2784 = vmatprep.subr.mxu0 0.0
    %2785 = vmatpush1.msra.mxu0 0.0
    %2786 = vmatprep.subr.mxu0 0.0
    %2787 = vmatpush1.msra.mxu0 0.0
    %2788 = vmatprep.subr.mxu0 0.0
    %2789 = vmatpush1.msra.mxu0 0.0
    %2790 = vmatprep.subr.mxu0 0.0
    %2791 = vmatpush1.msra.mxu0 0.0
    %2792 = vmatprep.subr.mxu0 0.0
    %2793 = vmatpush1.msra.mxu0 0.0
    %2794 = vmatprep.subr.mxu0 0.0
    %2795 = vmatpush1.msra.mxu0 0.0
    %2796 = vmatprep.subr.mxu0 0.0
    %2797 = vmatpush1.msra.mxu0 0.0
    %2798 = vmatprep.subr.mxu0 0.0
    %2799 = vmatpush1.msra.mxu0 0.0
    %2800 = vmatprep.subr.mxu0 0.0
    %2801 = vmatpush1.msra.mxu0 0.0
    %2802 = vmatprep.subr.mxu0 0.0
    %2803 = vmatpush1.msra.mxu0 0.0
    %2804 = vmatprep.subr.mxu0 0.0
    %2805 = vmatpush1.msra.mxu0 %v598
    %2806 = vmatprep.subr.mxu0 0.0
    %2807 = vmatpush1.msra.mxu0 %v597
    %2808 = vmatprep.subr.mxu0 0.0
    %2809 = vmatpush1.msra.mxu0 %v596
    %2810 = vmatprep.subr.mxu0 0.0
    %2811 = vmatpush1.msra.mxu0 %v595
    %2812 = vmatprep.subr.mxu0 0.0
    %2813 = vmatpush2.msra.mxu0 0.0
    %2814 = vmatprep.subr.mxu0 0.0
    %2815 = vmatpush2.msra.mxu0 0.0
    %2816 = vmatprep.subr.mxu0 0.0
    %2817 = vmatpush2.msra.mxu0 0.0
    %2818 = vmatprep.subr.mxu0 0.0
    %2819 = vmatpush2.msra.mxu0 0.0
    %2820 = vmatprep.subr.mxu0 0.0
    %2821 = vmatpush2.msra.mxu0 0.0
    %2822 = vmatprep.subr.mxu0 0.0
    %2823 = vmatpush2.msra.mxu0 0.0
    %2824 = vmatprep.subr.mxu0 0.0
    %2825 = vmatpush2.msra.mxu0 0.0
    %2826 = vmatprep.subr.mxu0 0.0
    %2827 = vmatpush2.msra.mxu0 0.0
    %2828 = vmatprep.subr.mxu0 0.0
    %2829 = vmatpush2.msra.mxu0 0.0
    %2830 = vmatprep.subr.mxu0 0.0
    %2831 = vmatpush2.msra.mxu0 0.0
    %2832 = vmatprep.subr.mxu0 0.0
    %2833 = vmatpush2.msra.mxu0 0.0
    %2834 = vmatprep.subr.mxu0 0.0
    %2835 = vmatpush2.msra.mxu0 0.0
    %2836 = vmatprep.subr.mxu0 0.0
    %2837 = vmatpush2.msra.mxu0 0.0
    %2838 = vmatprep.subr.mxu0 0.0
    %2839 = vmatpush2.msra.mxu0 0.0
    %2840 = vmatprep.subr.mxu0 0.0
    %2841 = vmatpush2.msra.mxu0 0.0
    %2842 = vmatprep.subr.mxu0 0.0
    %2843 = vmatpush2.msra.mxu0 0.0
    %2844 = vmatprep.mubr.f32.mxu0 0.0
    %2845 = vmatmul.mubr.f32.gmra.mxu0 %v2778
    %v2846 = vpop.f32.mrf.mxu0
    %v2847 = vadd.f32 0.0, %v2846
    %v2848 = vpop.f32.mrf.mxu0
    %2849 = vdwg.mxu0
    %v2850 = vmul.f32 %v676, %v2493
    %v2851 = vmul.f32 %v683, %v2504
    %v2852 = vadd.f32 %v2850, %v2851
    %v2853 = vmul.f32 %v2852, 1.8
    %v2854 = vadd.f32 %v2853, 0.01
    %v2855 = vmul.f32 %v2500, %v693
    %v2856 = vmul.f32 %v700, %v2847
    %v2857 = vadd.f32 %v2855, %v2856
    %v2858 = vmul.f32 %v2854, %v2504
    %v2859 = vsub.f32 %v2857, %v2858
    %v2860 = vsub.f32 %v2859, %v2854
    %vm2861 = vcmp.gt.f32.partialorder %v2860, 0.0
    %v2862 = vsel %vm2861, 1, 0
    %v2863 = vcvt.s32.f32 %v2862
    %v2864 = vadd.f32 %v2505, %v2863
    %v2865 = vld [vmem:[%s0 + $0x38] sm:$0xff]
    %2866 = vrot.lane.b32.xlu0 %v2689, 32
    %v2867 = vpop.permute.xlu0 %2866
    %v2869 = vsel %vm238, %v2598, %v2867
    %v2871 = vsel %vm248, %v2869, 0
    %2873 = vmatprep.subr.mxu0 0.0
    %2874 = vmatpush1.msra.mxu0 0.0
    %2875 = vmatprep.subr.mxu0 0.0
    %2876 = vmatpush1.msra.mxu0 0.0
    %2877 = vmatprep.subr.mxu0 0.0
    %2878 = vmatpush1.msra.mxu0 0.0
    %2879 = vmatprep.subr.mxu0 0.0
    %2880 = vmatpush1.msra.mxu0 0.0
    %2881 = vmatprep.subr.mxu0 0.0
    %2882 = vmatpush1.msra.mxu0 0.0
    %2883 = vmatprep.subr.mxu0 0.0
    %2884 = vmatpush1.msra.mxu0 0.0
    %2885 = vmatprep.subr.mxu0 0.0
    %2886 = vmatpush1.msra.mxu0 0.0
    %2887 = vmatprep.subr.mxu0 0.0
    %2888 = vmatpush1.msra.mxu0 0.0
    %2889 = vmatprep.subr.mxu0 0.0
    %2890 = vmatpush1.msra.mxu0 %v247
    %2891 = vmatprep.subr.mxu0 0.0
    %2892 = vmatpush1.msra.mxu0 %v246
    %2893 = vmatprep.subr.mxu0 0.0
    %2894 = vmatpush1.msra.mxu0 %v245
    %2895 = vmatprep.subr.mxu0 0.0
    %2896 = vmatpush1.msra.mxu0 %v244
    %2897 = vmatprep.subr.mxu0 0.0
    %2898 = vmatpush1.msra.mxu0 %v243
    %2899 = vmatprep.subr.mxu0 0.0
    %2900 = vmatpush1.msra.mxu0 %v242
    %2901 = vmatprep.subr.mxu0 0.0
    %2902 = vmatpush1.msra.mxu0 %v241
    %2903 = vmatprep.subr.mxu0 0.0
    %2904 = vmatpush1.msra.mxu0 %v240
    %2905 = vmatprep.subr.mxu0 0.0
    %2906 = vmatpush2.msra.mxu0 0.0
    %2907 = vmatprep.subr.mxu0 0.0
    %2908 = vmatpush2.msra.mxu0 0.0
    %2909 = vmatprep.subr.mxu0 0.0
    %2910 = vmatpush2.msra.mxu0 0.0
    %2911 = vmatprep.subr.mxu0 0.0
    %2912 = vmatpush2.msra.mxu0 0.0
    %2913 = vmatprep.subr.mxu0 0.0
    %2914 = vmatpush2.msra.mxu0 0.0
    %2915 = vmatprep.subr.mxu0 0.0
    %2916 = vmatpush2.msra.mxu0 0.0
    %2917 = vmatprep.subr.mxu0 0.0
    %2918 = vmatpush2.msra.mxu0 0.0
    %2919 = vmatprep.subr.mxu0 0.0
    %2920 = vmatpush2.msra.mxu0 0.0
    %2921 = vmatprep.subr.mxu0 0.0
    %2922 = vmatpush2.msra.mxu0 0.0
    %2923 = vmatprep.subr.mxu0 0.0
    %2924 = vmatpush2.msra.mxu0 0.0
    %2925 = vmatprep.subr.mxu0 0.0
    %2926 = vmatpush2.msra.mxu0 0.0
    %2927 = vmatprep.subr.mxu0 0.0
    %2928 = vmatpush2.msra.mxu0 0.0
    %2929 = vmatprep.subr.mxu0 0.0
    %2930 = vmatpush2.msra.mxu0 0.0
    %2931 = vmatprep.subr.mxu0 0.0
    %2932 = vmatpush2.msra.mxu0 0.0
    %2933 = vmatprep.subr.mxu0 0.0
    %2934 = vmatpush2.msra.mxu0 0.0
    %2935 = vmatprep.subr.mxu0 0.0
    %2936 = vmatpush2.msra.mxu0 0.0
    %2937 = vmatprep.mubr.f32.mxu0 0.0
    %2938 = vmatmul.mubr.f32.gmra.mxu0 %v2871
    %v2939 = vpop.f32.mrf.mxu0
    %v2940 = vadd.f32 0.0, %v2939
    %v2941 = vpop.f32.mrf.mxu0
    %2942 = vdwg.mxu0
    %v2943 = vadd.f32 %v2865, %v2940
    %v2944 = vmul.f32 %v327, %v2587
    %v2945 = vmul.f32 %v334, %v2598
    %v2946 = vadd.f32 %v2944, %v2945
    %v2947 = vmul.f32 %v2946, 1.8
    %v2948 = vadd.f32 %v2947, 0.01
    %v2949 = vmul.f32 %v2594, %v344
    %v2950 = vmul.f32 %v351, %v2943
    %v2951 = vadd.f32 %v2949, %v2950
    %v2952 = vmul.f32 %v2948, %v2598
    %v2953 = vsub.f32 %v2951, %v2952
    %v2954 = vsub.f32 %v2953, %v2948
    %vm2955 = vcmp.gt.f32.partialorder %v2954, 0.0
    %v2956 = vsel %vm2955, 1, 0
    %v2957 = vcvt.s32.f32 %v2956
    %2959 = vrot.lane.b32.xlu0 %v2940, 96
    %v2960 = vpop.permute.xlu0 %2959
    %v2963 = vsel %vm238, %v2957, 0
    %2965 = vmatprep.subr.mxu0 0.0
    %2966 = vmatpush1.msra.mxu0 0.0
    %2967 = vmatprep.subr.mxu0 0.0
    %2968 = vmatpush1.msra.mxu0 0.0
    %2969 = vmatprep.subr.mxu0 0.0
    %2970 = vmatpush1.msra.mxu0 0.0
    %2971 = vmatprep.subr.mxu0 0.0
    %2972 = vmatpush1.msra.mxu0 0.0
    %2973 = vmatprep.subr.mxu0 0.0
    %2974 = vmatpush1.msra.mxu0 0.0
    %2975 = vmatprep.subr.mxu0 0.0
    %2976 = vmatpush1.msra.mxu0 0.0
    %2977 = vmatprep.subr.mxu0 0.0
    %2978 = vmatpush1.msra.mxu0 0.0
    %2979 = vmatprep.subr.mxu0 0.0
    %2980 = vmatpush1.msra.mxu0 0.0
    %2981 = vmatprep.subr.mxu0 0.0
    %2982 = vmatpush1.msra.mxu0 0.0
    %2983 = vmatprep.subr.mxu0 0.0
    %2984 = vmatpush1.msra.mxu0 0.0
    %2985 = vmatprep.subr.mxu0 0.0
    %2986 = vmatpush1.msra.mxu0 0.0
    %2987 = vmatprep.subr.mxu0 0.0
    %2988 = vmatpush1.msra.mxu0 0.0
    %2989 = vmatprep.subr.mxu0 0.0
    %2990 = vmatpush1.msra.mxu0 %v364
    %2991 = vmatprep.subr.mxu0 0.0
    %2992 = vmatpush1.msra.mxu0 %v363
    %2993 = vmatprep.subr.mxu0 0.0
    %2994 = vmatpush1.msra.mxu0 %v362
    %2995 = vmatprep.subr.mxu0 0.0
    %2996 = vmatpush1.msra.mxu0 %v361
    %2997 = vmatprep.subr.mxu0 0.0
    %2998 = vmatpush2.msra.mxu0 0.0
    %2999 = vmatprep.subr.mxu0 0.0
    %3000 = vmatpush2.msra.mxu0 0.0
    %3001 = vmatprep.subr.mxu0 0.0
    %3002 = vmatpush2.msra.mxu0 0.0
    %3003 = vmatprep.subr.mxu0 0.0
    %3004 = vmatpush2.msra.mxu0 0.0
    %3005 = vmatprep.subr.mxu0 0.0
    %3006 = vmatpush2.msra.mxu0 0.0
    %3007 = vmatprep.subr.mxu0 0.0
    %3008 = vmatpush2.msra.mxu0 0.0
    %3009 = vmatprep.subr.mxu0 0.0
    %3010 = vmatpush2.msra.mxu0 0.0
    %3011 = vmatprep.subr.mxu0 0.0
    %3012 = vmatpush2.msra.mxu0 0.0
    %3013 = vmatprep.subr.mxu0 0.0
    %3014 = vmatpush2.msra.mxu0 0.0
    %3015 = vmatprep.subr.mxu0 0.0
    %3016 = vmatpush2.msra.mxu0 0.0
    %3017 = vmatprep.subr.mxu0 0.0
    %3018 = vmatpush2.msra.mxu0 0.0
    %3019 = vmatprep.subr.mxu0 0.0
    %3020 = vmatpush2.msra.mxu0 0.0
    %3021 = vmatprep.subr.mxu0 0.0
    %3022 = vmatpush2.msra.mxu0 0.0
    %3023 = vmatprep.subr.mxu0 0.0
    %3024 = vmatpush2.msra.mxu0 0.0
    %3025 = vmatprep.subr.mxu0 0.0
    %3026 = vmatpush2.msra.mxu0 0.0
    %3027 = vmatprep.subr.mxu0 0.0
    %3028 = vmatpush2.msra.mxu0 0.0
    %3029 = vmatprep.mubr.f32.mxu0 0.0
    %3030 = vmatmul.mubr.f32.gmra.mxu0 %v2963
    %v3031 = vpop.f32.mrf.mxu0
    %v3032 = vadd.f32 %v2960, %v3031
    %v3033 = vpop.f32.mrf.mxu0
    %3034 = vdwg.mxu0
    %v3035 = vmul.f32 %v446, %v2678
    %v3036 = vmul.f32 %v453, %v2689
    %v3037 = vadd.f32 %v3035, %v3036
    %v3038 = vmul.f32 %v3037, 1.8
    %v3039 = vadd.f32 %v3038, 0.01
    %v3040 = vmul.f32 %v2685, %v463
    %v3041 = vmul.f32 %v470, %v3032
    %v3042 = vadd.f32 %v3040, %v3041
    %v3043 = vmul.f32 %v3039, %v2689
    %v3044 = vsub.f32 %v3042, %v3043
    %v3045 = vsub.f32 %v3044, %v3039
    %vm3046 = vcmp.gt.f32.partialorder %v3045, 0.0
    %v3047 = vsel %vm3046, 1, 0
    %v3048 = vcvt.s32.f32 %v3047
    %v3050 = vsel %vm238, %v3048, 0
    %3052 = vmatprep.subr.mxu0 0.0
    %3053 = vmatpush1.msra.mxu0 0.0
    %3054 = vmatprep.subr.mxu0 0.0
    %3055 = vmatpush1.msra.mxu0 0.0
    %3056 = vmatprep.subr.mxu0 0.0
    %3057 = vmatpush1.msra.mxu0 0.0
    %3058 = vmatprep.subr.mxu0 0.0
    %3059 = vmatpush1.msra.mxu0 0.0
    %3060 = vmatprep.subr.mxu0 0.0
    %3061 = vmatpush1.msra.mxu0 0.0
    %3062 = vmatprep.subr.mxu0 0.0
    %3063 = vmatpush1.msra.mxu0 0.0
    %3064 = vmatprep.subr.mxu0 0.0
    %3065 = vmatpush1.msra.mxu0 0.0
    %3066 = vmatprep.subr.mxu0 0.0
    %3067 = vmatpush1.msra.mxu0 0.0
    %3068 = vmatprep.subr.mxu0 0.0
    %3069 = vmatpush1.msra.mxu0 0.0
    %3070 = vmatprep.subr.mxu0 0.0
    %3071 = vmatpush1.msra.mxu0 0.0
    %3072 = vmatprep.subr.mxu0 0.0
    %3073 = vmatpush1.msra.mxu0 0.0
    %3074 = vmatprep.subr.mxu0 0.0
    %3075 = vmatpush1.msra.mxu0 0.0
    %3076 = vmatprep.subr.mxu0 0.0
    %3077 = vmatpush1.msra.mxu0 %v483
    %3078 = vmatprep.subr.mxu0 0.0
    %3079 = vmatpush1.msra.mxu0 %v482
    %3080 = vmatprep.subr.mxu0 0.0
    %3081 = vmatpush1.msra.mxu0 %v481
    %3082 = vmatprep.subr.mxu0 0.0
    %3083 = vmatpush1.msra.mxu0 %v480
    %3084 = vmatprep.subr.mxu0 0.0
    %3085 = vmatpush2.msra.mxu0 0.0
    %3086 = vmatprep.subr.mxu0 0.0
    %3087 = vmatpush2.msra.mxu0 0.0
    %3088 = vmatprep.subr.mxu0 0.0
    %3089 = vmatpush2.msra.mxu0 0.0
    %3090 = vmatprep.subr.mxu0 0.0
    %3091 = vmatpush2.msra.mxu0 0.0
    %3092 = vmatprep.subr.mxu0 0.0
    %3093 = vmatpush2.msra.mxu0 0.0
    %3094 = vmatprep.subr.mxu0 0.0
    %3095 = vmatpush2.msra.mxu0 0.0
    %3096 = vmatprep.subr.mxu0 0.0
    %3097 = vmatpush2.msra.mxu0 0.0
    %3098 = vmatprep.subr.mxu0 0.0
    %3099 = vmatpush2.msra.mxu0 0.0
    %3100 = vmatprep.subr.mxu0 0.0
    %3101 = vmatpush2.msra.mxu0 0.0
    %3102 = vmatprep.subr.mxu0 0.0
    %3103 = vmatpush2.msra.mxu0 0.0
    %3104 = vmatprep.subr.mxu0 0.0
    %3105 = vmatpush2.msra.mxu0 0.0
    %3106 = vmatprep.subr.mxu0 0.0
    %3107 = vmatpush2.msra.mxu0 0.0
    %3108 = vmatprep.subr.mxu0 0.0
    %3109 = vmatpush2.msra.mxu0 0.0
    %3110 = vmatprep.subr.mxu0 0.0
    %3111 = vmatpush2.msra.mxu0 0.0
    %3112 = vmatprep.subr.mxu0 0.0
    %3113 = vmatpush2.msra.mxu0 0.0
    %3114 = vmatprep.subr.mxu0 0.0
    %3115 = vmatpush2.msra.mxu0 0.0
    %3116 = vmatprep.mubr.f32.mxu0 0.0
    %3117 = vmatmul.mubr.f32.gmra.mxu0 %v3050
    %v3118 = vpop.f32.mrf.mxu0
    %v3119 = vadd.f32 0.0, %v3118
    %v3120 = vpop.f32.mrf.mxu0
    %3121 = vdwg.mxu0
    %v3122 = vmul.f32 %v561, %v2765
    %v3123 = vmul.f32 %v568, %v2776
    %v3124 = vadd.f32 %v3122, %v3123
    %v3125 = vmul.f32 %v3124, 1.8
    %v3126 = vadd.f32 %v3125, 0.01
    %v3127 = vmul.f32 %v2772, %v578
    %v3128 = vmul.f32 %v585, %v3119
    %v3129 = vadd.f32 %v3127, %v3128
    %v3130 = vmul.f32 %v3126, %v2776
    %v3131 = vsub.f32 %v3129, %v3130
    %v3132 = vsub.f32 %v3131, %v3126
    %vm3133 = vcmp.gt.f32.partialorder %v3132, 0.0
    %v3134 = vsel %vm3133, 1, 0
    %v3135 = vcvt.s32.f32 %v3134
    %v3137 = vsel %vm238, %v3135, 0
    %3139 = vmatprep.subr.mxu0 0.0
    %3140 = vmatpush1.msra.mxu0 0.0
    %3141 = vmatprep.subr.mxu0 0.0
    %3142 = vmatpush1.msra.mxu0 0.0
    %3143 = vmatprep.subr.mxu0 0.0
    %3144 = vmatpush1.msra.mxu0 0.0
    %3145 = vmatprep.subr.mxu0 0.0
    %3146 = vmatpush1.msra.mxu0 0.0
    %3147 = vmatprep.subr.mxu0 0.0
    %3148 = vmatpush1.msra.mxu0 0.0
    %3149 = vmatprep.subr.mxu0 0.0
    %3150 = vmatpush1.msra.mxu0 0.0
    %3151 = vmatprep.subr.mxu0 0.0
    %3152 = vmatpush1.msra.mxu0 0.0
    %3153 = vmatprep.subr.mxu0 0.0
    %3154 = vmatpush1.msra.mxu0 0.0
    %3155 = vmatprep.subr.mxu0 0.0
    %3156 = vmatpush1.msra.mxu0 0.0
    %3157 = vmatprep.subr.mxu0 0.0
    %3158 = vmatpush1.msra.mxu0 0.0
    %3159 = vmatprep.subr.mxu0 0.0
    %3160 = vmatpush1.msra.mxu0 0.0
    %3161 = vmatprep.subr.mxu0 0.0
    %3162 = vmatpush1.msra.mxu0 0.0
    %3163 = vmatprep.subr.mxu0 0.0
    %3164 = vmatpush1.msra.mxu0 %v598
    %3165 = vmatprep.subr.mxu0 0.0
    %3166 = vmatpush1.msra.mxu0 %v597
    %3167 = vmatprep.subr.mxu0 0.0
    %3168 = vmatpush1.msra.mxu0 %v596
    %3169 = vmatprep.subr.mxu0 0.0
    %3170 = vmatpush1.msra.mxu0 %v595
    %3171 = vmatprep.subr.mxu0 0.0
    %3172 = vmatpush2.msra.mxu0 0.0
    %3173 = vmatprep.subr.mxu0 0.0
    %3174 = vmatpush2.msra.mxu0 0.0
    %3175 = vmatprep.subr.mxu0 0.0
    %3176 = vmatpush2.msra.mxu0 0.0
    %3177 = vmatprep.subr.mxu0 0.0
    %3178 = vmatpush2.msra.mxu0 0.0
    %3179 = vmatprep.subr.mxu0 0.0
    %3180 = vmatpush2.msra.mxu0 0.0
    %3181 = vmatprep.subr.mxu0 0.0
    %3182 = vmatpush2.msra.mxu0 0.0
    %3183 = vmatprep.subr.mxu0 0.0
    %3184 = vmatpush2.msra.mxu0 0.0
    %3185 = vmatprep.subr.mxu0 0.0
    %3186 = vmatpush2.msra.mxu0 0.0
    %3187 = vmatprep.subr.mxu0 0.0
    %3188 = vmatpush2.msra.mxu0 0.0
    %3189 = vmatprep.subr.mxu0 0.0
    %3190 = vmatpush2.msra.mxu0 0.0
    %3191 = vmatprep.subr.mxu0 0.0
    %3192 = vmatpush2.msra.mxu0 0.0
    %3193 = vmatprep.subr.mxu0 0.0
    %3194 = vmatpush2.msra.mxu0 0.0
    %3195 = vmatprep.subr.mxu0 0.0
    %3196 = vmatpush2.msra.mxu0 0.0
    %3197 = vmatprep.subr.mxu0 0.0
    %3198 = vmatpush2.msra.mxu0 0.0
    %3199 = vmatprep.subr.mxu0 0.0
    %3200 = vmatpush2.msra.mxu0 0.0
    %3201 = vmatprep.subr.mxu0 0.0
    %3202 = vmatpush2.msra.mxu0 0.0
    %3203 = vmatprep.mubr.f32.mxu0 0.0
    %3204 = vmatmul.mubr.f32.gmra.mxu0 %v3137
    %v3205 = vpop.f32.mrf.mxu0
    %v3206 = vadd.f32 0.0, %v3205
    %v3207 = vpop.f32.mrf.mxu0
    %3208 = vdwg.mxu0
    %v3209 = vmul.f32 %v676, %v2852
    %v3210 = vmul.f32 %v683, %v2863
    %v3211 = vadd.f32 %v3209, %v3210
    %v3212 = vmul.f32 %v3211, 1.8
    %v3213 = vadd.f32 %v3212, 0.01
    %v3214 = vmul.f32 %v2859, %v693
    %v3215 = vmul.f32 %v700, %v3206
    %v3216 = vadd.f32 %v3214, %v3215
    %v3217 = vmul.f32 %v3213, %v2863
    %v3218 = vsub.f32 %v3216, %v3217
    %v3219 = vsub.f32 %v3218, %v3213
    %vm3220 = vcmp.gt.f32.partialorder %v3219, 0.0
    %v3221 = vsel %vm3220, 1, 0
    %v3222 = vcvt.s32.f32 %v3221
    %v3223 = vadd.f32 %v2864, %v3222
    %3224 = vst.msk [vmem:[#allocation2] sm:$0xff] %vm238, %v2953
    %3225 = vst.msk [vmem:[#allocation3] sm:$0xff] %vm238, %v2957
    %3226 = vst.msk [vmem:[#allocation4] sm:$0xff] %vm238, %v2946
    %3227 = vst.msk [vmem:[#allocation5] sm:$0xff] %vm238, %v3044
    %3228 = vst.msk [vmem:[#allocation6] sm:$0xff] %vm238, %v3048
    %3229 = vst.msk [vmem:[#allocation7] sm:$0xff] %vm238, %v3037
    %3230 = vst.msk [vmem:[#allocation8] sm:$0xff] %vm238, %v3131
    %3231 = vst.msk [vmem:[#allocation9] sm:$0xff] %vm238, %v3135
    %3232 = vst.msk [vmem:[#allocation10] sm:$0xff] %vm238, %v3124
    %3233 = vst [vmem:[#allocation11] sm:$0xff] %v3218
    %3234 = vst [vmem:[#allocation12] sm:$0xff] %v3222
    %3235 = vst [vmem:[#allocation13] sm:$0xff] %v3211
    %3236 = vst [vmem:[#allocation31] sm:$0xff] %v3223
    // Predicated region
    $region114: #{tpu_custom_call.1} parent=1 // pred_check
      _
    $region115: #{tpu_custom_call.1} parent=1 // pred_check_branch
      %3238 = sbr.rel (0) target = $region117
    $region116: #{tpu_custom_call.1} parent=1 // pred_region
      %s3240 = ssub.s32 128, 128
      %3241 = vsyncadd [#allocation16], %s3240
      %s3243 = sshll.u32 [#allocation31], 4
      %s3244 = int_to_ptr.vmem [resolvable:$true] %s3243
      %3246 = dma.vmem_to_hbm [thread:$0]  %s3244, 128, %s17, [#allocation16]
    $region117: #{tpu_custom_call.1} parent=1 // pred_fallthru
      _
    // Predicated region
    $region118: #{tpu_custom_call.1} parent=1 // pred_check
      _
    $region119: #{tpu_custom_call.1} parent=1 // pred_check_branch
      %3248 = sbr.rel (0) target = $region121
    $region120: #{tpu_custom_call.1} parent=1 // pred_region
      %3249 = dma.done [#allocation16], 128
    $region121: #{tpu_custom_call.1} parent=1 // pred_fallthru
      _
    %3250 = vsyncpa [#allocation15], 1
    %3251 = vsyncpa [#allocation18], 1
    %3252 = vsyncpa [#allocation21], 1
    %3253 = vsyncpa [#allocation24], 1
    %3254 = vsyncpa [#allocation27], 1
    %3255 = vsyncpa [#allocation30], 1
    %3256 = vsyncpa [#allocation16], 1

</llo_original>
